<compile_context>
chip_gen: v7x
topology: tpu7x:2x2x1
jax: 0.10.0
libtpu: 0.0.40
codegen_flags: <defaults>
</compile_context>

<pallas_src>
import functools

import jax
import jax.numpy as jnp
from jax.experimental import pallas as pl
from jax.experimental.pallas import tpu as pltpu

# ----------------------------------------------------------------------------
# Synthetic (small) wav2vec2 configuration.
#   feature extractor conv layers: (out_dim, kernel, stride)
#   conv_bias = False (fairseq default), GroupNorm(dim, dim) on layer 0 only
# ----------------------------------------------------------------------------
CONV_LAYERS = [(32, 10, 5), (32, 3, 2), (32, 2, 2)]
CONV_DIM = CONV_LAYERS[-1][0]     # "embed" in fairseq
ENCODER_DIM = 48                  # encoder_embed_dim (!= embed -> post_extract_proj)
EPS = 1e-5
LANES = 128                       # pad every channel-like dim to the lane width


def _t_out(t, k, s):
    return (t - k) // s + 1


def _pick_nb(batch):
    """Batch elements per grid step: pack as much as possible while keeping
    >= 2 grid steps so v7x megacore can split the batch across its 2 TCs."""
    if batch <= 2:
        return 1
    for nb in range(batch // 2, 0, -1):
        if batch % nb == 0:
            return nb
    return 1


# ----------------------------------------------------------------------------
# Fused Pallas kernel: conv0 + GN + GELU, conv1 + GELU, conv2 + GELU,
# LayerNorm, post_extract_proj -- `nb` batch elements per grid step.
# ----------------------------------------------------------------------------
def _w2v2_fused_kernel(xw_ref, w0_ref, gng_ref, gnb_ref, w1_ref, w2_ref,
                       lng_ref, lnb_ref, wp_ref, bp_ref, o_ref,
                       h1_scr, h2_scr, *,
                       nb, t1, t2, t3, s1, s2, k1, k2, c_real):
    f32 = jnp.float32
    bf16 = jnp.bfloat16
    inv_t1 = 1.0 / t1
    inv_c = 1.0 / c_real

    for n in range(nb):                        # static unroll over packed batch
        # ---- layer 0: conv1d(Cin=1, k=10, stride=5), no bias ----------------
        # host built (t1, k0) windows -> ONE K=10 matmul (was two K=5 matmuls).
        h = jnp.dot(xw_ref[n].astype(bf16), w0_ref[...],
                    preferred_element_type=f32)                 # (t1, 128) f32

        # ---- GroupNorm(C, C): per-channel over time (biased var), GELU ------
        mean = jnp.sum(h, axis=0, keepdims=True) * inv_t1       # (1, 128)
        cen = h - mean
        var = jnp.sum(cen * cen, axis=0, keepdims=True) * inv_t1
        h = cen * jax.lax.rsqrt(var + EPS)
        h = h * gng_ref[...] + gnb_ref[...]                     # padded lanes stay 0
        h = jax.nn.gelu(h, approximate=True)                    # tanh -> EUP slot
        h1_scr[...] = h                                         # stage for strided taps

        # ---- layer 1: conv1d(k=k1, stride=s1), no bias, GELU -----------------
        # stride folded into the tap slice: only t2 output rows hit the MXU.
        y = jnp.dot(h1_scr[pl.ds(0, t2, stride=s1), :].astype(bf16),
                    w1_ref[0], preferred_element_type=f32)      # (t2, 128)
        for j in range(1, k1):
            y = y + jnp.dot(h1_scr[pl.ds(j, t2, stride=s1), :].astype(bf16),
                            w1_ref[j], preferred_element_type=f32)
        h = jax.nn.gelu(y, approximate=True)
        h2_scr[...] = h

        # ---- layer 2: conv1d(k=k2, stride=s2), no bias, GELU -----------------
        y = jnp.dot(h2_scr[pl.ds(0, t3, stride=s2), :].astype(bf16),
                    w2_ref[0], preferred_element_type=f32)      # (t3, 128)
        for j in range(1, k2):
            y = y + jnp.dot(h2_scr[pl.ds(j, t3, stride=s2), :].astype(bf16),
                            w2_ref[j], preferred_element_type=f32)
        h = jax.nn.gelu(y, approximate=True)

        # ---- LayerNorm over the real channels, fused with post_extract_proj -
        # padded lanes of h are exactly zero, so plain sums give the real-lane
        # statistics; no lane mask (var = E[x^2] - mean^2).  Padded lanes of
        # lng/lnb and the zero rows of wp kill anything left in [c_real:128].
        mean = jnp.sum(h, axis=-1, keepdims=True) * inv_c       # (t3, 1)
        ex2 = jnp.sum(h * h, axis=-1, keepdims=True) * inv_c
        hn = (h - mean) * jax.lax.rsqrt(ex2 - mean * mean + EPS)
        hn = hn * lng_ref[...] + lnb_ref[...]
        out = jnp.dot(hn.astype(bf16), wp_ref[...], preferred_element_type=f32)
        out = out + bp_ref[...]
        o_ref[n] = out.astype(o_ref.dtype)                      # lane-dense store


# ----------------------------------------------------------------------------
# Host-side glue: weight padding (to 128 lanes / bf16) + single pallas_call
# ----------------------------------------------------------------------------
def _pad_lanes(x, axis, target=LANES):
    pad = [(0, 0)] * x.ndim
    pad[axis] = (0, target - x.shape[axis])
    return jnp.pad(x, pad)


@jax.jit
def wav2vec2_z_forward_padded(params, source):
    """Full fused forward; returns the lane-dense (B, t3, 128) f32 slab.
    Consumers should read lanes [:ENCODER_DIM] directly (avoids an extra HBM
    read+write for a materialized slice)."""
    B, t_raw = source.shape
    (c0, k0, s0), (c1, k1, s1), (c2, k2, s2) = CONV_LAYERS
    assert k0 == 2 * s0 and t_raw % s0 == 0     # layout used by the fused kernel
    t1 = _t_out(t_raw, k0, s0)
    t2 = _t_out(t1, k1, s1)
    t3 = _t_out(t2, k2, s2)
    nb = _pick_nb(B)

    # (t1, k0) sliding windows for layer 0: free reshape + cheap shifted concat
    # (replaces the old two half-window matmuls / JAX-level im2col gather).
    xb = source.astype(jnp.float32).reshape(B, t_raw // s0, s0)
    x_win = jnp.concatenate([xb[:, :t1, :], xb[:, 1:t1 + 1, :]], axis=-1)

    # conv weights: (Cout, Cin, K) -> (K, Cin, Cout), zero-pad channels to 128,
    # bf16 for the MXU.
    w0 = jnp.transpose(params["conv0_w"], (2, 1, 0)).reshape(k0, c0)
    w0 = _pad_lanes(w0, 1).astype(jnp.bfloat16)                         # (k0, 128)
    w1 = _pad_lanes(_pad_lanes(jnp.transpose(params["conv1_w"], (2, 1, 0)), 1), 2)
    w1 = w1.astype(jnp.bfloat16)                                        # (k1,128,128)
    w2 = _pad_lanes(_pad_lanes(jnp.transpose(params["conv2_w"], (2, 1, 0)), 1), 2)
    w2 = w2.astype(jnp.bfloat16)                                        # (k2,128,128)
    wp = _pad_lanes(_pad_lanes(params["proj_w"], 0), 1).astype(jnp.bfloat16)

    gng = _pad_lanes(params["gn_gamma"], 0).reshape(1, LANES)
    gnb = _pad_lanes(params["gn_beta"], 0).reshape(1, LANES)
    lng = _pad_lanes(params["ln_gamma"], 0).reshape(1, LANES)
    lnb = _pad_lanes(params["ln_beta"], 0).reshape(1, LANES)
    bp = _pad_lanes(params["proj_b"], 0).reshape(1, LANES)

    kernel = functools.partial(
        _w2v2_fused_kernel, nb=nb, t1=t1, t2=t2, t3=t3,
        s1=s1, s2=s2, k1=k1, k2=k2, c_real=CONV_DIM)

    out = pl.pallas_call(
        kernel,
        grid=(B // nb,),
        in_specs=[
            pl.BlockSpec((nb, t1, k0), lambda b: (b, 0, 0)),
            pl.BlockSpec((k0, LANES), lambda b: (0, 0)),
            pl.BlockSpec((1, LANES), lambda b: (0, 0)),
            pl.BlockSpec((1, LANES), lambda b: (0, 0)),
            pl.BlockSpec((k1, LANES, LANES), lambda b: (0, 0, 0)),
            pl.BlockSpec((k2, LANES, LANES), lambda b: (0, 0, 0)),
            pl.BlockSpec((1, LANES), lambda b: (0, 0)),
            pl.BlockSpec((1, LANES), lambda b: (0, 0)),
            pl.BlockSpec((LANES, LANES), lambda b: (0, 0)),
            pl.BlockSpec((1, LANES), lambda b: (0, 0)),
        ],
        out_specs=pl.BlockSpec((nb, t3, LANES), lambda b: (b, 0, 0)),
        out_shape=jax.ShapeDtypeStruct((B, t3, LANES), jnp.float32),
        scratch_shapes=[
            pltpu.VMEM((t1, LANES), jnp.float32),    # staged layer-0 output
            pltpu.VMEM((t2, LANES), jnp.float32),    # staged layer-1 output
        ],
        compiler_params=pltpu.CompilerParams(
            dimension_semantics=("parallel",),       # megacore: shard batch axis
            vmem_limit_bytes=32 * 1024 * 1024,       # explicit (v7x: 64 MiB phys)
        ),
    )(x_win, w0, gng, gnb, w1, w2, lng, lnb, wp, bp)
    return out


def wav2vec2_z_forward(params, source):
    """Semantics-preserving view: the real (B, t3, ENCODER_DIM) features."""
    return wav2vec2_z_forward_padded(params, source)[..., :ENCODER_DIM]

# TODO(synk): at real wav2vec2 scale (C=512, T~30k) the per-batch activations /
# GroupNorm no longer fit one VMEM block; the time axis would need tiling with
# two-pass GN stats, sized against v7x's 64 MiB VMEM (32 MiB scoped default),
# not v5e/v6e's 128 MiB — not needed at these toy sizes.
# TODO(synk): quantizer / transformer-encoder / negative-sampling / masking
# branches of forward_for_model_wav2vec2 are not reached for feat_only='z'.


# ----------------------------------------------------------------------------
# Parameters (deterministic synthetic init; no checkpoint loading)
# ----------------------------------------------------------------------------
def init_params(key):
    params = {}
    keys = jax.random.split(key, 4 + 2 * len(CONV_LAYERS))
    c_in = 1
    for i, (dim, k, _s) in enumerate(CONV_LAYERS):
        # PyTorch Conv1d weight layout: (Cout, Cin, K)
        params[f"conv{i}_w"] = 0.1 * jax.random.normal(
            keys[i], (dim, c_in, k), jnp.float32)
        c_in = dim
    params["gn_gamma"] = 1.0 + 0.05 * jax.random.normal(
        keys[len(CONV_LAYERS)], (CONV_LAYERS[0][0],), jnp.float32)
    params["gn_beta"] = 0.05 * jax.random.normal(
        keys[len(CONV_LAYERS) + 1], (CONV_LAYERS[0][0],), jnp.float32)
    params["ln_gamma"] = 1.0 + 0.05 * jax.random.normal(
        keys[len(CONV_LAYERS) + 2], (CONV_DIM,), jnp.float32)
    params["ln_beta"] = 0.05 * jax.random.normal(
        keys[len(CONV_LAYERS) + 3], (CONV_DIM,), jnp.float32)
    # post_extract_proj: Linear(CONV_DIM, ENCODER_DIM)  (weight stored (K, N))
    params["proj_w"] = 0.1 * jax.random.normal(
        keys[-2], (CONV_DIM, ENCODER_DIM), jnp.float32)
    params["proj_b"] = 0.05 * jax.random.normal(
        keys[-1], (ENCODER_DIM,), jnp.float32)
    return params


# ----------------------------------------------------------------------------
# Pure-JAX reference (f32, exact erf GELU like PyTorch) for a sanity check.
# The kernel uses bf16 MXU operands and tanh-GELU, so the check is loose.
# ----------------------------------------------------------------------------
def _reference_forward(params, source):
    x = source[:, :, None].astype(jnp.float32)
    for i, (dim, k, s) in enumerate(CONV_LAYERS):
        B, T, cin = x.shape
        t_out = _t_out(T, k, s)
        idx = jnp.arange(t_out)[:, None] * s + jnp.arange(k)[None, :]
        patches = x[:, idx, :].reshape(B, t_out, k * cin)
        w = jnp.transpose(params[f"conv{i}_w"], (2, 1, 0)).reshape(k * cin, dim)
        y = jnp.einsum("btk,kd->btd", patches, w)
        if i == 0:
            mean = y.mean(axis=1, keepdims=True)
            var = ((y - mean) ** 2).mean(axis=1, keepdims=True)
            y = (y - mean) * jax.lax.rsqrt(var + EPS)
            y = y * params["gn_gamma"] + params["gn_beta"]
        x = jax.nn.gelu(y, approximate=False)
    mean = x.mean(axis=-1, keepdims=True)
    var = ((x - mean) ** 2).mean(axis=-1, keepdims=True)
    x = (x - mean) * jax.lax.rsqrt(var + EPS)
    x = x * params["ln_gamma"] + params["ln_beta"]
    return jnp.einsum("btc,cd->btd", x, params["proj_w"]) + params["proj_b"]


if __name__ == "__main__":
    key = jax.random.PRNGKey(0)
    k_in, k_par = jax.random.split(key)
    B, T_RAW = 4, 400                      # B=4 -> nb=2 packed per step, grid=2
    source = jax.random.normal(k_in, (B, T_RAW), jnp.float32)    # raw waveform
    params = init_params(k_par)

    z_pad = wav2vec2_z_forward_padded(params, source)
    jax.block_until_ready(z_pad)

    # consumer reads the real lanes directly from the lane-dense slab
    z = z_pad[:, :, :ENCODER_DIM]

    # expected time axis: 400 -(k10,s5)-> 79 -(k3,s2)-> 39 -(k2,s2)-> 19
    assert z_pad.shape == (B, 19, LANES), z_pad.shape
    assert z.shape == (B, 19, ENCODER_DIM), z.shape
    assert bool(jnp.all(jnp.isfinite(z)))

    # loose check vs exact-erf f32 reference (kernel: bf16 MXU + tanh GELU)
    z_ref = _reference_forward(params, source)
    max_err = float(jnp.max(jnp.abs(z - z_ref)))
    assert max_err < 0.1, max_err

    print("KERNEL_OK")
</pallas_src>

<mosaic_0001>
module attributes {stable_mosaic.version = 11 : i64} {
  func.func @_w2v2_fused_kernel(%arg0: i32, %arg1: memref<2x79x10xf32, #tpu.memory_space<vmem>>, %arg2: memref<10x128xbf16, #tpu.memory_space<vmem>>, %arg3: memref<1x128xf32, #tpu.memory_space<vmem>>, %arg4: memref<1x128xf32, #tpu.memory_space<vmem>>, %arg5: memref<3x128x128xbf16, #tpu.memory_space<vmem>>, %arg6: memref<2x128x128xbf16, #tpu.memory_space<vmem>>, %arg7: memref<1x128xf32, #tpu.memory_space<vmem>>, %arg8: memref<1x128xf32, #tpu.memory_space<vmem>>, %arg9: memref<128x128xbf16, #tpu.memory_space<vmem>>, %arg10: memref<1x128xf32, #tpu.memory_space<vmem>>, %arg11: memref<2x19x128xf32, #tpu.memory_space<vmem>>, %arg12: memref<79x128xf32, #tpu.memory_space<vmem>>, %arg13: memref<39x128xf32, #tpu.memory_space<vmem>>) attributes {dimension_semantics = [#tpu.dimension_semantics<parallel>], iteration_bounds = array<i64: 2>, scalar_prefetch = 0 : i64, scratch_operands = 2 : i64, tpu.core_type = #tpu.core_type<tc>, window_params = [{transform_indices = @transform_0, window_bounds = array<i64: 2, 79, 10>}, {pipeline_mode = #tpu.pipeline_mode<synchronous>, transform_indices = @transform_1, window_bounds = array<i64: 10, 128>}, {pipeline_mode = #tpu.pipeline_mode<synchronous>, transform_indices = @transform_2, window_bounds = array<i64: 1, 128>}, {pipeline_mode = #tpu.pipeline_mode<synchronous>, transform_indices = @transform_3, window_bounds = array<i64: 1, 128>}, {pipeline_mode = #tpu.pipeline_mode<synchronous>, transform_indices = @transform_4, window_bounds = array<i64: 3, 128, 128>}, {pipeline_mode = #tpu.pipeline_mode<synchronous>, transform_indices = @transform_5, window_bounds = array<i64: 2, 128, 128>}, {pipeline_mode = #tpu.pipeline_mode<synchronous>, transform_indices = @transform_6, window_bounds = array<i64: 1, 128>}, {pipeline_mode = #tpu.pipeline_mode<synchronous>, transform_indices = @transform_7, window_bounds = array<i64: 1, 128>}, {pipeline_mode = #tpu.pipeline_mode<synchronous>, transform_indices = @transform_8, window_bounds = array<i64: 128, 128>}, {pipeline_mode = #tpu.pipeline_mode<synchronous>, transform_indices = @transform_9, window_bounds = array<i64: 1, 128>}, {transform_indices = @transform_10, window_bounds = array<i64: 2, 19, 128>}]} {
    %c0 = arith.constant 0 : index
    %c0_0 = arith.constant 0 : index
    %c0_1 = arith.constant 0 : index
    %0 = vector.load %arg1[%c0, %c0_0, %c0_1] : memref<2x79x10xf32, #tpu.memory_space<vmem>>, vector<1x79x10xf32>
    %1 = vector.shape_cast %0 : vector<1x79x10xf32> to vector<79x10xf32>
    %2 = arith.truncf %1 : vector<79x10xf32> to vector<79x10xbf16>
    %c0_2 = arith.constant 0 : index
    %c0_3 = arith.constant 0 : index
    %3 = vector.load %arg2[%c0_2, %c0_3] : memref<10x128xbf16, #tpu.memory_space<vmem>>, vector<10x128xbf16>
    %cst = arith.constant dense<0.000000e+00> : vector<79x128xf32>
    %4 = tpu.matmul %2, %3, %cst {dimension_numbers = #tpu.dot_dimension_numbers<[1], [0], [0], [1], [0, 0, 1, 1], [], []>} : vector<79x10xbf16>, vector<10x128xbf16>, vector<79x128xf32> -> vector<79x128xf32>
    %cst_4 = arith.constant dense<0.000000e+00> : vector<128xf32>
    %5 = vector.multi_reduction <add>, %4, %cst_4 [0] : vector<79x128xf32> to vector<128xf32>
    %6 = vector.shape_cast %5 : vector<128xf32> to vector<1x128xf32>
    %cst_5 = arith.constant 0.0126582282 : f32
    %7 = vector.broadcast %cst_5 : f32 to vector<1x128xf32>
    %8 = arith.mulf %6, %7 : vector<1x128xf32>
    %9 = vector.broadcast %8 : vector<1x128xf32> to vector<79x128xf32>
    %10 = arith.subf %4, %9 : vector<79x128xf32>
    %11 = arith.mulf %10, %10 : vector<79x128xf32>
    %cst_6 = arith.constant dense<0.000000e+00> : vector<128xf32>
    %12 = vector.multi_reduction <add>, %11, %cst_6 [0] : vector<79x128xf32> to vector<128xf32>
    %13 = vector.shape_cast %12 : vector<128xf32> to vector<1x128xf32>
    %cst_7 = arith.constant 0.0126582282 : f32
    %14 = vector.broadcast %cst_7 : f32 to vector<1x128xf32>
    %15 = arith.mulf %13, %14 : vector<1x128xf32>
    %cst_8 = arith.constant 9.99999974E-6 : f32
    %16 = vector.broadcast %cst_8 : f32 to vector<1x128xf32>
    %17 = arith.addf %15, %16 : vector<1x128xf32>
    %18 = math.rsqrt %17 : vector<1x128xf32>
    %19 = vector.broadcast %18 : vector<1x128xf32> to vector<79x128xf32>
    %20 = arith.mulf %10, %19 : vector<79x128xf32>
    %c0_9 = arith.constant 0 : index
    %c0_10 = arith.constant 0 : index
    %21 = vector.load %arg3[%c0_9, %c0_10] : memref<1x128xf32, #tpu.memory_space<vmem>>, vector<1x128xf32>
    %22 = vector.broadcast %21 : vector<1x128xf32> to vector<79x128xf32>
    %23 = arith.mulf %20, %22 : vector<79x128xf32>
    %c0_11 = arith.constant 0 : index
    %c0_12 = arith.constant 0 : index
    %24 = vector.load %arg4[%c0_11, %c0_12] : memref<1x128xf32, #tpu.memory_space<vmem>>, vector<1x128xf32>
    %25 = vector.broadcast %24 : vector<1x128xf32> to vector<79x128xf32>
    %26 = arith.addf %23, %25 : vector<79x128xf32>
    %27 = arith.mulf %26, %26 : vector<79x128xf32>
    %28 = arith.mulf %26, %27 : vector<79x128xf32>
    %cst_13 = arith.constant 4.471500e-02 : f32
    %29 = vector.broadcast %cst_13 : f32 to vector<79x128xf32>
    %30 = arith.mulf %29, %28 : vector<79x128xf32>
    %31 = arith.addf %26, %30 : vector<79x128xf32>
    %cst_14 = arith.constant 0.797884583 : f32
    %32 = vector.broadcast %cst_14 : f32 to vector<79x128xf32>
    %33 = arith.mulf %32, %31 : vector<79x128xf32>
    %34 = math.tanh %33 : vector<79x128xf32>
    %cst_15 = arith.constant 1.000000e+00 : f32
    %35 = vector.broadcast %cst_15 : f32 to vector<79x128xf32>
    %36 = arith.addf %35, %34 : vector<79x128xf32>
    %cst_16 = arith.constant 5.000000e-01 : f32
    %37 = vector.broadcast %cst_16 : f32 to vector<79x128xf32>
    %38 = arith.mulf %37, %36 : vector<79x128xf32>
    %39 = arith.mulf %26, %38 : vector<79x128xf32>
    %c0_17 = arith.constant 0 : index
    %c0_18 = arith.constant 0 : index
    %40 = vector.load %arg12[%c0_17, %c0_18] : memref<79x128xf32, #tpu.memory_space<vmem>>, vector<79x128xf32>
    tpu.vector_store %arg12[%c0_17, %c0_18], %39 {strides = array<i32>} : memref<79x128xf32, #tpu.memory_space<vmem>>, vector<79x128xf32>,
    %c0_19 = arith.constant 0 : index
    %c0_20 = arith.constant 0 : index
    %41 = tpu.strided_load %arg12[%c0_19, %c0_20] {strides = array<i32: 2, 1>} : memref<79x128xf32, #tpu.memory_space<vmem>>, vector<39x128xf32>
    %42 = arith.truncf %41 : vector<39x128xf32> to vector<39x128xbf16>
    %c0_21 = arith.constant 0 : index
    %c0_22 = arith.constant 0 : index
    %c0_23 = arith.constant 0 : index
    %43 = vector.load %arg5[%c0_21, %c0_22, %c0_23] : memref<3x128x128xbf16, #tpu.memory_space<vmem>>, vector<1x128x128xbf16>
    %44 = vector.shape_cast %43 : vector<1x128x128xbf16> to vector<128x128xbf16>
    %cst_24 = arith.constant dense<0.000000e+00> : vector<39x128xf32>
    %45 = tpu.matmul %42, %44, %cst_24 {dimension_numbers = #tpu.dot_dimension_numbers<[1], [0], [0], [1], [0, 0, 1, 1], [], []>} : vector<39x128xbf16>, vector<128x128xbf16>, vector<39x128xf32> -> vector<39x128xf32>
    %c1 = arith.constant 1 : index
    %c0_25 = arith.constant 0 : index
    %46 = tpu.strided_load %arg12[%c1, %c0_25] {strides = array<i32: 2, 1>} : memref<79x128xf32, #tpu.memory_space<vmem>>, vector<39x128xf32>
    %47 = arith.truncf %46 : vector<39x128xf32> to vector<39x128xbf16>
    %c1_26 = arith.constant 1 : index
    %c0_27 = arith.constant 0 : index
    %c0_28 = arith.constant 0 : index
    %48 = vector.load %arg5[%c1_26, %c0_27, %c0_28] : memref<3x128x128xbf16, #tpu.memory_space<vmem>>, vector<1x128x128xbf16>
    %49 = vector.shape_cast %48 : vector<1x128x128xbf16> to vector<128x128xbf16>
    %cst_29 = arith.constant dense<0.000000e+00> : vector<39x128xf32>
    %50 = tpu.matmul %47, %49, %cst_29 {dimension_numbers = #tpu.dot_dimension_numbers<[1], [0], [0], [1], [0, 0, 1, 1], [], []>} : vector<39x128xbf16>, vector<128x128xbf16>, vector<39x128xf32> -> vector<39x128xf32>
    %51 = arith.addf %45, %50 : vector<39x128xf32>
    %c2 = arith.constant 2 : index
    %c0_30 = arith.constant 0 : index
    %52 = tpu.strided_load %arg12[%c2, %c0_30] {strides = array<i32: 2, 1>} : memref<79x128xf32, #tpu.memory_space<vmem>>, vector<39x128xf32>
    %53 = arith.truncf %52 : vector<39x128xf32> to vector<39x128xbf16>
    %c2_31 = arith.constant 2 : index
    %c0_32 = arith.constant 0 : index
    %c0_33 = arith.constant 0 : index
    %54 = vector.load %arg5[%c2_31, %c0_32, %c0_33] : memref<3x128x128xbf16, #tpu.memory_space<vmem>>, vector<1x128x128xbf16>
    %55 = vector.shape_cast %54 : vector<1x128x128xbf16> to vector<128x128xbf16>
    %cst_34 = arith.constant dense<0.000000e+00> : vector<39x128xf32>
    %56 = tpu.matmul %53, %55, %cst_34 {dimension_numbers = #tpu.dot_dimension_numbers<[1], [0], [0], [1], [0, 0, 1, 1], [], []>} : vector<39x128xbf16>, vector<128x128xbf16>, vector<39x128xf32> -> vector<39x128xf32>
    %57 = arith.addf %51, %56 : vector<39x128xf32>
    %58 = arith.mulf %57, %57 : vector<39x128xf32>
    %59 = arith.mulf %57, %58 : vector<39x128xf32>
    %cst_35 = arith.constant 4.471500e-02 : f32
    %60 = vector.broadcast %cst_35 : f32 to vector<39x128xf32>
    %61 = arith.mulf %60, %59 : vector<39x128xf32>
    %62 = arith.addf %57, %61 : vector<39x128xf32>
    %cst_36 = arith.constant 0.797884583 : f32
    %63 = vector.broadcast %cst_36 : f32 to vector<39x128xf32>
    %64 = arith.mulf %63, %62 : vector<39x128xf32>
    %65 = math.tanh %64 : vector<39x128xf32>
    %cst_37 = arith.constant 1.000000e+00 : f32
    %66 = vector.broadcast %cst_37 : f32 to vector<39x128xf32>
    %67 = arith.addf %66, %65 : vector<39x128xf32>
    %cst_38 = arith.constant 5.000000e-01 : f32
    %68 = vector.broadcast %cst_38 : f32 to vector<39x128xf32>
    %69 = arith.mulf %68, %67 : vector<39x128xf32>
    %70 = arith.mulf %57, %69 : vector<39x128xf32>
    %c0_39 = arith.constant 0 : index
    %c0_40 = arith.constant 0 : index
    %71 = vector.load %arg13[%c0_39, %c0_40] : memref<39x128xf32, #tpu.memory_space<vmem>>, vector<39x128xf32>
    tpu.vector_store %arg13[%c0_39, %c0_40], %70 {strides = array<i32>} : memref<39x128xf32, #tpu.memory_space<vmem>>, vector<39x128xf32>,
    %c0_41 = arith.constant 0 : index
    %c0_42 = arith.constant 0 : index
    %72 = tpu.strided_load %arg13[%c0_41, %c0_42] {strides = array<i32: 2, 1>} : memref<39x128xf32, #tpu.memory_space<vmem>>, vector<19x128xf32>
    %73 = arith.truncf %72 : vector<19x128xf32> to vector<19x128xbf16>
    %c0_43 = arith.constant 0 : index
    %c0_44 = arith.constant 0 : index
    %c0_45 = arith.constant 0 : index
    %74 = vector.load %arg6[%c0_43, %c0_44, %c0_45] : memref<2x128x128xbf16, #tpu.memory_space<vmem>>, vector<1x128x128xbf16>
    %75 = vector.shape_cast %74 : vector<1x128x128xbf16> to vector<128x128xbf16>
    %cst_46 = arith.constant dense<0.000000e+00> : vector<19x128xf32>
    %76 = tpu.matmul %73, %75, %cst_46 {dimension_numbers = #tpu.dot_dimension_numbers<[1], [0], [0], [1], [0, 0, 1, 1], [], []>} : vector<19x128xbf16>, vector<128x128xbf16>, vector<19x128xf32> -> vector<19x128xf32>
    %c1_47 = arith.constant 1 : index
    %c0_48 = arith.constant 0 : index
    %77 = tpu.strided_load %arg13[%c1_47, %c0_48] {strides = array<i32: 2, 1>} : memref<39x128xf32, #tpu.memory_space<vmem>>, vector<19x128xf32>
    %78 = arith.truncf %77 : vector<19x128xf32> to vector<19x128xbf16>
    %c1_49 = arith.constant 1 : index
    %c0_50 = arith.constant 0 : index
    %c0_51 = arith.constant 0 : index
    %79 = vector.load %arg6[%c1_49, %c0_50, %c0_51] : memref<2x128x128xbf16, #tpu.memory_space<vmem>>, vector<1x128x128xbf16>
    %80 = vector.shape_cast %79 : vector<1x128x128xbf16> to vector<128x128xbf16>
    %cst_52 = arith.constant dense<0.000000e+00> : vector<19x128xf32>
    %81 = tpu.matmul %78, %80, %cst_52 {dimension_numbers = #tpu.dot_dimension_numbers<[1], [0], [0], [1], [0, 0, 1, 1], [], []>} : vector<19x128xbf16>, vector<128x128xbf16>, vector<19x128xf32> -> vector<19x128xf32>
    %82 = arith.addf %76, %81 : vector<19x128xf32>
    %83 = arith.mulf %82, %82 : vector<19x128xf32>
    %84 = arith.mulf %82, %83 : vector<19x128xf32>
    %cst_53 = arith.constant 4.471500e-02 : f32
    %85 = vector.broadcast %cst_53 : f32 to vector<19x128xf32>
    %86 = arith.mulf %85, %84 : vector<19x128xf32>
    %87 = arith.addf %82, %86 : vector<19x128xf32>
    %cst_54 = arith.constant 0.797884583 : f32
    %88 = vector.broadcast %cst_54 : f32 to vector<19x128xf32>
    %89 = arith.mulf %88, %87 : vector<19x128xf32>
    %90 = math.tanh %89 : vector<19x128xf32>
    %cst_55 = arith.constant 1.000000e+00 : f32
    %91 = vector.broadcast %cst_55 : f32 to vector<19x128xf32>
    %92 = arith.addf %91, %90 : vector<19x128xf32>
    %cst_56 = arith.constant 5.000000e-01 : f32
    %93 = vector.broadcast %cst_56 : f32 to vector<19x128xf32>
    %94 = arith.mulf %93, %92 : vector<19x128xf32>
    %95 = arith.mulf %82, %94 : vector<19x128xf32>
    %cst_57 = arith.constant dense<0.000000e+00> : vector<19xf32>
    %96 = vector.multi_reduction <add>, %95, %cst_57 [1] : vector<19x128xf32> to vector<19xf32>
    %97 = vector.shape_cast %96 : vector<19xf32> to vector<19x1xf32>
    %cst_58 = arith.constant 3.125000e-02 : f32
    %98 = vector.broadcast %cst_58 : f32 to vector<19x1xf32>
    %99 = arith.mulf %97, %98 : vector<19x1xf32>
    %100 = arith.mulf %95, %95 : vector<19x128xf32>
    %cst_59 = arith.constant dense<0.000000e+00> : vector<19xf32>
    %101 = vector.multi_reduction <add>, %100, %cst_59 [1] : vector<19x128xf32> to vector<19xf32>
    %102 = vector.shape_cast %101 : vector<19xf32> to vector<19x1xf32>
    %cst_60 = arith.constant 3.125000e-02 : f32
    %103 = vector.broadcast %cst_60 : f32 to vector<19x1xf32>
    %104 = arith.mulf %102, %103 : vector<19x1xf32>
    %105 = vector.broadcast %99 : vector<19x1xf32> to vector<19x128xf32>
    %106 = arith.subf %95, %105 : vector<19x128xf32>
    %107 = arith.mulf %99, %99 : vector<19x1xf32>
    %108 = arith.subf %104, %107 : vector<19x1xf32>
    %cst_61 = arith.constant 9.99999974E-6 : f32
    %109 = vector.broadcast %cst_61 : f32 to vector<19x1xf32>
    %110 = arith.addf %108, %109 : vector<19x1xf32>
    %111 = math.rsqrt %110 : vector<19x1xf32>
    %112 = vector.broadcast %111 : vector<19x1xf32> to vector<19x128xf32>
    %113 = arith.mulf %106, %112 : vector<19x128xf32>
    %c0_62 = arith.constant 0 : index
    %c0_63 = arith.constant 0 : index
    %114 = vector.load %arg7[%c0_62, %c0_63] : memref<1x128xf32, #tpu.memory_space<vmem>>, vector<1x128xf32>
    %115 = vector.broadcast %114 : vector<1x128xf32> to vector<19x128xf32>
    %116 = arith.mulf %113, %115 : vector<19x128xf32>
    %c0_64 = arith.constant 0 : index
    %c0_65 = arith.constant 0 : index
    %117 = vector.load %arg8[%c0_64, %c0_65] : memref<1x128xf32, #tpu.memory_space<vmem>>, vector<1x128xf32>
    %118 = vector.broadcast %117 : vector<1x128xf32> to vector<19x128xf32>
    %119 = arith.addf %116, %118 : vector<19x128xf32>
    %120 = arith.truncf %119 : vector<19x128xf32> to vector<19x128xbf16>
    %c0_66 = arith.constant 0 : index
    %c0_67 = arith.constant 0 : index
    %121 = vector.load %arg9[%c0_66, %c0_67] : memref<128x128xbf16, #tpu.memory_space<vmem>>, vector<128x128xbf16>
    %cst_68 = arith.constant dense<0.000000e+00> : vector<19x128xf32>
    %122 = tpu.matmul %120, %121, %cst_68 {dimension_numbers = #tpu.dot_dimension_numbers<[1], [0], [0], [1], [0, 0, 1, 1], [], []>} : vector<19x128xbf16>, vector<128x128xbf16>, vector<19x128xf32> -> vector<19x128xf32>
    %c0_69 = arith.constant 0 : index
    %c0_70 = arith.constant 0 : index
    %123 = vector.load %arg10[%c0_69, %c0_70] : memref<1x128xf32, #tpu.memory_space<vmem>>, vector<1x128xf32>
    %124 = vector.broadcast %123 : vector<1x128xf32> to vector<19x128xf32>
    %125 = arith.addf %122, %124 : vector<19x128xf32>
    %c0_71 = arith.constant 0 : index
    %c0_72 = arith.constant 0 : index
    %c0_73 = arith.constant 0 : index
    %126 = vector.load %arg11[%c0_71, %c0_72, %c0_73] : memref<2x19x128xf32, #tpu.memory_space<vmem>>, vector<1x19x128xf32>
    %127 = vector.shape_cast %126 : vector<1x19x128xf32> to vector<19x128xf32>
    %128 = vector.shape_cast %125 : vector<19x128xf32> to vector<1x19x128xf32>
    tpu.vector_store %arg11[%c0_71, %c0_72, %c0_73], %128 {strides = array<i32>} : memref<2x19x128xf32, #tpu.memory_space<vmem>>, vector<1x19x128xf32>,
    %c1_74 = arith.constant 1 : index
    %c0_75 = arith.constant 0 : index
    %c0_76 = arith.constant 0 : index
    %129 = vector.load %arg1[%c1_74, %c0_75, %c0_76] : memref<2x79x10xf32, #tpu.memory_space<vmem>>, vector<1x79x10xf32>
    %130 = vector.shape_cast %129 : vector<1x79x10xf32> to vector<79x10xf32>
    %131 = arith.truncf %130 : vector<79x10xf32> to vector<79x10xbf16>
    %c0_77 = arith.constant 0 : index
    %c0_78 = arith.constant 0 : index
    %132 = vector.load %arg2[%c0_77, %c0_78] : memref<10x128xbf16, #tpu.memory_space<vmem>>, vector<10x128xbf16>
    %cst_79 = arith.constant dense<0.000000e+00> : vector<79x128xf32>
    %133 = tpu.matmul %131, %132, %cst_79 {dimension_numbers = #tpu.dot_dimension_numbers<[1], [0], [0], [1], [0, 0, 1, 1], [], []>} : vector<79x10xbf16>, vector<10x128xbf16>, vector<79x128xf32> -> vector<79x128xf32>
    %cst_80 = arith.constant dense<0.000000e+00> : vector<128xf32>
    %134 = vector.multi_reduction <add>, %133, %cst_80 [0] : vector<79x128xf32> to vector<128xf32>
    %135 = vector.shape_cast %134 : vector<128xf32> to vector<1x128xf32>
    %cst_81 = arith.constant 0.0126582282 : f32
    %136 = vector.broadcast %cst_81 : f32 to vector<1x128xf32>
    %137 = arith.mulf %135, %136 : vector<1x128xf32>
    %138 = vector.broadcast %137 : vector<1x128xf32> to vector<79x128xf32>
    %139 = arith.subf %133, %138 : vector<79x128xf32>
    %140 = arith.mulf %139, %139 : vector<79x128xf32>
    %cst_82 = arith.constant dense<0.000000e+00> : vector<128xf32>
    %141 = vector.multi_reduction <add>, %140, %cst_82 [0] : vector<79x128xf32> to vector<128xf32>
    %142 = vector.shape_cast %141 : vector<128xf32> to vector<1x128xf32>
    %cst_83 = arith.constant 0.0126582282 : f32
    %143 = vector.broadcast %cst_83 : f32 to vector<1x128xf32>
    %144 = arith.mulf %142, %143 : vector<1x128xf32>
    %cst_84 = arith.constant 9.99999974E-6 : f32
    %145 = vector.broadcast %cst_84 : f32 to vector<1x128xf32>
    %146 = arith.addf %144, %145 : vector<1x128xf32>
    %147 = math.rsqrt %146 : vector<1x128xf32>
    %148 = vector.broadcast %147 : vector<1x128xf32> to vector<79x128xf32>
    %149 = arith.mulf %139, %148 : vector<79x128xf32>
    %c0_85 = arith.constant 0 : index
    %c0_86 = arith.constant 0 : index
    %150 = vector.load %arg3[%c0_85, %c0_86] : memref<1x128xf32, #tpu.memory_space<vmem>>, vector<1x128xf32>
    %151 = vector.broadcast %150 : vector<1x128xf32> to vector<79x128xf32>
    %152 = arith.mulf %149, %151 : vector<79x128xf32>
    %c0_87 = arith.constant 0 : index
    %c0_88 = arith.constant 0 : index
    %153 = vector.load %arg4[%c0_87, %c0_88] : memref<1x128xf32, #tpu.memory_space<vmem>>, vector<1x128xf32>
    %154 = vector.broadcast %153 : vector<1x128xf32> to vector<79x128xf32>
    %155 = arith.addf %152, %154 : vector<79x128xf32>
    %156 = arith.mulf %155, %155 : vector<79x128xf32>
    %157 = arith.mulf %155, %156 : vector<79x128xf32>
    %cst_89 = arith.constant 4.471500e-02 : f32
    %158 = vector.broadcast %cst_89 : f32 to vector<79x128xf32>
    %159 = arith.mulf %158, %157 : vector<79x128xf32>
    %160 = arith.addf %155, %159 : vector<79x128xf32>
    %cst_90 = arith.constant 0.797884583 : f32
    %161 = vector.broadcast %cst_90 : f32 to vector<79x128xf32>
    %162 = arith.mulf %161, %160 : vector<79x128xf32>
    %163 = math.tanh %162 : vector<79x128xf32>
    %cst_91 = arith.constant 1.000000e+00 : f32
    %164 = vector.broadcast %cst_91 : f32 to vector<79x128xf32>
    %165 = arith.addf %164, %163 : vector<79x128xf32>
    %cst_92 = arith.constant 5.000000e-01 : f32
    %166 = vector.broadcast %cst_92 : f32 to vector<79x128xf32>
    %167 = arith.mulf %166, %165 : vector<79x128xf32>
    %168 = arith.mulf %155, %167 : vector<79x128xf32>
    %c0_93 = arith.constant 0 : index
    %c0_94 = arith.constant 0 : index
    %169 = vector.load %arg12[%c0_93, %c0_94] : memref<79x128xf32, #tpu.memory_space<vmem>>, vector<79x128xf32>
    tpu.vector_store %arg12[%c0_93, %c0_94], %168 {strides = array<i32>} : memref<79x128xf32, #tpu.memory_space<vmem>>, vector<79x128xf32>,
    %c0_95 = arith.constant 0 : index
    %c0_96 = arith.constant 0 : index
    %170 = tpu.strided_load %arg12[%c0_95, %c0_96] {strides = array<i32: 2, 1>} : memref<79x128xf32, #tpu.memory_space<vmem>>, vector<39x128xf32>
    %171 = arith.truncf %170 : vector<39x128xf32> to vector<39x128xbf16>
    %c0_97 = arith.constant 0 : index
    %c0_98 = arith.constant 0 : index
    %c0_99 = arith.constant 0 : index
    %172 = vector.load %arg5[%c0_97, %c0_98, %c0_99] : memref<3x128x128xbf16, #tpu.memory_space<vmem>>, vector<1x128x128xbf16>
    %173 = vector.shape_cast %172 : vector<1x128x128xbf16> to vector<128x128xbf16>
    %cst_100 = arith.constant dense<0.000000e+00> : vector<39x128xf32>
    %174 = tpu.matmul %171, %173, %cst_100 {dimension_numbers = #tpu.dot_dimension_numbers<[1], [0], [0], [1], [0, 0, 1, 1], [], []>} : vector<39x128xbf16>, vector<128x128xbf16>, vector<39x128xf32> -> vector<39x128xf32>
    %c1_101 = arith.constant 1 : index
    %c0_102 = arith.constant 0 : index
    %175 = tpu.strided_load %arg12[%c1_101, %c0_102] {strides = array<i32: 2, 1>} : memref<79x128xf32, #tpu.memory_space<vmem>>, vector<39x128xf32>
    %176 = arith.truncf %175 : vector<39x128xf32> to vector<39x128xbf16>
    %c1_103 = arith.constant 1 : index
    %c0_104 = arith.constant 0 : index
    %c0_105 = arith.constant 0 : index
    %177 = vector.load %arg5[%c1_103, %c0_104, %c0_105] : memref<3x128x128xbf16, #tpu.memory_space<vmem>>, vector<1x128x128xbf16>
    %178 = vector.shape_cast %177 : vector<1x128x128xbf16> to vector<128x128xbf16>
    %cst_106 = arith.constant dense<0.000000e+00> : vector<39x128xf32>
    %179 = tpu.matmul %176, %178, %cst_106 {dimension_numbers = #tpu.dot_dimension_numbers<[1], [0], [0], [1], [0, 0, 1, 1], [], []>} : vector<39x128xbf16>, vector<128x128xbf16>, vector<39x128xf32> -> vector<39x128xf32>
    %180 = arith.addf %174, %179 : vector<39x128xf32>
    %c2_107 = arith.constant 2 : index
    %c0_108 = arith.constant 0 : index
    %181 = tpu.strided_load %arg12[%c2_107, %c0_108] {strides = array<i32: 2, 1>} : memref<79x128xf32, #tpu.memory_space<vmem>>, vector<39x128xf32>
    %182 = arith.truncf %181 : vector<39x128xf32> to vector<39x128xbf16>
    %c2_109 = arith.constant 2 : index
    %c0_110 = arith.constant 0 : index
    %c0_111 = arith.constant 0 : index
    %183 = vector.load %arg5[%c2_109, %c0_110, %c0_111] : memref<3x128x128xbf16, #tpu.memory_space<vmem>>, vector<1x128x128xbf16>
    %184 = vector.shape_cast %183 : vector<1x128x128xbf16> to vector<128x128xbf16>
    %cst_112 = arith.constant dense<0.000000e+00> : vector<39x128xf32>
    %185 = tpu.matmul %182, %184, %cst_112 {dimension_numbers = #tpu.dot_dimension_numbers<[1], [0], [0], [1], [0, 0, 1, 1], [], []>} : vector<39x128xbf16>, vector<128x128xbf16>, vector<39x128xf32> -> vector<39x128xf32>
    %186 = arith.addf %180, %185 : vector<39x128xf32>
    %187 = arith.mulf %186, %186 : vector<39x128xf32>
    %188 = arith.mulf %186, %187 : vector<39x128xf32>
    %cst_113 = arith.constant 4.471500e-02 : f32
    %189 = vector.broadcast %cst_113 : f32 to vector<39x128xf32>
    %190 = arith.mulf %189, %188 : vector<39x128xf32>
    %191 = arith.addf %186, %190 : vector<39x128xf32>
    %cst_114 = arith.constant 0.797884583 : f32
    %192 = vector.broadcast %cst_114 : f32 to vector<39x128xf32>
    %193 = arith.mulf %192, %191 : vector<39x128xf32>
    %194 = math.tanh %193 : vector<39x128xf32>
    %cst_115 = arith.constant 1.000000e+00 : f32
    %195 = vector.broadcast %cst_115 : f32 to vector<39x128xf32>
    %196 = arith.addf %195, %194 : vector<39x128xf32>
    %cst_116 = arith.constant 5.000000e-01 : f32
    %197 = vector.broadcast %cst_116 : f32 to vector<39x128xf32>
    %198 = arith.mulf %197, %196 : vector<39x128xf32>
    %199 = arith.mulf %186, %198 : vector<39x128xf32>
    %c0_117 = arith.constant 0 : index
    %c0_118 = arith.constant 0 : index
    %200 = vector.load %arg13[%c0_117, %c0_118] : memref<39x128xf32, #tpu.memory_space<vmem>>, vector<39x128xf32>
    tpu.vector_store %arg13[%c0_117, %c0_118], %199 {strides = array<i32>} : memref<39x128xf32, #tpu.memory_space<vmem>>, vector<39x128xf32>,
    %c0_119 = arith.constant 0 : index
    %c0_120 = arith.constant 0 : index
    %201 = tpu.strided_load %arg13[%c0_119, %c0_120] {strides = array<i32: 2, 1>} : memref<39x128xf32, #tpu.memory_space<vmem>>, vector<19x128xf32>
    %202 = arith.truncf %201 : vector<19x128xf32> to vector<19x128xbf16>
    %c0_121 = arith.constant 0 : index
    %c0_122 = arith.constant 0 : index
    %c0_123 = arith.constant 0 : index
    %203 = vector.load %arg6[%c0_121, %c0_122, %c0_123] : memref<2x128x128xbf16, #tpu.memory_space<vmem>>, vector<1x128x128xbf16>
    %204 = vector.shape_cast %203 : vector<1x128x128xbf16> to vector<128x128xbf16>
    %cst_124 = arith.constant dense<0.000000e+00> : vector<19x128xf32>
    %205 = tpu.matmul %202, %204, %cst_124 {dimension_numbers = #tpu.dot_dimension_numbers<[1], [0], [0], [1], [0, 0, 1, 1], [], []>} : vector<19x128xbf16>, vector<128x128xbf16>, vector<19x128xf32> -> vector<19x128xf32>
    %c1_125 = arith.constant 1 : index
    %c0_126 = arith.constant 0 : index
    %206 = tpu.strided_load %arg13[%c1_125, %c0_126] {strides = array<i32: 2, 1>} : memref<39x128xf32, #tpu.memory_space<vmem>>, vector<19x128xf32>
    %207 = arith.truncf %206 : vector<19x128xf32> to vector<19x128xbf16>
    %c1_127 = arith.constant 1 : index
    %c0_128 = arith.constant 0 : index
    %c0_129 = arith.constant 0 : index
    %208 = vector.load %arg6[%c1_127, %c0_128, %c0_129] : memref<2x128x128xbf16, #tpu.memory_space<vmem>>, vector<1x128x128xbf16>
    %209 = vector.shape_cast %208 : vector<1x128x128xbf16> to vector<128x128xbf16>
    %cst_130 = arith.constant dense<0.000000e+00> : vector<19x128xf32>
    %210 = tpu.matmul %207, %209, %cst_130 {dimension_numbers = #tpu.dot_dimension_numbers<[1], [0], [0], [1], [0, 0, 1, 1], [], []>} : vector<19x128xbf16>, vector<128x128xbf16>, vector<19x128xf32> -> vector<19x128xf32>
    %211 = arith.addf %205, %210 : vector<19x128xf32>
    %212 = arith.mulf %211, %211 : vector<19x128xf32>
    %213 = arith.mulf %211, %212 : vector<19x128xf32>
    %cst_131 = arith.constant 4.471500e-02 : f32
    %214 = vector.broadcast %cst_131 : f32 to vector<19x128xf32>
    %215 = arith.mulf %214, %213 : vector<19x128xf32>
    %216 = arith.addf %211, %215 : vector<19x128xf32>
    %cst_132 = arith.constant 0.797884583 : f32
    %217 = vector.broadcast %cst_132 : f32 to vector<19x128xf32>
    %218 = arith.mulf %217, %216 : vector<19x128xf32>
    %219 = math.tanh %218 : vector<19x128xf32>
    %cst_133 = arith.constant 1.000000e+00 : f32
    %220 = vector.broadcast %cst_133 : f32 to vector<19x128xf32>
    %221 = arith.addf %220, %219 : vector<19x128xf32>
    %cst_134 = arith.constant 5.000000e-01 : f32
    %222 = vector.broadcast %cst_134 : f32 to vector<19x128xf32>
    %223 = arith.mulf %222, %221 : vector<19x128xf32>
    %224 = arith.mulf %211, %223 : vector<19x128xf32>
    %cst_135 = arith.constant dense<0.000000e+00> : vector<19xf32>
    %225 = vector.multi_reduction <add>, %224, %cst_135 [1] : vector<19x128xf32> to vector<19xf32>
    %226 = vector.shape_cast %225 : vector<19xf32> to vector<19x1xf32>
    %cst_136 = arith.constant 3.125000e-02 : f32
    %227 = vector.broadcast %cst_136 : f32 to vector<19x1xf32>
    %228 = arith.mulf %226, %227 : vector<19x1xf32>
    %229 = arith.mulf %224, %224 : vector<19x128xf32>
    %cst_137 = arith.constant dense<0.000000e+00> : vector<19xf32>
    %230 = vector.multi_reduction <add>, %229, %cst_137 [1] : vector<19x128xf32> to vector<19xf32>
    %231 = vector.shape_cast %230 : vector<19xf32> to vector<19x1xf32>
    %cst_138 = arith.constant 3.125000e-02 : f32
    %232 = vector.broadcast %cst_138 : f32 to vector<19x1xf32>
    %233 = arith.mulf %231, %232 : vector<19x1xf32>
    %234 = vector.broadcast %228 : vector<19x1xf32> to vector<19x128xf32>
    %235 = arith.subf %224, %234 : vector<19x128xf32>
    %236 = arith.mulf %228, %228 : vector<19x1xf32>
    %237 = arith.subf %233, %236 : vector<19x1xf32>
    %cst_139 = arith.constant 9.99999974E-6 : f32
    %238 = vector.broadcast %cst_139 : f32 to vector<19x1xf32>
    %239 = arith.addf %237, %238 : vector<19x1xf32>
    %240 = math.rsqrt %239 : vector<19x1xf32>
    %241 = vector.broadcast %240 : vector<19x1xf32> to vector<19x128xf32>
    %242 = arith.mulf %235, %241 : vector<19x128xf32>
    %c0_140 = arith.constant 0 : index
    %c0_141 = arith.constant 0 : index
    %243 = vector.load %arg7[%c0_140, %c0_141] : memref<1x128xf32, #tpu.memory_space<vmem>>, vector<1x128xf32>
    %244 = vector.broadcast %243 : vector<1x128xf32> to vector<19x128xf32>
    %245 = arith.mulf %242, %244 : vector<19x128xf32>
    %c0_142 = arith.constant 0 : index
    %c0_143 = arith.constant 0 : index
    %246 = vector.load %arg8[%c0_142, %c0_143] : memref<1x128xf32, #tpu.memory_space<vmem>>, vector<1x128xf32>
    %247 = vector.broadcast %246 : vector<1x128xf32> to vector<19x128xf32>
    %248 = arith.addf %245, %247 : vector<19x128xf32>
    %249 = arith.truncf %248 : vector<19x128xf32> to vector<19x128xbf16>
    %c0_144 = arith.constant 0 : index
    %c0_145 = arith.constant 0 : index
    %250 = vector.load %arg9[%c0_144, %c0_145] : memref<128x128xbf16, #tpu.memory_space<vmem>>, vector<128x128xbf16>
    %cst_146 = arith.constant dense<0.000000e+00> : vector<19x128xf32>
    %251 = tpu.matmul %249, %250, %cst_146 {dimension_numbers = #tpu.dot_dimension_numbers<[1], [0], [0], [1], [0, 0, 1, 1], [], []>} : vector<19x128xbf16>, vector<128x128xbf16>, vector<19x128xf32> -> vector<19x128xf32>
    %c0_147 = arith.constant 0 : index
    %c0_148 = arith.constant 0 : index
    %252 = vector.load %arg10[%c0_147, %c0_148] : memref<1x128xf32, #tpu.memory_space<vmem>>, vector<1x128xf32>
    %253 = vector.broadcast %252 : vector<1x128xf32> to vector<19x128xf32>
    %254 = arith.addf %251, %253 : vector<19x128xf32>
    %c1_149 = arith.constant 1 : index
    %c0_150 = arith.constant 0 : index
    %c0_151 = arith.constant 0 : index
    %255 = vector.load %arg11[%c1_149, %c0_150, %c0_151] : memref<2x19x128xf32, #tpu.memory_space<vmem>>, vector<1x19x128xf32>
    %256 = vector.shape_cast %255 : vector<1x19x128xf32> to vector<19x128xf32>
    %257 = vector.shape_cast %254 : vector<19x128xf32> to vector<1x19x128xf32>
    tpu.vector_store %arg11[%c1_149, %c0_150, %c0_151], %257 {strides = array<i32>} : memref<2x19x128xf32, #tpu.memory_space<vmem>>, vector<1x19x128xf32>,
    return
  }
  func.func @transform_0(%arg0: i32) -> (i32, i32, i32) {
    %c0_i32 = arith.constant 0 : i32
    %c0_i32_0 = arith.constant 0 : i32
    %c0_i32_1 = arith.constant 0 : i32
    return %arg0, %c0_i32, %c0_i32_0 : i32, i32, i32
  }
  func.func @transform_1(%arg0: i32) -> (i32, i32) {
    %c0_i32 = arith.constant 0 : i32
    %c0_i32_0 = arith.constant 0 : i32
    %c0_i32_1 = arith.constant 0 : i32
    return %c0_i32, %c0_i32_0 : i32, i32
  }
  func.func @transform_2(%arg0: i32) -> (i32, i32) {
    %c0_i32 = arith.constant 0 : i32
    %c0_i32_0 = arith.constant 0 : i32
    %c0_i32_1 = arith.constant 0 : i32
    return %c0_i32, %c0_i32_0 : i32, i32
  }
  func.func @transform_3(%arg0: i32) -> (i32, i32) {
    %c0_i32 = arith.constant 0 : i32
    %c0_i32_0 = arith.constant 0 : i32
    %c0_i32_1 = arith.constant 0 : i32
    return %c0_i32, %c0_i32_0 : i32, i32
  }
  func.func @transform_4(%arg0: i32) -> (i32, i32, i32) {
    %c0_i32 = arith.constant 0 : i32
    %c0_i32_0 = arith.constant 0 : i32
    %c0_i32_1 = arith.constant 0 : i32
    %c0_i32_2 = arith.constant 0 : i32
    return %c0_i32, %c0_i32_0, %c0_i32_1 : i32, i32, i32
  }
  func.func @transform_5(%arg0: i32) -> (i32, i32, i32) {
    %c0_i32 = arith.constant 0 : i32
    %c0_i32_0 = arith.constant 0 : i32
    %c0_i32_1 = arith.constant 0 : i32
    %c0_i32_2 = arith.constant 0 : i32
    return %c0_i32, %c0_i32_0, %c0_i32_1 : i32, i32, i32
  }
  func.func @transform_6(%arg0: i32) -> (i32, i32) {
    %c0_i32 = arith.constant 0 : i32
    %c0_i32_0 = arith.constant 0 : i32
    %c0_i32_1 = arith.constant 0 : i32
    return %c0_i32, %c0_i32_0 : i32, i32
  }
  func.func @transform_7(%arg0: i32) -> (i32, i32) {
    %c0_i32 = arith.constant 0 : i32
    %c0_i32_0 = arith.constant 0 : i32
    %c0_i32_1 = arith.constant 0 : i32
    return %c0_i32, %c0_i32_0 : i32, i32
  }
  func.func @transform_8(%arg0: i32) -> (i32, i32) {
    %c0_i32 = arith.constant 0 : i32
    %c0_i32_0 = arith.constant 0 : i32
    %c0_i32_1 = arith.constant 0 : i32
    return %c0_i32, %c0_i32_0 : i32, i32
  }
  func.func @transform_9(%arg0: i32) -> (i32, i32) {
    %c0_i32 = arith.constant 0 : i32
    %c0_i32_0 = arith.constant 0 : i32
    %c0_i32_1 = arith.constant 0 : i32
    return %c0_i32, %c0_i32_0 : i32, i32
  }
  func.func @transform_10(%arg0: i32) -> (i32, i32, i32) {
    %c0_i32 = arith.constant 0 : i32
    %c0_i32_0 = arith.constant 0 : i32
    %c0_i32_1 = arith.constant 0 : i32
    return %arg0, %c0_i32, %c0_i32_0 : i32, i32, i32
  }
}

</mosaic_0001>

<llo_original>
// kernel: wav2vec2_z_forward_padded.1
$region0: #{wav2vec2_z_forward_padded.1}
  #allocation0 [shape = 'u32[]', space=smem, size = 0x4, offset = 0x4, fixed_abs, tag = 'smem constant byte address 0x4 - core index']
  #allocation1 [shape = 'u32[144,128]{1,0:T(1,128)}', space=vmem, size = 0x12000, scoped, tag = 'internal scratch']
  #allocation2 [shape = 'f32[79,128]{1,0:T(8,128)}', space=vmem, size = 0xa000, scoped, tag = 'scratch operand']
  #allocation3 [shape = 'f32[39,128]{1,0:T(8,128)}', space=vmem, size = 0x5000, scoped, tag = 'scratch operand']
  %s0 = inlined_call_operand.vmem [shape: f32[4,79,10], index: 0, kind: input, shape index: {}]
  %s1 = inlined_call_operand.vmem [shape: bf16[10,128], index: 1, kind: input, shape index: {}]
  %s2 = inlined_call_operand.vmem [shape: f32[1,128], index: 2, kind: input, shape index: {}]
  %s3 = inlined_call_operand.vmem [shape: f32[1,128], index: 3, kind: input, shape index: {}]
  %s4 = inlined_call_operand.vmem [shape: bf16[3,128,128], index: 4, kind: input, shape index: {}]
  %s5 = inlined_call_operand.vmem [shape: bf16[2,128,128], index: 5, kind: input, shape index: {}]
  %s6 = inlined_call_operand.vmem [shape: f32[1,128], index: 6, kind: input, shape index: {}]
  %s7 = inlined_call_operand.vmem [shape: f32[1,128], index: 7, kind: input, shape index: {}]
  %s8 = inlined_call_operand.vmem [shape: bf16[128,128], index: 8, kind: input, shape index: {}]
  %s9 = inlined_call_operand.vmem [shape: f32[1,128], index: 9, kind: input, shape index: {}]
  %s10 = inlined_call_operand.vmem [shape: f32[4,19,128], index: 10, kind: output, shape index: {}]
  %s11 = sld [smem:[#allocation0]]
  $region73: #{wav2vec2_z_forward_padded.1} parent=0
    _
  %s13 = ssub.s32 1, %s11
  %s14 = scalar_select 0, %s13, %s11
  loop: start=0, step=1, limit=4
  $region2: #{wav2vec2_z_forward_padded.1} parent=0 // loop_pre_header
    _
  $region3: #{wav2vec2_z_forward_padded.1} parent=0 // loop_header
    %s16 = sphi 0, %s20
    %p17 = scmp.ge.s32.totalorder %s16, 4
    %s26 = sphi 0, %s28
    %s29 = sphi 0, %s26
    %s30 = sphi 0, %s29
    %s46 = sphi 0, %s30
    %s50 = sphi 0, %s50
    %s52 = sphi 0, %s50
    %s53 = sphi 0, %s52
    %s67 = sphi 0, %s53
    %s71 = sphi 0, %s71
    %s73 = sphi 0, %s71
    %s74 = sphi 0, %s73
    %s88 = sphi 0, %s74
    %s92 = sphi 0, %s92
    %s94 = sphi 0, %s92
    %s95 = sphi 0, %s94
    %s109 = sphi 0, %s95
    %s113 = sphi 0, %s113
    %s115 = sphi 0, %s113
    %s116 = sphi 0, %s115
    %s130 = sphi 0, %s116
    %s134 = sphi 0, %s134
    %s136 = sphi 0, %s134
    %s137 = sphi 0, %s136
    %s151 = sphi 0, %s137
    %s155 = sphi 0, %s155
    %s157 = sphi 0, %s155
    %s158 = sphi 0, %s157
    %s172 = sphi 0, %s158
    %s176 = sphi 0, %s176
    %s178 = sphi 0, %s176
    %s179 = sphi 0, %s178
    %s193 = sphi 0, %s179
    %s197 = sphi 0, %s197
    %s199 = sphi 0, %s197
    %s200 = sphi 0, %s199
    %s214 = sphi 0, %s200
    %s218 = sphi 0, %s218
    %s220 = sphi 0, %s218
    %s221 = sphi 0, %s220
    %s235 = sphi 0, %s221
    %s241 = sphi 0, %s243
    %s244 = sphi 0, %s241
    %s245 = sphi 0, %s244
    %s261 = sphi 0, %s245
  $region4: #{wav2vec2_z_forward_padded.1} parent=0 // loop_header_branch
    %19 = sbr.rel (%p17) target = $region8
  $region5: #{wav2vec2_z_forward_padded.1} parent=0 // loop_body
    %s21 = ssub.s32 %s16, 1
    %s22 = ssub.s32 %s16, 2
    %s23 = sadd.s32 %s16, 1
    %s24 = ssub.s32 %s16, %s23
    %p25 = scmp.eq.s32.totalorder %s24, 0
    %s27 = sadd.s32 %s26, 1
    %s28 = scalar_select %p25, %s26, %s27
    %p31 = pneg %p25
    %p32 = scmp.eq.s32.totalorder %s16, 1
    %p33 = por %p31, %p32
    %p34 = scmp.ne.s32.totalorder %s26, %s29
    %p35 = scmp.eq.s32.totalorder %s16, 0
    %p36 = por %p34, %p35
    %p37 = scmp.ne.s32.totalorder %s26, %s29
    %p38 = scmp.eq.s32.totalorder %s21, 1
    %p39 = por %p37, %p38
    %p40 = scmp.ne.s32.totalorder %s29, %s30
    %p41 = scmp.eq.s32.totalorder %s21, 0
    %p42 = por %p40, %p41
    %p43 = scmp.ne.s32.totalorder %s29, %s30
    %p44 = scmp.eq.s32.totalorder %s22, 1
    %p45 = por %p43, %p44
    %p47 = scmp.ne.s32.totalorder %s30, %s46
    %p48 = scmp.eq.s32.totalorder %s22, 0
    %p49 = por %p47, %p48
    %s51 = sadd.s32 %s50, 1
    %p54 = scmp.eq.s32.totalorder %s16, 1
    %p55 = scmp.ne.s32.totalorder %s50, %s52
    %p56 = scmp.eq.s32.totalorder %s16, 0
    %p57 = por %p55, %p56
    %p58 = scmp.ne.s32.totalorder %s50, %s52
    %p59 = scmp.eq.s32.totalorder %s21, 1
    %p60 = por %p58, %p59
    %p61 = scmp.ne.s32.totalorder %s52, %s53
    %p62 = scmp.eq.s32.totalorder %s21, 0
    %p63 = por %p61, %p62
    %p64 = scmp.ne.s32.totalorder %s52, %s53
    %p65 = scmp.eq.s32.totalorder %s22, 1
    %p66 = por %p64, %p65
    %p68 = scmp.ne.s32.totalorder %s53, %s67
    %p69 = scmp.eq.s32.totalorder %s22, 0
    %p70 = por %p68, %p69
    %s72 = sadd.s32 %s71, 1
    %p75 = scmp.eq.s32.totalorder %s16, 1
    %p76 = scmp.ne.s32.totalorder %s71, %s73
    %p77 = scmp.eq.s32.totalorder %s16, 0
    %p78 = por %p76, %p77
    %p79 = scmp.ne.s32.totalorder %s71, %s73
    %p80 = scmp.eq.s32.totalorder %s21, 1
    %p81 = por %p79, %p80
    %p82 = scmp.ne.s32.totalorder %s73, %s74
    %p83 = scmp.eq.s32.totalorder %s21, 0
    %p84 = por %p82, %p83
    %p85 = scmp.ne.s32.totalorder %s73, %s74
    %p86 = scmp.eq.s32.totalorder %s22, 1
    %p87 = por %p85, %p86
    %p89 = scmp.ne.s32.totalorder %s74, %s88
    %p90 = scmp.eq.s32.totalorder %s22, 0
    %p91 = por %p89, %p90
    %s93 = sadd.s32 %s92, 1
    %p96 = scmp.eq.s32.totalorder %s16, 1
    %p97 = scmp.ne.s32.totalorder %s92, %s94
    %p98 = scmp.eq.s32.totalorder %s16, 0
    %p99 = por %p97, %p98
    %p100 = scmp.ne.s32.totalorder %s92, %s94
    %p101 = scmp.eq.s32.totalorder %s21, 1
    %p102 = por %p100, %p101
    %p103 = scmp.ne.s32.totalorder %s94, %s95
    %p104 = scmp.eq.s32.totalorder %s21, 0
    %p105 = por %p103, %p104
    %p106 = scmp.ne.s32.totalorder %s94, %s95
    %p107 = scmp.eq.s32.totalorder %s22, 1
    %p108 = por %p106, %p107
    %p110 = scmp.ne.s32.totalorder %s95, %s109
    %p111 = scmp.eq.s32.totalorder %s22, 0
    %p112 = por %p110, %p111
    %s114 = sadd.s32 %s113, 1
    %p117 = scmp.eq.s32.totalorder %s16, 1
    %p118 = scmp.ne.s32.totalorder %s113, %s115
    %p119 = scmp.eq.s32.totalorder %s16, 0
    %p120 = por %p118, %p119
    %p121 = scmp.ne.s32.totalorder %s113, %s115
    %p122 = scmp.eq.s32.totalorder %s21, 1
    %p123 = por %p121, %p122
    %p124 = scmp.ne.s32.totalorder %s115, %s116
    %p125 = scmp.eq.s32.totalorder %s21, 0
    %p126 = por %p124, %p125
    %p127 = scmp.ne.s32.totalorder %s115, %s116
    %p128 = scmp.eq.s32.totalorder %s22, 1
    %p129 = por %p127, %p128
    %p131 = scmp.ne.s32.totalorder %s116, %s130
    %p132 = scmp.eq.s32.totalorder %s22, 0
    %p133 = por %p131, %p132
    %s135 = sadd.s32 %s134, 1
    %p138 = scmp.eq.s32.totalorder %s16, 1
    %p139 = scmp.ne.s32.totalorder %s134, %s136
    %p140 = scmp.eq.s32.totalorder %s16, 0
    %p141 = por %p139, %p140
    %p142 = scmp.ne.s32.totalorder %s134, %s136
    %p143 = scmp.eq.s32.totalorder %s21, 1
    %p144 = por %p142, %p143
    %p145 = scmp.ne.s32.totalorder %s136, %s137
    %p146 = scmp.eq.s32.totalorder %s21, 0
    %p147 = por %p145, %p146
    %p148 = scmp.ne.s32.totalorder %s136, %s137
    %p149 = scmp.eq.s32.totalorder %s22, 1
    %p150 = por %p148, %p149
    %p152 = scmp.ne.s32.totalorder %s137, %s151
    %p153 = scmp.eq.s32.totalorder %s22, 0
    %p154 = por %p152, %p153
    %s156 = sadd.s32 %s155, 1
    %p159 = scmp.eq.s32.totalorder %s16, 1
    %p160 = scmp.ne.s32.totalorder %s155, %s157
    %p161 = scmp.eq.s32.totalorder %s16, 0
    %p162 = por %p160, %p161
    %p163 = scmp.ne.s32.totalorder %s155, %s157
    %p164 = scmp.eq.s32.totalorder %s21, 1
    %p165 = por %p163, %p164
    %p166 = scmp.ne.s32.totalorder %s157, %s158
    %p167 = scmp.eq.s32.totalorder %s21, 0
    %p168 = por %p166, %p167
    %p169 = scmp.ne.s32.totalorder %s157, %s158
    %p170 = scmp.eq.s32.totalorder %s22, 1
    %p171 = por %p169, %p170
    %p173 = scmp.ne.s32.totalorder %s158, %s172
    %p174 = scmp.eq.s32.totalorder %s22, 0
    %p175 = por %p173, %p174
    %s177 = sadd.s32 %s176, 1
    %p180 = scmp.eq.s32.totalorder %s16, 1
    %p181 = scmp.ne.s32.totalorder %s176, %s178
    %p182 = scmp.eq.s32.totalorder %s16, 0
    %p183 = por %p181, %p182
    %p184 = scmp.ne.s32.totalorder %s176, %s178
    %p185 = scmp.eq.s32.totalorder %s21, 1
    %p186 = por %p184, %p185
    %p187 = scmp.ne.s32.totalorder %s178, %s179
    %p188 = scmp.eq.s32.totalorder %s21, 0
    %p189 = por %p187, %p188
    %p190 = scmp.ne.s32.totalorder %s178, %s179
    %p191 = scmp.eq.s32.totalorder %s22, 1
    %p192 = por %p190, %p191
    %p194 = scmp.ne.s32.totalorder %s179, %s193
    %p195 = scmp.eq.s32.totalorder %s22, 0
    %p196 = por %p194, %p195
    %s198 = sadd.s32 %s197, 1
    %p201 = scmp.eq.s32.totalorder %s16, 1
    %p202 = scmp.ne.s32.totalorder %s197, %s199
    %p203 = scmp.eq.s32.totalorder %s16, 0
    %p204 = por %p202, %p203
    %p205 = scmp.ne.s32.totalorder %s197, %s199
    %p206 = scmp.eq.s32.totalorder %s21, 1
    %p207 = por %p205, %p206
    %p208 = scmp.ne.s32.totalorder %s199, %s200
    %p209 = scmp.eq.s32.totalorder %s21, 0
    %p210 = por %p208, %p209
    %p211 = scmp.ne.s32.totalorder %s199, %s200
    %p212 = scmp.eq.s32.totalorder %s22, 1
    %p213 = por %p211, %p212
    %p215 = scmp.ne.s32.totalorder %s200, %s214
    %p216 = scmp.eq.s32.totalorder %s22, 0
    %p217 = por %p215, %p216
    %s219 = sadd.s32 %s218, 1
    %p222 = scmp.eq.s32.totalorder %s16, 1
    %p223 = scmp.ne.s32.totalorder %s218, %s220
    %p224 = scmp.eq.s32.totalorder %s16, 0
    %p225 = por %p223, %p224
    %p226 = scmp.ne.s32.totalorder %s218, %s220
    %p227 = scmp.eq.s32.totalorder %s21, 1
    %p228 = por %p226, %p227
    %p229 = scmp.ne.s32.totalorder %s220, %s221
    %p230 = scmp.eq.s32.totalorder %s21, 0
    %p231 = por %p229, %p230
    %p232 = scmp.ne.s32.totalorder %s220, %s221
    %p233 = scmp.eq.s32.totalorder %s22, 1
    %p234 = por %p232, %p233
    %p236 = scmp.ne.s32.totalorder %s221, %s235
    %p237 = scmp.eq.s32.totalorder %s22, 0
    %p238 = por %p236, %p237
    %s239 = ssub.s32 %s16, %s23
    %p240 = scmp.eq.s32.totalorder %s239, 0
    %s242 = sadd.s32 %s241, 1
    %s243 = scalar_select %p240, %s241, %s242
    %p246 = pneg %p240
    %p247 = scmp.eq.s32.totalorder %s16, 1
    %p248 = por %p246, %p247
    %p249 = scmp.ne.s32.totalorder %s241, %s244
    %p250 = scmp.eq.s32.totalorder %s16, 0
    %p251 = por %p249, %p250
    %p252 = scmp.ne.s32.totalorder %s241, %s244
    %p253 = scmp.eq.s32.totalorder %s21, 1
    %p254 = por %p252, %p253
    %p255 = scmp.ne.s32.totalorder %s244, %s245
    %p256 = scmp.eq.s32.totalorder %s21, 0
    %p257 = por %p255, %p256
    %p258 = scmp.ne.s32.totalorder %s244, %s245
    %p259 = scmp.eq.s32.totalorder %s22, 1
    %p260 = por %p258, %p259
    %p262 = scmp.ne.s32.totalorder %s245, %s261
    %p263 = scmp.eq.s32.totalorder %s22, 0
    %p264 = por %p262, %p263
    %p265 = scmp.le.s32.totalorder 1, %s16
    %p266 = scmp.lt.s32.totalorder %s16, 3
    %p267 = pnand %p265, %p266
    %p268 = pneg %p267
    // Predicated region
    $region9: #{wav2vec2_z_forward_padded.1} parent=5 // pred_check
      _
    $region10: #{wav2vec2_z_forward_padded.1} parent=5 // pred_check_branch
      %270 = sbr.rel (%p267) target = $region12
    $region11: #{wav2vec2_z_forward_padded.1} parent=5 // pred_region
      %s271 = ssub.s32 %s16, 1
      // Predicated region
      $region13: #{wav2vec2_z_forward_padded.1} parent=11 // pred_check
        %p272 = pneg %p63
      $region14: #{wav2vec2_z_forward_padded.1} parent=11 // pred_check_branch
        %274 = sbr.rel (%p272) target = $region16
      $region15: #{wav2vec2_z_forward_padded.1} parent=11 // pred_region
        _
      $region16: #{wav2vec2_z_forward_padded.1} parent=11 // pred_fallthru
        _
      // Predicated region
      $region17: #{wav2vec2_z_forward_padded.1} parent=11 // pred_check
        %p275 = pneg %p84
      $region18: #{wav2vec2_z_forward_padded.1} parent=11 // pred_check_branch
        %277 = sbr.rel (%p275) target = $region20
      $region19: #{wav2vec2_z_forward_padded.1} parent=11 // pred_region
        _
      $region20: #{wav2vec2_z_forward_padded.1} parent=11 // pred_fallthru
        _
      // Predicated region
      $region21: #{wav2vec2_z_forward_padded.1} parent=11 // pred_check
        %p278 = pneg %p105
      $region22: #{wav2vec2_z_forward_padded.1} parent=11 // pred_check_branch
        %280 = sbr.rel (%p278) target = $region24
      $region23: #{wav2vec2_z_forward_padded.1} parent=11 // pred_region
        _
      $region24: #{wav2vec2_z_forward_padded.1} parent=11 // pred_fallthru
        _
      // Predicated region
      $region25: #{wav2vec2_z_forward_padded.1} parent=11 // pred_check
        %p281 = pneg %p126
      $region26: #{wav2vec2_z_forward_padded.1} parent=11 // pred_check_branch
        %283 = sbr.rel (%p281) target = $region28
      $region27: #{wav2vec2_z_forward_padded.1} parent=11 // pred_region
        _
      $region28: #{wav2vec2_z_forward_padded.1} parent=11 // pred_fallthru
        _
      // Predicated region
      $region29: #{wav2vec2_z_forward_padded.1} parent=11 // pred_check
        %p284 = pneg %p147
      $region30: #{wav2vec2_z_forward_padded.1} parent=11 // pred_check_branch
        %286 = sbr.rel (%p284) target = $region32
      $region31: #{wav2vec2_z_forward_padded.1} parent=11 // pred_region
        _
      $region32: #{wav2vec2_z_forward_padded.1} parent=11 // pred_fallthru
        _
      // Predicated region
      $region33: #{wav2vec2_z_forward_padded.1} parent=11 // pred_check
        %p287 = pneg %p168
      $region34: #{wav2vec2_z_forward_padded.1} parent=11 // pred_check_branch
        %289 = sbr.rel (%p287) target = $region36
      $region35: #{wav2vec2_z_forward_padded.1} parent=11 // pred_region
        _
      $region36: #{wav2vec2_z_forward_padded.1} parent=11 // pred_fallthru
        _
      // Predicated region
      $region37: #{wav2vec2_z_forward_padded.1} parent=11 // pred_check
        %p290 = pneg %p189
      $region38: #{wav2vec2_z_forward_padded.1} parent=11 // pred_check_branch
        %292 = sbr.rel (%p290) target = $region40
      $region39: #{wav2vec2_z_forward_padded.1} parent=11 // pred_region
        _
      $region40: #{wav2vec2_z_forward_padded.1} parent=11 // pred_fallthru
        _
      // Predicated region
      $region41: #{wav2vec2_z_forward_padded.1} parent=11 // pred_check
        %p293 = pneg %p210
      $region42: #{wav2vec2_z_forward_padded.1} parent=11 // pred_check_branch
        %295 = sbr.rel (%p293) target = $region44
      $region43: #{wav2vec2_z_forward_padded.1} parent=11 // pred_region
        _
      $region44: #{wav2vec2_z_forward_padded.1} parent=11 // pred_fallthru
        _
      // Predicated region
      $region45: #{wav2vec2_z_forward_padded.1} parent=11 // pred_check
        %p296 = pneg %p231
      $region46: #{wav2vec2_z_forward_padded.1} parent=11 // pred_check_branch
        %298 = sbr.rel (%p296) target = $region48
      $region47: #{wav2vec2_z_forward_padded.1} parent=11 // pred_region
        _
      $region48: #{wav2vec2_z_forward_padded.1} parent=11 // pred_fallthru
        _
    $region12: #{wav2vec2_z_forward_padded.1} parent=5 // pred_fallthru
      _
    %p299 = scmp.lt.s32.totalorder %s16, 2
    // Predicated region
    $region49: #{wav2vec2_z_forward_padded.1} parent=5 // pred_check
      %p300 = pneg %p299
    $region50: #{wav2vec2_z_forward_padded.1} parent=5 // pred_check_branch
      %302 = sbr.rel (%p300) target = $region52
    $region51: #{wav2vec2_z_forward_padded.1} parent=5 // pred_region
      // Predicated region
      $region53: #{wav2vec2_z_forward_padded.1} parent=51 // pred_check
        %p303 = pneg %p36
      $region54: #{wav2vec2_z_forward_padded.1} parent=51 // pred_check_branch
        %305 = sbr.rel (%p303) target = $region56
      $region55: #{wav2vec2_z_forward_padded.1} parent=51 // pred_region
        %s306 = smul.u32 2, %s16
        %p307 = scmp.lt.s32.totalorder %s306, 3
        %s308 = scalar_select %p307, %s306, 3
        %s309 = smul.addr %s308, 10
        %s310 = smul.addr %s309, 8
        %s311 = scalar_lea.vmem %s0, %s310
        %s312 = smul.u32 2, %s16
      $region56: #{wav2vec2_z_forward_padded.1} parent=51 // pred_fallthru
        _
    $region52: #{wav2vec2_z_forward_padded.1} parent=5 // pred_fallthru
      _
    %p313 = scmp.le.s32.totalorder 1, %s16
    %p314 = scmp.lt.s32.totalorder %s16, 3
    %p315 = pnand %p313, %p314
    %p316 = pneg %p315
    // Predicated region
    $region57: #{wav2vec2_z_forward_padded.1} parent=5 // pred_check
      _
    $region58: #{wav2vec2_z_forward_padded.1} parent=5 // pred_check_branch
      %318 = sbr.rel (%p315) target = $region60
    $region59: #{wav2vec2_z_forward_padded.1} parent=5 // pred_region
      %s319 = ssub.s32 %s16, 1
      %s320 = smul.u32 2, %s21
      %p321 = scmp.lt.s32.totalorder %s320, 3
      %s322 = scalar_select %p321, %s320, 3
      %s323 = smul.addr %s322, 10
      %s324 = smul.addr %s323, 8
      %s325 = scalar_lea.vmem %s0, %s324
      %p326 = pneg %p42
      %p327 = pneg %p39
      %p328 = pneg %p63
      %p329 = pneg %p60
      %p330 = pneg %p84
      %p331 = pneg %p81
      %p332 = pneg %p105
      %p333 = pneg %p102
      %p334 = pneg %p126
      %p335 = pneg %p123
      %p336 = pneg %p147
      %p337 = pneg %p144
      %p338 = pneg %p168
      %p339 = pneg %p165
      %p340 = pneg %p189
      %p341 = pneg %p186
      %p342 = pneg %p210
      %p343 = pneg %p207
      %p344 = pneg %p231
      %p345 = pneg %p228
      %p346 = pneg %p257
      %p347 = pneg %p254
      %s348 = smul.u32 2, %s21
      %p349 = scmp.lt.s32.totalorder %s348, 3
      %s350 = scalar_select %p349, %s348, 3
      %s351 = smul.addr %s350, 3
      %s352 = smul.addr %s351, 8
      %s353 = scalar_lea.vmem %s10, %s352
      %s354 = smul.u32 2, %s21
      %p355 = scmp.lt.s32.totalorder %s354, 3
      %s356 = scalar_select %p355, %s354, 3
      %s357 = smul.addr %s356, 10
      %s358 = smul.addr %s357, 8
      %s359 = scalar_lea.vmem %s0, %s358
      %s360 = smul.u32 2, %s21
      %s361 = smul.u32 2, %s21
      %p362 = scmp.lt.s32.totalorder %s361, 3
      %s363 = scalar_select %p362, %s361, 3
      %s364 = smul.addr %s363, 3
      %s365 = smul.addr %s364, 8
      %s366 = scalar_lea.vmem %s10, %s365
      %s367 = smul.u32 2, %s21
      %v369 = vld [vmem:[%s359] sm:$0xff]
      %v370 = vld [vmem:[%s359 + $0x8] sm:$0xff]
      %v371 = vld [vmem:[%s359 + $0x10] sm:$0xff]
      %v372 = vld [vmem:[%s359 + $0x18] sm:$0xff]
      %v373 = vld [vmem:[%s359 + $0x20] sm:$0xff]
      %v374 = vld [vmem:[%s359 + $0x28] sm:$0xff]
      %v375 = vld [vmem:[%s359 + $0x30] sm:$0xff]
      %v376 = vld [vmem:[%s359 + $0x38] sm:$0xff]
      %v377 = vld [vmem:[%s359 + $0x40] sm:$0xff]
      %v378 = vld [vmem:[%s359 + $0x48] sm:$0x7f]
      %v379 = vpack.c.bf16 %v370, %v369
      %v380 = vpack.c.bf16 %v372, %v371
      %v381 = vpack.c.bf16 %v374, %v373
      %v382 = vpack.c.bf16 %v376, %v375
      %v383 = vpack.c.bf16 %v378, %v377
      %v384 = vld [vmem:[%s1] sm:$0xf]
      %v385 = vld [vmem:[%s1 + $0x4] sm:$0x1]
      %v388 = vunpack.c.l.b16 %v384
      %v389 = vunpack.c.l.b16 %v385
      %v390 = vpack.c.b16 %v389, %v388
      %vm391 = vcmask 80896
      %v393 = vsel %vm391, %v379, 0
      %v396 = vsel %vm391, %v380, 0
      %v399 = vsel %vm391, %v381, 0
      %v402 = vsel %vm391, %v382, 0
      %v405 = vsel %vm391, %v383, 0
      %vm407 = vcmask 1044480
      %v409 = vsel %vm407, %v390, 0
      %411 = vmatprep.subr.bf16.mxu0 0
      %412 = vmatpush1.bf16.msra.mxu0 %v409
      %413 = vmatprep.subr.bf16.mxu0 0
      %414 = vmatpush1.bf16.msra.mxu0 0
      %415 = vmatprep.subr.bf16.mxu0 0
      %416 = vmatpush1.bf16.msra.mxu0 0
      %417 = vmatprep.subr.bf16.mxu0 0
      %418 = vmatpush1.bf16.msra.mxu0 0
      %419 = vmatprep.subr.bf16.mxu0 0
      %420 = vmatpush1.bf16.msra.mxu0 0
      %421 = vmatprep.subr.bf16.mxu0 0
      %422 = vmatpush1.bf16.msra.mxu0 0
      %423 = vmatprep.subr.bf16.mxu0 0
      %424 = vmatpush1.bf16.msra.mxu0 0
      %425 = vmatprep.subr.bf16.mxu0 0
      %426 = vmatpush1.bf16.msra.mxu0 0
      %427 = vmatprep.subr.bf16.mxu0 0
      %428 = vmatpush1.bf16.msra.mxu0 0
      %429 = vmatprep.subr.bf16.mxu0 0
      %430 = vmatpush1.bf16.msra.mxu0 0
      %431 = vmatprep.subr.bf16.mxu0 0
      %432 = vmatpush1.bf16.msra.mxu0 0
      %433 = vmatprep.subr.bf16.mxu0 0
      %434 = vmatpush1.bf16.msra.mxu0 0
      %435 = vmatprep.subr.bf16.mxu0 0
      %436 = vmatpush1.bf16.msra.mxu0 0
      %437 = vmatprep.subr.bf16.mxu0 0
      %438 = vmatpush1.bf16.msra.mxu0 0
      %439 = vmatprep.subr.bf16.mxu0 0
      %440 = vmatpush1.bf16.msra.mxu0 0
      %441 = vmatprep.subr.bf16.mxu0 0
      %442 = vmatpush1.bf16.msra.mxu0 0
      %443 = vmatprep.mubr.bf16.mxu0 0
      %444 = vmatmul.mubr.bf16.gmra.mrb[0].mxu0 %v393
      %v445 = vpop.f32.mrb[0].mxu0
      %v446 = vadd.f32 0.0, %v445
      %v447 = vpop.f32.mrb[0].mxu0
      %v448 = vpop.f32.mrb[0].mxu0
      %v449 = vadd.f32 0.0, %v448
      %v450 = vpop.f32.mrb[0].mxu0
      %451 = vmatprep.mubr.bf16.mxu0 0
      %452 = vmatmul.mubr.bf16.gmra.mrb[0].mxu0 %v396
      %v453 = vpop.f32.mrb[0].mxu0
      %v454 = vadd.f32 0.0, %v453
      %v455 = vpop.f32.mrb[0].mxu0
      %v456 = vpop.f32.mrb[0].mxu0
      %v457 = vadd.f32 0.0, %v456
      %v458 = vpop.f32.mrb[0].mxu0
      %459 = vmatprep.mubr.bf16.mxu0 0
      %460 = vmatmul.mubr.bf16.gmra.mrb[0].mxu0 %v399
      %v461 = vpop.f32.mrb[0].mxu0
      %v462 = vadd.f32 0.0, %v461
      %v463 = vpop.f32.mrb[0].mxu0
      %v464 = vpop.f32.mrb[0].mxu0
      %v465 = vadd.f32 0.0, %v464
      %v466 = vpop.f32.mrb[0].mxu0
      %467 = vmatprep.mubr.bf16.mxu0 0
      %468 = vmatmul.mubr.bf16.gmra.mrb[0].mxu0 %v402
      %v469 = vpop.f32.mrb[0].mxu0
      %v470 = vadd.f32 0.0, %v469
      %v471 = vpop.f32.mrb[0].mxu0
      %v472 = vpop.f32.mrb[0].mxu0
      %v473 = vadd.f32 0.0, %v472
      %v474 = vpop.f32.mrb[0].mxu0
      %475 = vmatprep.mubr.bf16.mxu0 0
      %476 = vmatmul.mubr.bf16.gmra.mrb[0].mxu0 %v405
      %v477 = vpop.f32.mrb[0].mxu0
      %v478 = vadd.f32 0.0, %v477
      %v479 = vpop.f32.mrb[0].mxu0
      %v480 = vpop.f32.mrb[0].mxu0
      %v481 = vadd.f32 0.0, %v480
      %v482 = vpop.f32.mrb[0].mxu0
      %483 = vdwg.mxu0
      %v484 = vadd.f32 %v446, %v449
      %v485 = vadd.f32 %v484, %v454
      %v486 = vadd.f32 %v485, %v457
      %v487 = vadd.f32 %v486, %v462
      %v488 = vadd.f32 %v487, %v465
      %v489 = vadd.f32 %v488, %v470
      %v490 = vadd.f32 %v489, %v473
      %v491 = vadd.f32 %v490, %v478
      %vm492 = vcmask 1046528
      %v493 = vsel %vm492, %v481, 0.0
      %v494 = vadd.f32 %v491, %v493
      %v495 = vrot.slane %v494, 4
      %v496 = vadd.f32 %v494, %v495
      %v497 = vrot.slane %v496, 2
      %v498 = vadd.f32 %v496, %v497
      %v499 = vrot.slane %v498, 1
      %v500 = vadd.f32 %v498, %v499
      %v501 = vmul.f32 %v500, 0.012658228
      %v502 = vsub.f32 %v446, %v501
      %v503 = vsub.f32 %v449, %v501
      %v504 = vsub.f32 %v454, %v501
      %v505 = vsub.f32 %v457, %v501
      %v506 = vsub.f32 %v462, %v501
      %v507 = vsub.f32 %v465, %v501
      %v508 = vsub.f32 %v470, %v501
      %v509 = vsub.f32 %v473, %v501
      %v510 = vsub.f32 %v478, %v501
      %v511 = vsub.f32 %v481, %v501
      %v512 = vmul.f32 %v502, %v502
      %v513 = vmul.f32 %v503, %v503
      %v514 = vmul.f32 %v504, %v504
      %v515 = vmul.f32 %v505, %v505
      %v516 = vmul.f32 %v506, %v506
      %v517 = vmul.f32 %v507, %v507
      %v518 = vmul.f32 %v508, %v508
      %v519 = vmul.f32 %v509, %v509
      %v520 = vmul.f32 %v510, %v510
      %v521 = vmul.f32 %v511, %v511
      %v522 = vadd.f32 %v512, %v513
      %v523 = vadd.f32 %v522, %v514
      %v524 = vadd.f32 %v523, %v515
      %v525 = vadd.f32 %v524, %v516
      %v526 = vadd.f32 %v525, %v517
      %v527 = vadd.f32 %v526, %v518
      %v528 = vadd.f32 %v527, %v519
      %v529 = vadd.f32 %v528, %v520
      %v530 = vsel %vm492, %v521, 0.0
      %v531 = vadd.f32 %v529, %v530
      %v532 = vrot.slane %v531, 4
      %v533 = vadd.f32 %v531, %v532
      %v534 = vrot.slane %v533, 2
      %v535 = vadd.f32 %v533, %v534
      %v536 = vrot.slane %v535, 1
      %v537 = vadd.f32 %v535, %v536
      %v538 = vmul.f32 %v537, 0.012658228
      %v539 = vadd.f32 %v538, 1e-05
      %v540 = vrsqrt.pop %v539
      %v541 = vmul.f32 %v502, %v540
      %v542 = vmul.f32 %v503, %v540
      %v543 = vmul.f32 %v504, %v540
      %v544 = vmul.f32 %v505, %v540
      %v545 = vmul.f32 %v506, %v540
      %v546 = vmul.f32 %v507, %v540
      %v547 = vmul.f32 %v508, %v540
      %v548 = vmul.f32 %v509, %v540
      %v549 = vmul.f32 %v510, %v540
      %v550 = vmul.f32 %v511, %v540
      %v551 = vld [vmem:[%s2] sm:$0x1]
      %v553 = vlaneseq
      %v554 = vshrl.u32 %v553, 7
      %v555 = vsub.s32 0, %v554
      %v556 = vrot.slane %v551, %v555
      %v558 = vmul.f32 %v541, %v556
      %v559 = vmul.f32 %v542, %v556
      %v560 = vmul.f32 %v543, %v556
      %v561 = vmul.f32 %v544, %v556
      %v562 = vmul.f32 %v545, %v556
      %v563 = vmul.f32 %v546, %v556
      %v564 = vmul.f32 %v547, %v556
      %v565 = vmul.f32 %v548, %v556
      %v566 = vmul.f32 %v549, %v556
      %v567 = vmul.f32 %v550, %v556
      %v568 = vld [vmem:[%s3] sm:$0x1]
      %v570 = vlaneseq
      %v571 = vshrl.u32 %v570, 7
      %v572 = vsub.s32 0, %v571
      %v573 = vrot.slane %v568, %v572
      %v575 = vadd.f32 %v558, %v573
      %v576 = vadd.f32 %v559, %v573
      %v577 = vadd.f32 %v560, %v573
      %v578 = vadd.f32 %v561, %v573
      %v579 = vadd.f32 %v562, %v573
      %v580 = vadd.f32 %v563, %v573
      %v581 = vadd.f32 %v564, %v573
      %v582 = vadd.f32 %v565, %v573
      %v583 = vadd.f32 %v566, %v573
      %v584 = vadd.f32 %v567, %v573
      %v585 = vmul.f32 %v575, %v575
      %v586 = vmul.f32 %v576, %v576
      %v587 = vmul.f32 %v577, %v577
      %v588 = vmul.f32 %v578, %v578
      %v589 = vmul.f32 %v579, %v579
      %v590 = vmul.f32 %v580, %v580
      %v591 = vmul.f32 %v581, %v581
      %v592 = vmul.f32 %v582, %v582
      %v593 = vmul.f32 %v583, %v583
      %v594 = vmul.f32 %v584, %v584
      %v595 = vmul.f32 %v575, %v585
      %v596 = vmul.f32 %v576, %v586
      %v597 = vmul.f32 %v577, %v587
      %v598 = vmul.f32 %v578, %v588
      %v599 = vmul.f32 %v579, %v589
      %v600 = vmul.f32 %v580, %v590
      %v601 = vmul.f32 %v581, %v591
      %v602 = vmul.f32 %v582, %v592
      %v603 = vmul.f32 %v583, %v593
      %v604 = vmul.f32 %v584, %v594
      %v605 = vmul.f32 %v595, 0.044715
      %v606 = vmul.f32 %v596, 0.044715
      %v607 = vmul.f32 %v597, 0.044715
      %v608 = vmul.f32 %v598, 0.044715
      %v609 = vmul.f32 %v599, 0.044715
      %v610 = vmul.f32 %v600, 0.044715
      %v611 = vmul.f32 %v601, 0.044715
      %v612 = vmul.f32 %v602, 0.044715
      %v613 = vmul.f32 %v603, 0.044715
      %v614 = vmul.f32 %v604, 0.044715
      %v615 = vadd.f32 %v575, %v605
      %v616 = vadd.f32 %v576, %v606
      %v617 = vadd.f32 %v577, %v607
      %v618 = vadd.f32 %v578, %v608
      %v619 = vadd.f32 %v579, %v609
      %v620 = vadd.f32 %v580, %v610
      %v621 = vadd.f32 %v581, %v611
      %v622 = vadd.f32 %v582, %v612
      %v623 = vadd.f32 %v583, %v613
      %v624 = vadd.f32 %v584, %v614
      %v625 = vmul.f32 %v615, 0.7978846
      %v626 = vmul.f32 %v616, 0.7978846
      %v627 = vmul.f32 %v617, 0.7978846
      %v628 = vmul.f32 %v618, 0.7978846
      %v629 = vmul.f32 %v619, 0.7978846
      %v630 = vmul.f32 %v620, 0.7978846
      %v631 = vmul.f32 %v621, 0.7978846
      %v632 = vmul.f32 %v622, 0.7978846
      %v633 = vmul.f32 %v623, 0.7978846
      %v634 = vmul.f32 %v624, 0.7978846
      %v635 = vtanh.pop %v625
      %v636 = vtanh.pop %v626
      %v637 = vtanh.pop %v627
      %v638 = vtanh.pop %v628
      %v639 = vtanh.pop %v629
      %v640 = vtanh.pop %v630
      %v641 = vtanh.pop %v631
      %v642 = vtanh.pop %v632
      %v643 = vtanh.pop %v633
      %v644 = vtanh.pop %v634
      %v645 = vadd.f32 %v635, 1.0
      %v646 = vadd.f32 %v636, 1.0
      %v647 = vadd.f32 %v637, 1.0
      %v648 = vadd.f32 %v638, 1.0
      %v649 = vadd.f32 %v639, 1.0
      %v650 = vadd.f32 %v640, 1.0
      %v651 = vadd.f32 %v641, 1.0
      %v652 = vadd.f32 %v642, 1.0
      %v653 = vadd.f32 %v643, 1.0
      %v654 = vadd.f32 %v644, 1.0
      %v655 = vmul.f32 %v645, 0.5
      %v656 = vmul.f32 %v646, 0.5
      %v657 = vmul.f32 %v647, 0.5
      %v658 = vmul.f32 %v648, 0.5
      %v659 = vmul.f32 %v649, 0.5
      %v660 = vmul.f32 %v650, 0.5
      %v661 = vmul.f32 %v651, 0.5
      %v662 = vmul.f32 %v652, 0.5
      %v663 = vmul.f32 %v653, 0.5
      %v664 = vmul.f32 %v654, 0.5
      %v665 = vmul.f32 %v575, %v655
      %v666 = vmul.f32 %v576, %v656
      %v667 = vmul.f32 %v577, %v657
      %v668 = vmul.f32 %v578, %v658
      %v669 = vmul.f32 %v579, %v659
      %v670 = vmul.f32 %v580, %v660
      %v671 = vmul.f32 %v581, %v661
      %v672 = vmul.f32 %v582, %v662
      %v673 = vmul.f32 %v583, %v663
      %v674 = vmul.f32 %v584, %v664
      %675 = vst [vmem:[#allocation2] sm:$0xff] %v665
      %676 = vst [vmem:[#allocation2 + $0x8] sm:$0xff] %v666
      %677 = vst [vmem:[#allocation2 + $0x10] sm:$0xff] %v667
      %678 = vst [vmem:[#allocation2 + $0x18] sm:$0xff] %v668
      %679 = vst [vmem:[#allocation2 + $0x20] sm:$0xff] %v669
      %680 = vst [vmem:[#allocation2 + $0x28] sm:$0xff] %v670
      %681 = vst [vmem:[#allocation2 + $0x30] sm:$0xff] %v671
      %682 = vst [vmem:[#allocation2 + $0x38] sm:$0xff] %v672
      %683 = vst [vmem:[#allocation2 + $0x40] sm:$0xff] %v673
      %684 = vst [vmem:[#allocation2 + $0x48] sm:$0x7f] %v674
      %v685 = vld [vmem:[#allocation2] ss:$2 sm:$0xff]
      %s686 = scalar_lea.vmem [#allocation2], 16
      %v687 = vld [vmem:[%s686] ss:$2 sm:$0xff]
      %s688 = scalar_lea.vmem [#allocation2], 32
      %v689 = vld [vmem:[%s688] ss:$2 sm:$0xff]
      %s690 = scalar_lea.vmem [#allocation2], 48
      %v691 = vld [vmem:[%s690] ss:$2 sm:$0xff]
      %s692 = scalar_lea.vmem [#allocation2], 64
      %v693 = vld [vmem:[%s692] ss:$2 sm:$0x7f]
      %v694 = vpack.c.bf16 %v687, %v685
      %v695 = vpack.c.bf16 %v691, %v689
      %v696 = vpack.c.bf16 %v693, %v693
      %v697 = vld [vmem:[%s4] sm:$0xf]
      %v698 = vld [vmem:[%s4 + $0x4] sm:$0xf]
      %v699 = vld [vmem:[%s4 + $0x8] sm:$0xf]
      %v700 = vld [vmem:[%s4 + $0xc] sm:$0xf]
      %v701 = vld [vmem:[%s4 + $0x10] sm:$0xf]
      %v702 = vld [vmem:[%s4 + $0x14] sm:$0xf]
      %v703 = vld [vmem:[%s4 + $0x18] sm:$0xf]
      %v704 = vld [vmem:[%s4 + $0x1c] sm:$0xf]
      %v705 = vld [vmem:[%s4 + $0x20] sm:$0xf]
      %v706 = vld [vmem:[%s4 + $0x24] sm:$0xf]
      %v707 = vld [vmem:[%s4 + $0x28] sm:$0xf]
      %v708 = vld [vmem:[%s4 + $0x2c] sm:$0xf]
      %v709 = vld [vmem:[%s4 + $0x30] sm:$0xf]
      %v710 = vld [vmem:[%s4 + $0x34] sm:$0xf]
      %v711 = vld [vmem:[%s4 + $0x38] sm:$0xf]
      %v712 = vld [vmem:[%s4 + $0x3c] sm:$0xf]
      %s713 = scalar_lea.vmem [#allocation2], 1
      %v714 = vld [vmem:[%s713] ss:$2 sm:$0xff]
      %s715 = scalar_lea.vmem [#allocation2], 17
      %v716 = vld [vmem:[%s715] ss:$2 sm:$0xff]
      %s717 = scalar_lea.vmem [#allocation2], 33
      %v718 = vld [vmem:[%s717] ss:$2 sm:$0xff]
      %s719 = scalar_lea.vmem [#allocation2], 49
      %v720 = vld [vmem:[%s719] ss:$2 sm:$0xff]
      %s721 = scalar_lea.vmem [#allocation2], 65
      %v722 = vld [vmem:[%s721] ss:$2 sm:$0x7f]
      %v723 = vpack.c.bf16 %v716, %v714
      %v724 = vpack.c.bf16 %v720, %v718
      %v725 = vpack.c.bf16 %v722, %v722
      %s726 = scalar_lea.vmem %s4, 64
      %v727 = vld [vmem:[%s726] sm:$0xf]
      %v728 = vld [vmem:[%s726 + $0x4] sm:$0xf]
      %v729 = vld [vmem:[%s726 + $0x8] sm:$0xf]
      %v730 = vld [vmem:[%s726 + $0xc] sm:$0xf]
      %v731 = vld [vmem:[%s726 + $0x10] sm:$0xf]
      %v732 = vld [vmem:[%s726 + $0x14] sm:$0xf]
      %v733 = vld [vmem:[%s726 + $0x18] sm:$0xf]
      %v734 = vld [vmem:[%s726 + $0x1c] sm:$0xf]
      %v735 = vld [vmem:[%s726 + $0x20] sm:$0xf]
      %v736 = vld [vmem:[%s726 + $0x24] sm:$0xf]
      %v737 = vld [vmem:[%s726 + $0x28] sm:$0xf]
      %v738 = vld [vmem:[%s726 + $0x2c] sm:$0xf]
      %v739 = vld [vmem:[%s726 + $0x30] sm:$0xf]
      %v740 = vld [vmem:[%s726 + $0x34] sm:$0xf]
      %v741 = vld [vmem:[%s726 + $0x38] sm:$0xf]
      %v742 = vld [vmem:[%s726 + $0x3c] sm:$0xf]
      %v759 = vunpack.c.l.b16 %v727
      %v760 = vunpack.c.l.b16 %v728
      %v761 = vunpack.c.l.b16 %v729
      %v762 = vunpack.c.l.b16 %v730
      %v763 = vunpack.c.l.b16 %v731
      %v764 = vunpack.c.l.b16 %v732
      %v765 = vunpack.c.l.b16 %v733
      %v766 = vunpack.c.l.b16 %v734
      %v767 = vunpack.c.l.b16 %v735
      %v768 = vunpack.c.l.b16 %v736
      %v769 = vunpack.c.l.b16 %v737
      %v770 = vunpack.c.l.b16 %v738
      %v771 = vunpack.c.l.b16 %v739
      %v772 = vunpack.c.l.b16 %v740
      %v773 = vunpack.c.l.b16 %v741
      %v774 = vunpack.c.l.b16 %v742
      %v775 = vpack.c.b16 %v760, %v759
      %v776 = vpack.c.b16 %v762, %v761
      %v777 = vpack.c.b16 %v764, %v763
      %v778 = vpack.c.b16 %v766, %v765
      %v779 = vpack.c.b16 %v768, %v767
      %v780 = vpack.c.b16 %v770, %v769
      %v781 = vpack.c.b16 %v772, %v771
      %v782 = vpack.c.b16 %v774, %v773
      %791 = vmatprep.subr.bf16.mxu0 0
      %792 = vmatpush1.bf16.msra.mxu0 %v775
      %793 = vmatprep.subr.bf16.mxu0 0
      %794 = vmatpush1.bf16.msra.mxu0 %v776
      %795 = vmatprep.subr.bf16.mxu0 0
      %796 = vmatpush1.bf16.msra.mxu0 %v777
      %797 = vmatprep.subr.bf16.mxu0 0
      %798 = vmatpush1.bf16.msra.mxu0 %v778
      %799 = vmatprep.subr.bf16.mxu0 0
      %800 = vmatpush1.bf16.msra.mxu0 %v779
      %801 = vmatprep.subr.bf16.mxu0 0
      %802 = vmatpush1.bf16.msra.mxu0 %v780
      %803 = vmatprep.subr.bf16.mxu0 0
      %804 = vmatpush1.bf16.msra.mxu0 %v781
      %805 = vmatprep.subr.bf16.mxu0 0
      %806 = vmatpush1.bf16.msra.mxu0 %v782
      %807 = vmatprep.subr.bf16.mxu0 0
      %808 = vmatpush1.bf16.msra.mxu0 0
      %809 = vmatprep.subr.bf16.mxu0 0
      %810 = vmatpush1.bf16.msra.mxu0 0
      %811 = vmatprep.subr.bf16.mxu0 0
      %812 = vmatpush1.bf16.msra.mxu0 0
      %813 = vmatprep.subr.bf16.mxu0 0
      %814 = vmatpush1.bf16.msra.mxu0 0
      %815 = vmatprep.subr.bf16.mxu0 0
      %816 = vmatpush1.bf16.msra.mxu0 0
      %817 = vmatprep.subr.bf16.mxu0 0
      %818 = vmatpush1.bf16.msra.mxu0 0
      %819 = vmatprep.subr.bf16.mxu0 0
      %820 = vmatpush1.bf16.msra.mxu0 0
      %821 = vmatprep.subr.bf16.mxu0 0
      %822 = vmatpush1.bf16.msra.mxu0 0
      %823 = vmatprep.mubr.bf16.mxu0 0
      %824 = vmatmul.mubr.bf16.gmra.mrb[0].mxu0 %v723
      %v825 = vpop.f32.mrb[0].mxu0
      %v826 = vadd.f32 0.0, %v825
      %v827 = vpop.f32.mrb[0].mxu0
      %v828 = vpop.f32.mrb[0].mxu0
      %v829 = vadd.f32 0.0, %v828
      %v830 = vpop.f32.mrb[0].mxu0
      %831 = vmatprep.mubr.bf16.mxu0 0
      %832 = vmatmul.mubr.bf16.gmra.mrb[0].mxu0 %v724
      %v833 = vpop.f32.mrb[0].mxu0
      %v834 = vadd.f32 0.0, %v833
      %v835 = vpop.f32.mrb[0].mxu0
      %v836 = vpop.f32.mrb[0].mxu0
      %v837 = vadd.f32 0.0, %v836
      %v838 = vpop.f32.mrb[0].mxu0
      %839 = vmatprep.mubr.bf16.mxu0 0
      %840 = vmatmul.mubr.bf16.gmra.mrb[0].mxu0 %v725
      %v841 = vpop.f32.mrb[0].mxu0
      %v842 = vadd.f32 0.0, %v841
      %v843 = vpop.f32.mrb[0].mxu0
      %v844 = vpop.f32.mrb[0].mxu0
      %v845 = vpop.f32.mrb[0].mxu0
      %846 = vdwg.mxu0
      %v863 = vunpack.c.l.b16 %v697
      %v864 = vunpack.c.l.b16 %v698
      %v865 = vunpack.c.l.b16 %v699
      %v866 = vunpack.c.l.b16 %v700
      %v867 = vunpack.c.l.b16 %v701
      %v868 = vunpack.c.l.b16 %v702
      %v869 = vunpack.c.l.b16 %v703
      %v870 = vunpack.c.l.b16 %v704
      %v871 = vunpack.c.l.b16 %v705
      %v872 = vunpack.c.l.b16 %v706
      %v873 = vunpack.c.l.b16 %v707
      %v874 = vunpack.c.l.b16 %v708
      %v875 = vunpack.c.l.b16 %v709
      %v876 = vunpack.c.l.b16 %v710
      %v877 = vunpack.c.l.b16 %v711
      %v878 = vunpack.c.l.b16 %v712
      %v879 = vpack.c.b16 %v864, %v863
      %v880 = vpack.c.b16 %v866, %v865
      %v881 = vpack.c.b16 %v868, %v867
      %v882 = vpack.c.b16 %v870, %v869
      %v883 = vpack.c.b16 %v872, %v871
      %v884 = vpack.c.b16 %v874, %v873
      %v885 = vpack.c.b16 %v876, %v875
      %v886 = vpack.c.b16 %v878, %v877
      %895 = vmatprep.subr.bf16.mxu0 0
      %896 = vmatpush1.bf16.msra.mxu0 %v879
      %897 = vmatprep.subr.bf16.mxu0 0
      %898 = vmatpush1.bf16.msra.mxu0 %v880
      %899 = vmatprep.subr.bf16.mxu0 0
      %900 = vmatpush1.bf16.msra.mxu0 %v881
      %901 = vmatprep.subr.bf16.mxu0 0
      %902 = vmatpush1.bf16.msra.mxu0 %v882
      %903 = vmatprep.subr.bf16.mxu0 0
      %904 = vmatpush1.bf16.msra.mxu0 %v883
      %905 = vmatprep.subr.bf16.mxu0 0
      %906 = vmatpush1.bf16.msra.mxu0 %v884
      %907 = vmatprep.subr.bf16.mxu0 0
      %908 = vmatpush1.bf16.msra.mxu0 %v885
      %909 = vmatprep.subr.bf16.mxu0 0
      %910 = vmatpush1.bf16.msra.mxu0 %v886
      %911 = vmatprep.subr.bf16.mxu0 0
      %912 = vmatpush1.bf16.msra.mxu0 0
      %913 = vmatprep.subr.bf16.mxu0 0
      %914 = vmatpush1.bf16.msra.mxu0 0
      %915 = vmatprep.subr.bf16.mxu0 0
      %916 = vmatpush1.bf16.msra.mxu0 0
      %917 = vmatprep.subr.bf16.mxu0 0
      %918 = vmatpush1.bf16.msra.mxu0 0
      %919 = vmatprep.subr.bf16.mxu0 0
      %920 = vmatpush1.bf16.msra.mxu0 0
      %921 = vmatprep.subr.bf16.mxu0 0
      %922 = vmatpush1.bf16.msra.mxu0 0
      %923 = vmatprep.subr.bf16.mxu0 0
      %924 = vmatpush1.bf16.msra.mxu0 0
      %925 = vmatprep.subr.bf16.mxu0 0
      %926 = vmatpush1.bf16.msra.mxu0 0
      %927 = vmatprep.mubr.bf16.mxu0 0
      %928 = vmatmul.mubr.bf16.gmra.mrb[0].mxu0 %v694
      %v929 = vpop.f32.mrb[0].mxu0
      %v930 = vadd.f32 %v826, %v929
      %v931 = vpop.f32.mrb[0].mxu0
      %v932 = vpop.f32.mrb[0].mxu0
      %v933 = vadd.f32 %v829, %v932
      %v934 = vpop.f32.mrb[0].mxu0
      %935 = vmatprep.mubr.bf16.mxu0 0
      %936 = vmatmul.mubr.bf16.gmra.mrb[0].mxu0 %v695
      %v937 = vpop.f32.mrb[0].mxu0
      %v938 = vadd.f32 %v834, %v937
      %v939 = vpop.f32.mrb[0].mxu0
      %v940 = vpop.f32.mrb[0].mxu0
      %v941 = vadd.f32 %v837, %v940
      %v942 = vpop.f32.mrb[0].mxu0
      %943 = vmatprep.mubr.bf16.mxu0 0
      %944 = vmatmul.mubr.bf16.gmra.mrb[0].mxu0 %v696
      %v945 = vpop.f32.mrb[0].mxu0
      %v946 = vadd.f32 %v842, %v945
      %v947 = vpop.f32.mrb[0].mxu0
      %v948 = vpop.f32.mrb[0].mxu0
      %v949 = vpop.f32.mrb[0].mxu0
      %950 = vdwg.mxu0
      %s951 = scalar_lea.vmem [#allocation2], 2
      %v952 = vld [vmem:[%s951] ss:$2 sm:$0xff]
      %s953 = scalar_lea.vmem [#allocation2], 18
      %v954 = vld [vmem:[%s953] ss:$2 sm:$0xff]
      %s955 = scalar_lea.vmem [#allocation2], 34
      %v956 = vld [vmem:[%s955] ss:$2 sm:$0xff]
      %s957 = scalar_lea.vmem [#allocation2], 50
      %v958 = vld [vmem:[%s957] ss:$2 sm:$0xff]
      %s959 = scalar_lea.vmem [#allocation2], 66
      %v960 = vld [vmem:[%s959] ss:$2 sm:$0x7f]
      %v961 = vpack.c.bf16 %v954, %v952
      %v962 = vpack.c.bf16 %v958, %v956
      %v963 = vpack.c.bf16 %v960, %v960
      %s964 = scalar_lea.vmem %s4, 128
      %v965 = vld [vmem:[%s964] sm:$0xf]
      %v966 = vld [vmem:[%s964 + $0x4] sm:$0xf]
      %v967 = vld [vmem:[%s964 + $0x8] sm:$0xf]
      %v968 = vld [vmem:[%s964 + $0xc] sm:$0xf]
      %v969 = vld [vmem:[%s964 + $0x10] sm:$0xf]
      %v970 = vld [vmem:[%s964 + $0x14] sm:$0xf]
      %v971 = vld [vmem:[%s964 + $0x18] sm:$0xf]
      %v972 = vld [vmem:[%s964 + $0x1c] sm:$0xf]
      %v973 = vld [vmem:[%s964 + $0x20] sm:$0xf]
      %v974 = vld [vmem:[%s964 + $0x24] sm:$0xf]
      %v975 = vld [vmem:[%s964 + $0x28] sm:$0xf]
      %v976 = vld [vmem:[%s964 + $0x2c] sm:$0xf]
      %v977 = vld [vmem:[%s964 + $0x30] sm:$0xf]
      %v978 = vld [vmem:[%s964 + $0x34] sm:$0xf]
      %v979 = vld [vmem:[%s964 + $0x38] sm:$0xf]
      %v980 = vld [vmem:[%s964 + $0x3c] sm:$0xf]
      %v997 = vunpack.c.l.b16 %v965
      %v998 = vunpack.c.l.b16 %v966
      %v999 = vunpack.c.l.b16 %v967
      %v1000 = vunpack.c.l.b16 %v968
      %v1001 = vunpack.c.l.b16 %v969
      %v1002 = vunpack.c.l.b16 %v970
      %v1003 = vunpack.c.l.b16 %v971
      %v1004 = vunpack.c.l.b16 %v972
      %v1005 = vunpack.c.l.b16 %v973
      %v1006 = vunpack.c.l.b16 %v974
      %v1007 = vunpack.c.l.b16 %v975
      %v1008 = vunpack.c.l.b16 %v976
      %v1009 = vunpack.c.l.b16 %v977
      %v1010 = vunpack.c.l.b16 %v978
      %v1011 = vunpack.c.l.b16 %v979
      %v1012 = vunpack.c.l.b16 %v980
      %v1013 = vpack.c.b16 %v998, %v997
      %v1014 = vpack.c.b16 %v1000, %v999
      %v1015 = vpack.c.b16 %v1002, %v1001
      %v1016 = vpack.c.b16 %v1004, %v1003
      %v1017 = vpack.c.b16 %v1006, %v1005
      %v1018 = vpack.c.b16 %v1008, %v1007
      %v1019 = vpack.c.b16 %v1010, %v1009
      %v1020 = vpack.c.b16 %v1012, %v1011
      %1029 = vmatprep.subr.bf16.mxu0 0
      %1030 = vmatpush1.bf16.msra.mxu0 %v1013
      %1031 = vmatprep.subr.bf16.mxu0 0
      %1032 = vmatpush1.bf16.msra.mxu0 %v1014
      %1033 = vmatprep.subr.bf16.mxu0 0
      %1034 = vmatpush1.bf16.msra.mxu0 %v1015
      %1035 = vmatprep.subr.bf16.mxu0 0
      %1036 = vmatpush1.bf16.msra.mxu0 %v1016
      %1037 = vmatprep.subr.bf16.mxu0 0
      %1038 = vmatpush1.bf16.msra.mxu0 %v1017
      %1039 = vmatprep.subr.bf16.mxu0 0
      %1040 = vmatpush1.bf16.msra.mxu0 %v1018
      %1041 = vmatprep.subr.bf16.mxu0 0
      %1042 = vmatpush1.bf16.msra.mxu0 %v1019
      %1043 = vmatprep.subr.bf16.mxu0 0
      %1044 = vmatpush1.bf16.msra.mxu0 %v1020
      %1045 = vmatprep.subr.bf16.mxu0 0
      %1046 = vmatpush1.bf16.msra.mxu0 0
      %1047 = vmatprep.subr.bf16.mxu0 0
      %1048 = vmatpush1.bf16.msra.mxu0 0
      %1049 = vmatprep.subr.bf16.mxu0 0
      %1050 = vmatpush1.bf16.msra.mxu0 0
      %1051 = vmatprep.subr.bf16.mxu0 0
      %1052 = vmatpush1.bf16.msra.mxu0 0
      %1053 = vmatprep.subr.bf16.mxu0 0
      %1054 = vmatpush1.bf16.msra.mxu0 0
      %1055 = vmatprep.subr.bf16.mxu0 0
      %1056 = vmatpush1.bf16.msra.mxu0 0
      %1057 = vmatprep.subr.bf16.mxu0 0
      %1058 = vmatpush1.bf16.msra.mxu0 0
      %1059 = vmatprep.subr.bf16.mxu0 0
      %1060 = vmatpush1.bf16.msra.mxu0 0
      %1061 = vmatprep.mubr.bf16.mxu0 0
      %1062 = vmatmul.mubr.bf16.gmra.mrb[0].mxu0 %v961
      %v1063 = vpop.f32.mrb[0].mxu0
      %v1064 = vadd.f32 0.0, %v1063
      %v1065 = vpop.f32.mrb[0].mxu0
      %v1066 = vpop.f32.mrb[0].mxu0
      %v1067 = vadd.f32 0.0, %v1066
      %v1068 = vpop.f32.mrb[0].mxu0
      %1069 = vmatprep.mubr.bf16.mxu0 0
      %1070 = vmatmul.mubr.bf16.gmra.mrb[0].mxu0 %v962
      %v1071 = vpop.f32.mrb[0].mxu0
      %v1072 = vadd.f32 0.0, %v1071
      %v1073 = vpop.f32.mrb[0].mxu0
      %v1074 = vpop.f32.mrb[0].mxu0
      %v1075 = vadd.f32 0.0, %v1074
      %v1076 = vpop.f32.mrb[0].mxu0
      %1077 = vmatprep.mubr.bf16.mxu0 0
      %1078 = vmatmul.mubr.bf16.gmra.mrb[0].mxu0 %v963
      %v1079 = vpop.f32.mrb[0].mxu0
      %v1080 = vadd.f32 0.0, %v1079
      %v1081 = vpop.f32.mrb[0].mxu0
      %v1082 = vpop.f32.mrb[0].mxu0
      %v1083 = vpop.f32.mrb[0].mxu0
      %1084 = vdwg.mxu0
      %v1085 = vadd.f32 %v930, %v1064
      %v1086 = vadd.f32 %v933, %v1067
      %v1087 = vadd.f32 %v938, %v1072
      %v1088 = vadd.f32 %v941, %v1075
      %v1089 = vadd.f32 %v946, %v1080
      %v1090 = vmul.f32 %v1085, %v1085
      %v1091 = vmul.f32 %v1086, %v1086
      %v1092 = vmul.f32 %v1087, %v1087
      %v1093 = vmul.f32 %v1088, %v1088
      %v1094 = vmul.f32 %v1089, %v1089
      %v1095 = vmul.f32 %v1085, %v1090
      %v1096 = vmul.f32 %v1086, %v1091
      %v1097 = vmul.f32 %v1087, %v1092
      %v1098 = vmul.f32 %v1088, %v1093
      %v1099 = vmul.f32 %v1089, %v1094
      %v1100 = vmul.f32 %v1095, 0.044715
      %v1101 = vmul.f32 %v1096, 0.044715
      %v1102 = vmul.f32 %v1097, 0.044715
      %v1103 = vmul.f32 %v1098, 0.044715
      %v1104 = vmul.f32 %v1099, 0.044715
      %v1105 = vadd.f32 %v1085, %v1100
      %v1106 = vadd.f32 %v1086, %v1101
      %v1107 = vadd.f32 %v1087, %v1102
      %v1108 = vadd.f32 %v1088, %v1103
      %v1109 = vadd.f32 %v1089, %v1104
      %v1110 = vmul.f32 %v1105, 0.7978846
      %v1111 = vmul.f32 %v1106, 0.7978846
      %v1112 = vmul.f32 %v1107, 0.7978846
      %v1113 = vmul.f32 %v1108, 0.7978846
      %v1114 = vmul.f32 %v1109, 0.7978846
      %v1115 = vtanh.pop %v1110
      %v1116 = vtanh.pop %v1111
      %v1117 = vtanh.pop %v1112
      %v1118 = vtanh.pop %v1113
      %v1119 = vtanh.pop %v1114
      %v1120 = vadd.f32 %v1115, 1.0
      %v1121 = vadd.f32 %v1116, 1.0
      %v1122 = vadd.f32 %v1117, 1.0
      %v1123 = vadd.f32 %v1118, 1.0
      %v1124 = vadd.f32 %v1119, 1.0
      %v1125 = vmul.f32 %v1120, 0.5
      %v1126 = vmul.f32 %v1121, 0.5
      %v1127 = vmul.f32 %v1122, 0.5
      %v1128 = vmul.f32 %v1123, 0.5
      %v1129 = vmul.f32 %v1124, 0.5
      %v1130 = vmul.f32 %v1085, %v1125
      %v1131 = vmul.f32 %v1086, %v1126
      %v1132 = vmul.f32 %v1087, %v1127
      %v1133 = vmul.f32 %v1088, %v1128
      %v1134 = vmul.f32 %v1089, %v1129
      %1135 = vst [vmem:[#allocation3] sm:$0xff] %v1130
      %1136 = vst [vmem:[#allocation3 + $0x8] sm:$0xff] %v1131
      %1137 = vst [vmem:[#allocation3 + $0x10] sm:$0xff] %v1132
      %1138 = vst [vmem:[#allocation3 + $0x18] sm:$0xff] %v1133
      %1139 = vst [vmem:[#allocation3 + $0x20] sm:$0x7f] %v1134
      %v1140 = vld [vmem:[#allocation3] ss:$2 sm:$0xff]
      %s1141 = scalar_lea.vmem [#allocation3], 16
      %v1142 = vld [vmem:[%s1141] ss:$2 sm:$0xff]
      %s1143 = scalar_lea.vmem [#allocation3], 32
      %v1144 = vld [vmem:[%s1143] ss:$2 sm:$0x7]
      %v1145 = vpack.c.bf16 %v1142, %v1140
      %v1146 = vpack.c.bf16 %v1144, %v1144
      %v1147 = vld [vmem:[%s5] sm:$0xf]
      %v1148 = vld [vmem:[%s5 + $0x4] sm:$0xf]
      %v1149 = vld [vmem:[%s5 + $0x8] sm:$0xf]
      %v1150 = vld [vmem:[%s5 + $0xc] sm:$0xf]
      %v1151 = vld [vmem:[%s5 + $0x10] sm:$0xf]
      %v1152 = vld [vmem:[%s5 + $0x14] sm:$0xf]
      %v1153 = vld [vmem:[%s5 + $0x18] sm:$0xf]
      %v1154 = vld [vmem:[%s5 + $0x1c] sm:$0xf]
      %v1155 = vld [vmem:[%s5 + $0x20] sm:$0xf]
      %v1156 = vld [vmem:[%s5 + $0x24] sm:$0xf]
      %v1157 = vld [vmem:[%s5 + $0x28] sm:$0xf]
      %v1158 = vld [vmem:[%s5 + $0x2c] sm:$0xf]
      %v1159 = vld [vmem:[%s5 + $0x30] sm:$0xf]
      %v1160 = vld [vmem:[%s5 + $0x34] sm:$0xf]
      %v1161 = vld [vmem:[%s5 + $0x38] sm:$0xf]
      %v1162 = vld [vmem:[%s5 + $0x3c] sm:$0xf]
      %s1163 = scalar_lea.vmem [#allocation3], 1
      %v1164 = vld [vmem:[%s1163] ss:$2 sm:$0xff]
      %s1165 = scalar_lea.vmem [#allocation3], 17
      %v1166 = vld [vmem:[%s1165] ss:$2 sm:$0xff]
      %s1167 = scalar_lea.vmem [#allocation3], 33
      %v1168 = vld [vmem:[%s1167] ss:$2 sm:$0x7]
      %v1169 = vpack.c.bf16 %v1166, %v1164
      %v1170 = vpack.c.bf16 %v1168, %v1168
      %s1171 = scalar_lea.vmem %s5, 64
      %v1172 = vld [vmem:[%s1171] sm:$0xf]
      %v1173 = vld [vmem:[%s1171 + $0x4] sm:$0xf]
      %v1174 = vld [vmem:[%s1171 + $0x8] sm:$0xf]
      %v1175 = vld [vmem:[%s1171 + $0xc] sm:$0xf]
      %v1176 = vld [vmem:[%s1171 + $0x10] sm:$0xf]
      %v1177 = vld [vmem:[%s1171 + $0x14] sm:$0xf]
      %v1178 = vld [vmem:[%s1171 + $0x18] sm:$0xf]
      %v1179 = vld [vmem:[%s1171 + $0x1c] sm:$0xf]
      %v1180 = vld [vmem:[%s1171 + $0x20] sm:$0xf]
      %v1181 = vld [vmem:[%s1171 + $0x24] sm:$0xf]
      %v1182 = vld [vmem:[%s1171 + $0x28] sm:$0xf]
      %v1183 = vld [vmem:[%s1171 + $0x2c] sm:$0xf]
      %v1184 = vld [vmem:[%s1171 + $0x30] sm:$0xf]
      %v1185 = vld [vmem:[%s1171 + $0x34] sm:$0xf]
      %v1186 = vld [vmem:[%s1171 + $0x38] sm:$0xf]
      %v1187 = vld [vmem:[%s1171 + $0x3c] sm:$0xf]
      %v1204 = vunpack.c.l.b16 %v1172
      %v1205 = vunpack.c.l.b16 %v1173
      %v1206 = vunpack.c.l.b16 %v1174
      %v1207 = vunpack.c.l.b16 %v1175
      %v1208 = vunpack.c.l.b16 %v1176
      %v1209 = vunpack.c.l.b16 %v1177
      %v1210 = vunpack.c.l.b16 %v1178
      %v1211 = vunpack.c.l.b16 %v1179
      %v1212 = vunpack.c.l.b16 %v1180
      %v1213 = vunpack.c.l.b16 %v1181
      %v1214 = vunpack.c.l.b16 %v1182
      %v1215 = vunpack.c.l.b16 %v1183
      %v1216 = vunpack.c.l.b16 %v1184
      %v1217 = vunpack.c.l.b16 %v1185
      %v1218 = vunpack.c.l.b16 %v1186
      %v1219 = vunpack.c.l.b16 %v1187
      %v1220 = vpack.c.b16 %v1205, %v1204
      %v1221 = vpack.c.b16 %v1207, %v1206
      %v1222 = vpack.c.b16 %v1209, %v1208
      %v1223 = vpack.c.b16 %v1211, %v1210
      %v1224 = vpack.c.b16 %v1213, %v1212
      %v1225 = vpack.c.b16 %v1215, %v1214
      %v1226 = vpack.c.b16 %v1217, %v1216
      %v1227 = vpack.c.b16 %v1219, %v1218
      %1236 = vmatprep.subr.bf16.mxu0 0
      %1237 = vmatpush1.bf16.msra.mxu0 %v1220
      %1238 = vmatprep.subr.bf16.mxu0 0
      %1239 = vmatpush1.bf16.msra.mxu0 %v1221
      %1240 = vmatprep.subr.bf16.mxu0 0
      %1241 = vmatpush1.bf16.msra.mxu0 %v1222
      %1242 = vmatprep.subr.bf16.mxu0 0
      %1243 = vmatpush1.bf16.msra.mxu0 %v1223
      %1244 = vmatprep.subr.bf16.mxu0 0
      %1245 = vmatpush1.bf16.msra.mxu0 %v1224
      %1246 = vmatprep.subr.bf16.mxu0 0
      %1247 = vmatpush1.bf16.msra.mxu0 %v1225
      %1248 = vmatprep.subr.bf16.mxu0 0
      %1249 = vmatpush1.bf16.msra.mxu0 %v1226
      %1250 = vmatprep.subr.bf16.mxu0 0
      %1251 = vmatpush1.bf16.msra.mxu0 %v1227
      %1252 = vmatprep.subr.bf16.mxu0 0
      %1253 = vmatpush1.bf16.msra.mxu0 0
      %1254 = vmatprep.subr.bf16.mxu0 0
      %1255 = vmatpush1.bf16.msra.mxu0 0
      %1256 = vmatprep.subr.bf16.mxu0 0
      %1257 = vmatpush1.bf16.msra.mxu0 0
      %1258 = vmatprep.subr.bf16.mxu0 0
      %1259 = vmatpush1.bf16.msra.mxu0 0
      %1260 = vmatprep.subr.bf16.mxu0 0
      %1261 = vmatpush1.bf16.msra.mxu0 0
      %1262 = vmatprep.subr.bf16.mxu0 0
      %1263 = vmatpush1.bf16.msra.mxu0 0
      %1264 = vmatprep.subr.bf16.mxu0 0
      %1265 = vmatpush1.bf16.msra.mxu0 0
      %1266 = vmatprep.subr.bf16.mxu0 0
      %1267 = vmatpush1.bf16.msra.mxu0 0
      %1268 = vmatprep.mubr.bf16.mxu0 0
      %1269 = vmatmul.mubr.bf16.gmra.mrb[0].mxu0 %v1169
      %v1270 = vpop.f32.mrb[0].mxu0
      %v1271 = vadd.f32 0.0, %v1270
      %v1272 = vpop.f32.mrb[0].mxu0
      %v1273 = vpop.f32.mrb[0].mxu0
      %v1274 = vadd.f32 0.0, %v1273
      %v1275 = vpop.f32.mrb[0].mxu0
      %1276 = vmatprep.mubr.bf16.mxu0 0
      %1277 = vmatmul.mubr.bf16.gmra.mrb[0].mxu0 %v1170
      %v1278 = vpop.f32.mrb[0].mxu0
      %v1279 = vadd.f32 0.0, %v1278
      %v1280 = vpop.f32.mrb[0].mxu0
      %v1281 = vpop.f32.mrb[0].mxu0
      %v1282 = vpop.f32.mrb[0].mxu0
      %1283 = vdwg.mxu0
      %v1300 = vunpack.c.l.b16 %v1147
      %v1301 = vunpack.c.l.b16 %v1148
      %v1302 = vunpack.c.l.b16 %v1149
      %v1303 = vunpack.c.l.b16 %v1150
      %v1304 = vunpack.c.l.b16 %v1151
      %v1305 = vunpack.c.l.b16 %v1152
      %v1306 = vunpack.c.l.b16 %v1153
      %v1307 = vunpack.c.l.b16 %v1154
      %v1308 = vunpack.c.l.b16 %v1155
      %v1309 = vunpack.c.l.b16 %v1156
      %v1310 = vunpack.c.l.b16 %v1157
      %v1311 = vunpack.c.l.b16 %v1158
      %v1312 = vunpack.c.l.b16 %v1159
      %v1313 = vunpack.c.l.b16 %v1160
      %v1314 = vunpack.c.l.b16 %v1161
      %v1315 = vunpack.c.l.b16 %v1162
      %v1316 = vpack.c.b16 %v1301, %v1300
      %v1317 = vpack.c.b16 %v1303, %v1302
      %v1318 = vpack.c.b16 %v1305, %v1304
      %v1319 = vpack.c.b16 %v1307, %v1306
      %v1320 = vpack.c.b16 %v1309, %v1308
      %v1321 = vpack.c.b16 %v1311, %v1310
      %v1322 = vpack.c.b16 %v1313, %v1312
      %v1323 = vpack.c.b16 %v1315, %v1314
      %1332 = vmatprep.subr.bf16.mxu0 0
      %1333 = vmatpush1.bf16.msra.mxu0 %v1316
      %1334 = vmatprep.subr.bf16.mxu0 0
      %1335 = vmatpush1.bf16.msra.mxu0 %v1317
      %1336 = vmatprep.subr.bf16.mxu0 0
      %1337 = vmatpush1.bf16.msra.mxu0 %v1318
      %1338 = vmatprep.subr.bf16.mxu0 0
      %1339 = vmatpush1.bf16.msra.mxu0 %v1319
      %1340 = vmatprep.subr.bf16.mxu0 0
      %1341 = vmatpush1.bf16.msra.mxu0 %v1320
      %1342 = vmatprep.subr.bf16.mxu0 0
      %1343 = vmatpush1.bf16.msra.mxu0 %v1321
      %1344 = vmatprep.subr.bf16.mxu0 0
      %1345 = vmatpush1.bf16.msra.mxu0 %v1322
      %1346 = vmatprep.subr.bf16.mxu0 0
      %1347 = vmatpush1.bf16.msra.mxu0 %v1323
      %1348 = vmatprep.subr.bf16.mxu0 0
      %1349 = vmatpush1.bf16.msra.mxu0 0
      %1350 = vmatprep.subr.bf16.mxu0 0
      %1351 = vmatpush1.bf16.msra.mxu0 0
      %1352 = vmatprep.subr.bf16.mxu0 0
      %1353 = vmatpush1.bf16.msra.mxu0 0
      %1354 = vmatprep.subr.bf16.mxu0 0
      %1355 = vmatpush1.bf16.msra.mxu0 0
      %1356 = vmatprep.subr.bf16.mxu0 0
      %1357 = vmatpush1.bf16.msra.mxu0 0
      %1358 = vmatprep.subr.bf16.mxu0 0
      %1359 = vmatpush1.bf16.msra.mxu0 0
      %1360 = vmatprep.subr.bf16.mxu0 0
      %1361 = vmatpush1.bf16.msra.mxu0 0
      %1362 = vmatprep.subr.bf16.mxu0 0
      %1363 = vmatpush1.bf16.msra.mxu0 0
      %1364 = vmatprep.mubr.bf16.mxu0 0
      %1365 = vmatmul.mubr.bf16.gmra.mrb[0].mxu0 %v1145
      %v1366 = vpop.f32.mrb[0].mxu0
      %v1367 = vadd.f32 %v1271, %v1366
      %v1368 = vpop.f32.mrb[0].mxu0
      %v1369 = vpop.f32.mrb[0].mxu0
      %v1370 = vadd.f32 %v1274, %v1369
      %v1371 = vpop.f32.mrb[0].mxu0
      %1372 = vmatprep.mubr.bf16.mxu0 0
      %1373 = vmatmul.mubr.bf16.gmra.mrb[0].mxu0 %v1146
      %v1374 = vpop.f32.mrb[0].mxu0
      %v1375 = vadd.f32 %v1279, %v1374
      %v1376 = vpop.f32.mrb[0].mxu0
      %v1377 = vpop.f32.mrb[0].mxu0
      %v1378 = vpop.f32.mrb[0].mxu0
      %1379 = vdwg.mxu0
      %v1380 = vmul.f32 %v1367, %v1367
      %v1381 = vmul.f32 %v1370, %v1370
      %v1382 = vmul.f32 %v1375, %v1375
      %v1383 = vmul.f32 %v1367, %v1380
      %v1384 = vmul.f32 %v1370, %v1381
      %v1385 = vmul.f32 %v1375, %v1382
      %v1386 = vmul.f32 %v1383, 0.044715
      %v1387 = vmul.f32 %v1384, 0.044715
      %v1388 = vmul.f32 %v1385, 0.044715
      %v1389 = vadd.f32 %v1367, %v1386
      %v1390 = vadd.f32 %v1370, %v1387
      %v1391 = vadd.f32 %v1375, %v1388
      %v1392 = vmul.f32 %v1389, 0.7978846
      %v1393 = vmul.f32 %v1390, 0.7978846
      %v1394 = vmul.f32 %v1391, 0.7978846
      %v1395 = vtanh.pop %v1392
      %v1396 = vtanh.pop %v1393
      %v1397 = vtanh.pop %v1394
      %v1398 = vadd.f32 %v1395, 1.0
      %v1399 = vadd.f32 %v1396, 1.0
      %v1400 = vadd.f32 %v1397, 1.0
      %v1401 = vmul.f32 %v1398, 0.5
      %v1402 = vmul.f32 %v1399, 0.5
      %v1403 = vmul.f32 %v1400, 0.5
      %v1404 = vmul.f32 %v1367, %v1401
      %v1405 = vmul.f32 %v1370, %v1402
      %v1406 = vmul.f32 %v1375, %v1403
      %1407 = vadd.xlane.f32.xlu0 %v1404
      %v1408 = vpop.xlane.xlu0 %1407
      %1409 = vadd.xlane.f32.xlu0 %v1405
      %v1410 = vpop.xlane.xlu0 %1409
      %vm1411 = vcmask 1042432
      %v1412 = vsel %vm1411, %v1406, 0.0
      %1413 = vadd.xlane.f32.xlu0 %v1412
      %v1414 = vpop.xlane.xlu0 %1413
      %v1415 = vmul.f32 %v1408, 0.03125
      %v1416 = vmul.f32 %v1410, 0.03125
      %v1417 = vmul.f32 %v1414, 0.03125
      %v1418 = vmul.f32 %v1404, %v1404
      %v1419 = vmul.f32 %v1405, %v1405
      %v1420 = vmul.f32 %v1406, %v1406
      %1421 = vadd.xlane.f32.xlu0 %v1418
      %v1422 = vpop.xlane.xlu0 %1421
      %1423 = vadd.xlane.f32.xlu0 %v1419
      %v1424 = vpop.xlane.xlu0 %1423
      %v1425 = vsel %vm1411, %v1420, 0.0
      %1426 = vadd.xlane.f32.xlu0 %v1425
      %v1427 = vpop.xlane.xlu0 %1426
      %v1428 = vmul.f32 %v1422, 0.03125
      %v1429 = vmul.f32 %v1424, 0.03125
      %v1430 = vmul.f32 %v1427, 0.03125
      %v1431 = vsub.f32 %v1404, %v1415
      %v1432 = vsub.f32 %v1405, %v1416
      %v1433 = vsub.f32 %v1406, %v1417
      %v1434 = vmul.f32 %v1415, %v1415
      %v1435 = vmul.f32 %v1416, %v1416
      %v1436 = vmul.f32 %v1417, %v1417
      %v1437 = vsub.f32 %v1428, %v1434
      %v1438 = vsub.f32 %v1429, %v1435
      %v1439 = vsub.f32 %v1430, %v1436
      %v1440 = vadd.f32 %v1437, 1e-05
      %v1441 = vadd.f32 %v1438, 1e-05
      %v1442 = vadd.f32 %v1439, 1e-05
      %v1443 = vrsqrt.pop %v1440
      %v1444 = vrsqrt.pop %v1441
      %v1445 = vrsqrt.pop %v1442
      %v1446 = vmul.f32 %v1431, %v1443
      %v1447 = vmul.f32 %v1432, %v1444
      %v1448 = vmul.f32 %v1433, %v1445
      %v1449 = vld [vmem:[%s6] sm:$0x1]
      %v1451 = vlaneseq
      %v1452 = vshrl.u32 %v1451, 7
      %v1453 = vsub.s32 0, %v1452
      %v1454 = vrot.slane %v1449, %v1453
      %v1456 = vmul.f32 %v1446, %v1454
      %v1457 = vmul.f32 %v1447, %v1454
      %v1458 = vmul.f32 %v1448, %v1454
      %v1459 = vld [vmem:[%s7] sm:$0x1]
      %v1461 = vlaneseq
      %v1462 = vshrl.u32 %v1461, 7
      %v1463 = vsub.s32 0, %v1462
      %v1464 = vrot.slane %v1459, %v1463
      %v1466 = vadd.f32 %v1456, %v1464
      %v1467 = vadd.f32 %v1457, %v1464
      %v1468 = vadd.f32 %v1458, %v1464
      %v1469 = vpack.c.bf16 %v1467, %v1466
      %v1470 = vpack.c.bf16 %v1468, %v1468
      %v1471 = vld [vmem:[%s8] sm:$0xf]
      %v1472 = vld [vmem:[%s8 + $0x4] sm:$0xf]
      %v1473 = vld [vmem:[%s8 + $0x8] sm:$0xf]
      %v1474 = vld [vmem:[%s8 + $0xc] sm:$0xf]
      %v1475 = vld [vmem:[%s8 + $0x10] sm:$0xf]
      %v1476 = vld [vmem:[%s8 + $0x14] sm:$0xf]
      %v1477 = vld [vmem:[%s8 + $0x18] sm:$0xf]
      %v1478 = vld [vmem:[%s8 + $0x1c] sm:$0xf]
      %v1479 = vld [vmem:[%s8 + $0x20] sm:$0xf]
      %v1480 = vld [vmem:[%s8 + $0x24] sm:$0xf]
      %v1481 = vld [vmem:[%s8 + $0x28] sm:$0xf]
      %v1482 = vld [vmem:[%s8 + $0x2c] sm:$0xf]
      %v1483 = vld [vmem:[%s8 + $0x30] sm:$0xf]
      %v1484 = vld [vmem:[%s8 + $0x34] sm:$0xf]
      %v1485 = vld [vmem:[%s8 + $0x38] sm:$0xf]
      %v1486 = vld [vmem:[%s8 + $0x3c] sm:$0xf]
      %v1487 = vld [vmem:[%s9] sm:$0x1]
      %v1489 = vlaneseq
      %v1490 = vshrl.u32 %v1489, 7
      %v1491 = vsub.s32 0, %v1490
      %v1492 = vrot.slane %v1487, %v1491
      %v1510 = vunpack.c.l.b16 %v1471
      %v1511 = vunpack.c.l.b16 %v1472
      %v1512 = vunpack.c.l.b16 %v1473
      %v1513 = vunpack.c.l.b16 %v1474
      %v1514 = vunpack.c.l.b16 %v1475
      %v1515 = vunpack.c.l.b16 %v1476
      %v1516 = vunpack.c.l.b16 %v1477
      %v1517 = vunpack.c.l.b16 %v1478
      %v1518 = vunpack.c.l.b16 %v1479
      %v1519 = vunpack.c.l.b16 %v1480
      %v1520 = vunpack.c.l.b16 %v1481
      %v1521 = vunpack.c.l.b16 %v1482
      %v1522 = vunpack.c.l.b16 %v1483
      %v1523 = vunpack.c.l.b16 %v1484
      %v1524 = vunpack.c.l.b16 %v1485
      %v1525 = vunpack.c.l.b16 %v1486
      %v1526 = vpack.c.b16 %v1511, %v1510
      %v1527 = vpack.c.b16 %v1513, %v1512
      %v1528 = vpack.c.b16 %v1515, %v1514
      %v1529 = vpack.c.b16 %v1517, %v1516
      %v1530 = vpack.c.b16 %v1519, %v1518
      %v1531 = vpack.c.b16 %v1521, %v1520
      %v1532 = vpack.c.b16 %v1523, %v1522
      %v1533 = vpack.c.b16 %v1525, %v1524
      %1542 = vmatprep.subr.bf16.mxu0 0
      %1543 = vmatpush1.bf16.msra.mxu0 %v1526
      %1544 = vmatprep.subr.bf16.mxu0 0
      %1545 = vmatpush1.bf16.msra.mxu0 %v1527
      %1546 = vmatprep.subr.bf16.mxu0 0
      %1547 = vmatpush1.bf16.msra.mxu0 %v1528
      %1548 = vmatprep.subr.bf16.mxu0 0
      %1549 = vmatpush1.bf16.msra.mxu0 %v1529
      %1550 = vmatprep.subr.bf16.mxu0 0
      %1551 = vmatpush1.bf16.msra.mxu0 %v1530
      %1552 = vmatprep.subr.bf16.mxu0 0
      %1553 = vmatpush1.bf16.msra.mxu0 %v1531
      %1554 = vmatprep.subr.bf16.mxu0 0
      %1555 = vmatpush1.bf16.msra.mxu0 %v1532
      %1556 = vmatprep.subr.bf16.mxu0 0
      %1557 = vmatpush1.bf16.msra.mxu0 %v1533
      %1558 = vmatprep.subr.bf16.mxu0 0
      %1559 = vmatpush1.bf16.msra.mxu0 0
      %1560 = vmatprep.subr.bf16.mxu0 0
      %1561 = vmatpush1.bf16.msra.mxu0 0
      %1562 = vmatprep.subr.bf16.mxu0 0
      %1563 = vmatpush1.bf16.msra.mxu0 0
      %1564 = vmatprep.subr.bf16.mxu0 0
      %1565 = vmatpush1.bf16.msra.mxu0 0
      %1566 = vmatprep.subr.bf16.mxu0 0
      %1567 = vmatpush1.bf16.msra.mxu0 0
      %1568 = vmatprep.subr.bf16.mxu0 0
      %1569 = vmatpush1.bf16.msra.mxu0 0
      %1570 = vmatprep.subr.bf16.mxu0 0
      %1571 = vmatpush1.bf16.msra.mxu0 0
      %1572 = vmatprep.subr.bf16.mxu0 0
      %1573 = vmatpush1.bf16.msra.mxu0 0
      %1574 = vmatprep.mubr.bf16.mxu0 0
      %1575 = vmatmul.mubr.bf16.gmra.mrb[0].mxu0 %v1469
      %v1576 = vpop.f32.mrb[0].mxu0
      %v1577 = vadd.f32 %v1492, %v1576
      %v1578 = vpop.f32.mrb[0].mxu0
      %v1579 = vpop.f32.mrb[0].mxu0
      %v1580 = vadd.f32 %v1492, %v1579
      %v1581 = vpop.f32.mrb[0].mxu0
      %1582 = vmatprep.mubr.bf16.mxu0 0
      %1583 = vmatmul.mubr.bf16.gmra.mrb[0].mxu0 %v1470
      %v1584 = vpop.f32.mrb[0].mxu0
      %v1585 = vadd.f32 %v1492, %v1584
      %v1586 = vpop.f32.mrb[0].mxu0
      %v1587 = vpop.f32.mrb[0].mxu0
      %v1588 = vpop.f32.mrb[0].mxu0
      %1589 = vdwg.mxu0
      %1590 = vst [vmem:[%s366] sm:$0xff] %v1577
      %1591 = vst [vmem:[%s366 + $0x8] sm:$0xff] %v1580
      %1592 = vst [vmem:[%s366 + $0x10] sm:$0x7] %v1585
      %s1593 = scalar_lea.vmem %s359, 80
      %v1594 = vld [vmem:[%s1593] sm:$0xff]
      %v1595 = vld [vmem:[%s1593 + $0x8] sm:$0xff]
      %v1596 = vld [vmem:[%s1593 + $0x10] sm:$0xff]
      %v1597 = vld [vmem:[%s1593 + $0x18] sm:$0xff]
      %v1598 = vld [vmem:[%s1593 + $0x20] sm:$0xff]
      %v1599 = vld [vmem:[%s1593 + $0x28] sm:$0xff]
      %v1600 = vld [vmem:[%s1593 + $0x30] sm:$0xff]
      %v1601 = vld [vmem:[%s1593 + $0x38] sm:$0xff]
      %v1602 = vld [vmem:[%s1593 + $0x40] sm:$0xff]
      %v1603 = vld [vmem:[%s1593 + $0x48] sm:$0x7f]
      %v1604 = vpack.c.bf16 %v1595, %v1594
      %v1605 = vpack.c.bf16 %v1597, %v1596
      %v1606 = vpack.c.bf16 %v1599, %v1598
      %v1607 = vpack.c.bf16 %v1601, %v1600
      %v1608 = vpack.c.bf16 %v1603, %v1602
      %v1609 = vld [vmem:[%s1] sm:$0xf]
      %v1610 = vld [vmem:[%s1 + $0x4] sm:$0x1]
      %v1613 = vunpack.c.l.b16 %v1609
      %v1614 = vunpack.c.l.b16 %v1610
      %v1615 = vpack.c.b16 %v1614, %v1613
      %v1617 = vsel %vm391, %v1604, 0
      %v1620 = vsel %vm391, %v1605, 0
      %v1623 = vsel %vm391, %v1606, 0
      %v1626 = vsel %vm391, %v1607, 0
      %v1629 = vsel %vm391, %v1608, 0
      %v1632 = vsel %vm407, %v1615, 0
      %1634 = vmatprep.subr.bf16.mxu0 0
      %1635 = vmatpush1.bf16.msra.mxu0 %v1632
      %1636 = vmatprep.subr.bf16.mxu0 0
      %1637 = vmatpush1.bf16.msra.mxu0 0
      %1638 = vmatprep.subr.bf16.mxu0 0
      %1639 = vmatpush1.bf16.msra.mxu0 0
      %1640 = vmatprep.subr.bf16.mxu0 0
      %1641 = vmatpush1.bf16.msra.mxu0 0
      %1642 = vmatprep.subr.bf16.mxu0 0
      %1643 = vmatpush1.bf16.msra.mxu0 0
      %1644 = vmatprep.subr.bf16.mxu0 0
      %1645 = vmatpush1.bf16.msra.mxu0 0
      %1646 = vmatprep.subr.bf16.mxu0 0
      %1647 = vmatpush1.bf16.msra.mxu0 0
      %1648 = vmatprep.subr.bf16.mxu0 0
      %1649 = vmatpush1.bf16.msra.mxu0 0
      %1650 = vmatprep.subr.bf16.mxu0 0
      %1651 = vmatpush1.bf16.msra.mxu0 0
      %1652 = vmatprep.subr.bf16.mxu0 0
      %1653 = vmatpush1.bf16.msra.mxu0 0
      %1654 = vmatprep.subr.bf16.mxu0 0
      %1655 = vmatpush1.bf16.msra.mxu0 0
      %1656 = vmatprep.subr.bf16.mxu0 0
      %1657 = vmatpush1.bf16.msra.mxu0 0
      %1658 = vmatprep.subr.bf16.mxu0 0
      %1659 = vmatpush1.bf16.msra.mxu0 0
      %1660 = vmatprep.subr.bf16.mxu0 0
      %1661 = vmatpush1.bf16.msra.mxu0 0
      %1662 = vmatprep.subr.bf16.mxu0 0
      %1663 = vmatpush1.bf16.msra.mxu0 0
      %1664 = vmatprep.subr.bf16.mxu0 0
      %1665 = vmatpush1.bf16.msra.mxu0 0
      %1666 = vmatprep.mubr.bf16.mxu0 0
      %1667 = vmatmul.mubr.bf16.gmra.mrb[0].mxu0 %v1617
      %v1668 = vpop.f32.mrb[0].mxu0
      %v1669 = vadd.f32 0.0, %v1668
      %v1670 = vpop.f32.mrb[0].mxu0
      %v1671 = vpop.f32.mrb[0].mxu0
      %v1672 = vadd.f32 0.0, %v1671
      %v1673 = vpop.f32.mrb[0].mxu0
      %1674 = vmatprep.mubr.bf16.mxu0 0
      %1675 = vmatmul.mubr.bf16.gmra.mrb[0].mxu0 %v1620
      %v1676 = vpop.f32.mrb[0].mxu0
      %v1677 = vadd.f32 0.0, %v1676
      %v1678 = vpop.f32.mrb[0].mxu0
      %v1679 = vpop.f32.mrb[0].mxu0
      %v1680 = vadd.f32 0.0, %v1679
      %v1681 = vpop.f32.mrb[0].mxu0
      %1682 = vmatprep.mubr.bf16.mxu0 0
      %1683 = vmatmul.mubr.bf16.gmra.mrb[0].mxu0 %v1623
      %v1684 = vpop.f32.mrb[0].mxu0
      %v1685 = vadd.f32 0.0, %v1684
      %v1686 = vpop.f32.mrb[0].mxu0
      %v1687 = vpop.f32.mrb[0].mxu0
      %v1688 = vadd.f32 0.0, %v1687
      %v1689 = vpop.f32.mrb[0].mxu0
      %1690 = vmatprep.mubr.bf16.mxu0 0
      %1691 = vmatmul.mubr.bf16.gmra.mrb[0].mxu0 %v1626
      %v1692 = vpop.f32.mrb[0].mxu0
      %v1693 = vadd.f32 0.0, %v1692
      %v1694 = vpop.f32.mrb[0].mxu0
      %v1695 = vpop.f32.mrb[0].mxu0
      %v1696 = vadd.f32 0.0, %v1695
      %v1697 = vpop.f32.mrb[0].mxu0
      %1698 = vmatprep.mubr.bf16.mxu0 0
      %1699 = vmatmul.mubr.bf16.gmra.mrb[0].mxu0 %v1629
      %v1700 = vpop.f32.mrb[0].mxu0
      %v1701 = vadd.f32 0.0, %v1700
      %v1702 = vpop.f32.mrb[0].mxu0
      %v1703 = vpop.f32.mrb[0].mxu0
      %v1704 = vadd.f32 0.0, %v1703
      %v1705 = vpop.f32.mrb[0].mxu0
      %1706 = vdwg.mxu0
      %v1707 = vadd.f32 %v1669, %v1672
      %v1708 = vadd.f32 %v1707, %v1677
      %v1709 = vadd.f32 %v1708, %v1680
      %v1710 = vadd.f32 %v1709, %v1685
      %v1711 = vadd.f32 %v1710, %v1688
      %v1712 = vadd.f32 %v1711, %v1693
      %v1713 = vadd.f32 %v1712, %v1696
      %v1714 = vadd.f32 %v1713, %v1701
      %v1715 = vsel %vm492, %v1704, 0.0
      %v1716 = vadd.f32 %v1714, %v1715
      %v1717 = vrot.slane %v1716, 4
      %v1718 = vadd.f32 %v1716, %v1717
      %v1719 = vrot.slane %v1718, 2
      %v1720 = vadd.f32 %v1718, %v1719
      %v1721 = vrot.slane %v1720, 1
      %v1722 = vadd.f32 %v1720, %v1721
      %v1723 = vmul.f32 %v1722, 0.012658228
      %v1724 = vsub.f32 %v1669, %v1723
      %v1725 = vsub.f32 %v1672, %v1723
      %v1726 = vsub.f32 %v1677, %v1723
      %v1727 = vsub.f32 %v1680, %v1723
      %v1728 = vsub.f32 %v1685, %v1723
      %v1729 = vsub.f32 %v1688, %v1723
      %v1730 = vsub.f32 %v1693, %v1723
      %v1731 = vsub.f32 %v1696, %v1723
      %v1732 = vsub.f32 %v1701, %v1723
      %v1733 = vsub.f32 %v1704, %v1723
      %v1734 = vmul.f32 %v1724, %v1724
      %v1735 = vmul.f32 %v1725, %v1725
      %v1736 = vmul.f32 %v1726, %v1726
      %v1737 = vmul.f32 %v1727, %v1727
      %v1738 = vmul.f32 %v1728, %v1728
      %v1739 = vmul.f32 %v1729, %v1729
      %v1740 = vmul.f32 %v1730, %v1730
      %v1741 = vmul.f32 %v1731, %v1731
      %v1742 = vmul.f32 %v1732, %v1732
      %v1743 = vmul.f32 %v1733, %v1733
      %v1744 = vadd.f32 %v1734, %v1735
      %v1745 = vadd.f32 %v1744, %v1736
      %v1746 = vadd.f32 %v1745, %v1737
      %v1747 = vadd.f32 %v1746, %v1738
      %v1748 = vadd.f32 %v1747, %v1739
      %v1749 = vadd.f32 %v1748, %v1740
      %v1750 = vadd.f32 %v1749, %v1741
      %v1751 = vadd.f32 %v1750, %v1742
      %v1752 = vsel %vm492, %v1743, 0.0
      %v1753 = vadd.f32 %v1751, %v1752
      %v1754 = vrot.slane %v1753, 4
      %v1755 = vadd.f32 %v1753, %v1754
      %v1756 = vrot.slane %v1755, 2
      %v1757 = vadd.f32 %v1755, %v1756
      %v1758 = vrot.slane %v1757, 1
      %v1759 = vadd.f32 %v1757, %v1758
      %v1760 = vmul.f32 %v1759, 0.012658228
      %v1761 = vadd.f32 %v1760, 1e-05
      %v1762 = vrsqrt.pop %v1761
      %v1763 = vmul.f32 %v1724, %v1762
      %v1764 = vmul.f32 %v1725, %v1762
      %v1765 = vmul.f32 %v1726, %v1762
      %v1766 = vmul.f32 %v1727, %v1762
      %v1767 = vmul.f32 %v1728, %v1762
      %v1768 = vmul.f32 %v1729, %v1762
      %v1769 = vmul.f32 %v1730, %v1762
      %v1770 = vmul.f32 %v1731, %v1762
      %v1771 = vmul.f32 %v1732, %v1762
      %v1772 = vmul.f32 %v1733, %v1762
      %v1773 = vld [vmem:[%s2] sm:$0x1]
      %v1775 = vlaneseq
      %v1776 = vshrl.u32 %v1775, 7
      %v1777 = vsub.s32 0, %v1776
      %v1778 = vrot.slane %v1773, %v1777
      %v1780 = vmul.f32 %v1763, %v1778
      %v1781 = vmul.f32 %v1764, %v1778
      %v1782 = vmul.f32 %v1765, %v1778
      %v1783 = vmul.f32 %v1766, %v1778
      %v1784 = vmul.f32 %v1767, %v1778
      %v1785 = vmul.f32 %v1768, %v1778
      %v1786 = vmul.f32 %v1769, %v1778
      %v1787 = vmul.f32 %v1770, %v1778
      %v1788 = vmul.f32 %v1771, %v1778
      %v1789 = vmul.f32 %v1772, %v1778
      %v1790 = vld [vmem:[%s3] sm:$0x1]
      %v1792 = vlaneseq
      %v1793 = vshrl.u32 %v1792, 7
      %v1794 = vsub.s32 0, %v1793
      %v1795 = vrot.slane %v1790, %v1794
      %v1797 = vadd.f32 %v1780, %v1795
      %v1798 = vadd.f32 %v1781, %v1795
      %v1799 = vadd.f32 %v1782, %v1795
      %v1800 = vadd.f32 %v1783, %v1795
      %v1801 = vadd.f32 %v1784, %v1795
      %v1802 = vadd.f32 %v1785, %v1795
      %v1803 = vadd.f32 %v1786, %v1795
      %v1804 = vadd.f32 %v1787, %v1795
      %v1805 = vadd.f32 %v1788, %v1795
      %v1806 = vadd.f32 %v1789, %v1795
      %v1807 = vmul.f32 %v1797, %v1797
      %v1808 = vmul.f32 %v1798, %v1798
      %v1809 = vmul.f32 %v1799, %v1799
      %v1810 = vmul.f32 %v1800, %v1800
      %v1811 = vmul.f32 %v1801, %v1801
      %v1812 = vmul.f32 %v1802, %v1802
      %v1813 = vmul.f32 %v1803, %v1803
      %v1814 = vmul.f32 %v1804, %v1804
      %v1815 = vmul.f32 %v1805, %v1805
      %v1816 = vmul.f32 %v1806, %v1806
      %v1817 = vmul.f32 %v1797, %v1807
      %v1818 = vmul.f32 %v1798, %v1808
      %v1819 = vmul.f32 %v1799, %v1809
      %v1820 = vmul.f32 %v1800, %v1810
      %v1821 = vmul.f32 %v1801, %v1811
      %v1822 = vmul.f32 %v1802, %v1812
      %v1823 = vmul.f32 %v1803, %v1813
      %v1824 = vmul.f32 %v1804, %v1814
      %v1825 = vmul.f32 %v1805, %v1815
      %v1826 = vmul.f32 %v1806, %v1816
      %v1827 = vmul.f32 %v1817, 0.044715
      %v1828 = vmul.f32 %v1818, 0.044715
      %v1829 = vmul.f32 %v1819, 0.044715
      %v1830 = vmul.f32 %v1820, 0.044715
      %v1831 = vmul.f32 %v1821, 0.044715
      %v1832 = vmul.f32 %v1822, 0.044715
      %v1833 = vmul.f32 %v1823, 0.044715
      %v1834 = vmul.f32 %v1824, 0.044715
      %v1835 = vmul.f32 %v1825, 0.044715
      %v1836 = vmul.f32 %v1826, 0.044715
      %v1837 = vadd.f32 %v1797, %v1827
      %v1838 = vadd.f32 %v1798, %v1828
      %v1839 = vadd.f32 %v1799, %v1829
      %v1840 = vadd.f32 %v1800, %v1830
      %v1841 = vadd.f32 %v1801, %v1831
      %v1842 = vadd.f32 %v1802, %v1832
      %v1843 = vadd.f32 %v1803, %v1833
      %v1844 = vadd.f32 %v1804, %v1834
      %v1845 = vadd.f32 %v1805, %v1835
      %v1846 = vadd.f32 %v1806, %v1836
      %v1847 = vmul.f32 %v1837, 0.7978846
      %v1848 = vmul.f32 %v1838, 0.7978846
      %v1849 = vmul.f32 %v1839, 0.7978846
      %v1850 = vmul.f32 %v1840, 0.7978846
      %v1851 = vmul.f32 %v1841, 0.7978846
      %v1852 = vmul.f32 %v1842, 0.7978846
      %v1853 = vmul.f32 %v1843, 0.7978846
      %v1854 = vmul.f32 %v1844, 0.7978846
      %v1855 = vmul.f32 %v1845, 0.7978846
      %v1856 = vmul.f32 %v1846, 0.7978846
      %v1857 = vtanh.pop %v1847
      %v1858 = vtanh.pop %v1848
      %v1859 = vtanh.pop %v1849
      %v1860 = vtanh.pop %v1850
      %v1861 = vtanh.pop %v1851
      %v1862 = vtanh.pop %v1852
      %v1863 = vtanh.pop %v1853
      %v1864 = vtanh.pop %v1854
      %v1865 = vtanh.pop %v1855
      %v1866 = vtanh.pop %v1856
      %v1867 = vadd.f32 %v1857, 1.0
      %v1868 = vadd.f32 %v1858, 1.0
      %v1869 = vadd.f32 %v1859, 1.0
      %v1870 = vadd.f32 %v1860, 1.0
      %v1871 = vadd.f32 %v1861, 1.0
      %v1872 = vadd.f32 %v1862, 1.0
      %v1873 = vadd.f32 %v1863, 1.0
      %v1874 = vadd.f32 %v1864, 1.0
      %v1875 = vadd.f32 %v1865, 1.0
      %v1876 = vadd.f32 %v1866, 1.0
      %v1877 = vmul.f32 %v1867, 0.5
      %v1878 = vmul.f32 %v1868, 0.5
      %v1879 = vmul.f32 %v1869, 0.5
      %v1880 = vmul.f32 %v1870, 0.5
      %v1881 = vmul.f32 %v1871, 0.5
      %v1882 = vmul.f32 %v1872, 0.5
      %v1883 = vmul.f32 %v1873, 0.5
      %v1884 = vmul.f32 %v1874, 0.5
      %v1885 = vmul.f32 %v1875, 0.5
      %v1886 = vmul.f32 %v1876, 0.5
      %v1887 = vmul.f32 %v1797, %v1877
      %v1888 = vmul.f32 %v1798, %v1878
      %v1889 = vmul.f32 %v1799, %v1879
      %v1890 = vmul.f32 %v1800, %v1880
      %v1891 = vmul.f32 %v1801, %v1881
      %v1892 = vmul.f32 %v1802, %v1882
      %v1893 = vmul.f32 %v1803, %v1883
      %v1894 = vmul.f32 %v1804, %v1884
      %v1895 = vmul.f32 %v1805, %v1885
      %v1896 = vmul.f32 %v1806, %v1886
      %1897 = vst [vmem:[#allocation2] sm:$0xff] %v1887
      %1898 = vst [vmem:[#allocation2 + $0x8] sm:$0xff] %v1888
      %1899 = vst [vmem:[#allocation2 + $0x10] sm:$0xff] %v1889
      %1900 = vst [vmem:[#allocation2 + $0x18] sm:$0xff] %v1890
      %1901 = vst [vmem:[#allocation2 + $0x20] sm:$0xff] %v1891
      %1902 = vst [vmem:[#allocation2 + $0x28] sm:$0xff] %v1892
      %1903 = vst [vmem:[#allocation2 + $0x30] sm:$0xff] %v1893
      %1904 = vst [vmem:[#allocation2 + $0x38] sm:$0xff] %v1894
      %1905 = vst [vmem:[#allocation2 + $0x40] sm:$0xff] %v1895
      %1906 = vst [vmem:[#allocation2 + $0x48] sm:$0x7f] %v1896
      %v1907 = vld [vmem:[#allocation2] ss:$2 sm:$0xff]
      %v1908 = vld [vmem:[%s686] ss:$2 sm:$0xff]
      %v1909 = vld [vmem:[%s688] ss:$2 sm:$0xff]
      %v1910 = vld [vmem:[%s690] ss:$2 sm:$0xff]
      %v1911 = vld [vmem:[%s692] ss:$2 sm:$0x7f]
      %v1912 = vpack.c.bf16 %v1908, %v1907
      %v1913 = vpack.c.bf16 %v1910, %v1909
      %v1914 = vpack.c.bf16 %v1911, %v1911
      %v1915 = vld [vmem:[%s4] sm:$0xf]
      %v1916 = vld [vmem:[%s4 + $0x4] sm:$0xf]
      %v1917 = vld [vmem:[%s4 + $0x8] sm:$0xf]
      %v1918 = vld [vmem:[%s4 + $0xc] sm:$0xf]
      %v1919 = vld [vmem:[%s4 + $0x10] sm:$0xf]
      %v1920 = vld [vmem:[%s4 + $0x14] sm:$0xf]
      %v1921 = vld [vmem:[%s4 + $0x18] sm:$0xf]
      %v1922 = vld [vmem:[%s4 + $0x1c] sm:$0xf]
      %v1923 = vld [vmem:[%s4 + $0x20] sm:$0xf]
      %v1924 = vld [vmem:[%s4 + $0x24] sm:$0xf]
      %v1925 = vld [vmem:[%s4 + $0x28] sm:$0xf]
      %v1926 = vld [vmem:[%s4 + $0x2c] sm:$0xf]
      %v1927 = vld [vmem:[%s4 + $0x30] sm:$0xf]
      %v1928 = vld [vmem:[%s4 + $0x34] sm:$0xf]
      %v1929 = vld [vmem:[%s4 + $0x38] sm:$0xf]
      %v1930 = vld [vmem:[%s4 + $0x3c] sm:$0xf]
      %v1931 = vld [vmem:[%s713] ss:$2 sm:$0xff]
      %v1932 = vld [vmem:[%s715] ss:$2 sm:$0xff]
      %v1933 = vld [vmem:[%s717] ss:$2 sm:$0xff]
      %v1934 = vld [vmem:[%s719] ss:$2 sm:$0xff]
      %v1935 = vld [vmem:[%s721] ss:$2 sm:$0x7f]
      %v1936 = vpack.c.bf16 %v1932, %v1931
      %v1937 = vpack.c.bf16 %v1934, %v1933
      %v1938 = vpack.c.bf16 %v1935, %v1935
      %v1939 = vld [vmem:[%s726] sm:$0xf]
      %v1940 = vld [vmem:[%s726 + $0x4] sm:$0xf]
      %v1941 = vld [vmem:[%s726 + $0x8] sm:$0xf]
      %v1942 = vld [vmem:[%s726 + $0xc] sm:$0xf]
      %v1943 = vld [vmem:[%s726 + $0x10] sm:$0xf]
      %v1944 = vld [vmem:[%s726 + $0x14] sm:$0xf]
      %v1945 = vld [vmem:[%s726 + $0x18] sm:$0xf]
      %v1946 = vld [vmem:[%s726 + $0x1c] sm:$0xf]
      %v1947 = vld [vmem:[%s726 + $0x20] sm:$0xf]
      %v1948 = vld [vmem:[%s726 + $0x24] sm:$0xf]
      %v1949 = vld [vmem:[%s726 + $0x28] sm:$0xf]
      %v1950 = vld [vmem:[%s726 + $0x2c] sm:$0xf]
      %v1951 = vld [vmem:[%s726 + $0x30] sm:$0xf]
      %v1952 = vld [vmem:[%s726 + $0x34] sm:$0xf]
      %v1953 = vld [vmem:[%s726 + $0x38] sm:$0xf]
      %v1954 = vld [vmem:[%s726 + $0x3c] sm:$0xf]
      %v1971 = vunpack.c.l.b16 %v1939
      %v1972 = vunpack.c.l.b16 %v1940
      %v1973 = vunpack.c.l.b16 %v1941
      %v1974 = vunpack.c.l.b16 %v1942
      %v1975 = vunpack.c.l.b16 %v1943
      %v1976 = vunpack.c.l.b16 %v1944
      %v1977 = vunpack.c.l.b16 %v1945
      %v1978 = vunpack.c.l.b16 %v1946
      %v1979 = vunpack.c.l.b16 %v1947
      %v1980 = vunpack.c.l.b16 %v1948
      %v1981 = vunpack.c.l.b16 %v1949
      %v1982 = vunpack.c.l.b16 %v1950
      %v1983 = vunpack.c.l.b16 %v1951
      %v1984 = vunpack.c.l.b16 %v1952
      %v1985 = vunpack.c.l.b16 %v1953
      %v1986 = vunpack.c.l.b16 %v1954
      %v1987 = vpack.c.b16 %v1972, %v1971
      %v1988 = vpack.c.b16 %v1974, %v1973
      %v1989 = vpack.c.b16 %v1976, %v1975
      %v1990 = vpack.c.b16 %v1978, %v1977
      %v1991 = vpack.c.b16 %v1980, %v1979
      %v1992 = vpack.c.b16 %v1982, %v1981
      %v1993 = vpack.c.b16 %v1984, %v1983
      %v1994 = vpack.c.b16 %v1986, %v1985
      %2003 = vmatprep.subr.bf16.mxu0 0
      %2004 = vmatpush1.bf16.msra.mxu0 %v1987
      %2005 = vmatprep.subr.bf16.mxu0 0
      %2006 = vmatpush1.bf16.msra.mxu0 %v1988
      %2007 = vmatprep.subr.bf16.mxu0 0
      %2008 = vmatpush1.bf16.msra.mxu0 %v1989
      %2009 = vmatprep.subr.bf16.mxu0 0
      %2010 = vmatpush1.bf16.msra.mxu0 %v1990
      %2011 = vmatprep.subr.bf16.mxu0 0
      %2012 = vmatpush1.bf16.msra.mxu0 %v1991
      %2013 = vmatprep.subr.bf16.mxu0 0
      %2014 = vmatpush1.bf16.msra.mxu0 %v1992
      %2015 = vmatprep.subr.bf16.mxu0 0
      %2016 = vmatpush1.bf16.msra.mxu0 %v1993
      %2017 = vmatprep.subr.bf16.mxu0 0
      %2018 = vmatpush1.bf16.msra.mxu0 %v1994
      %2019 = vmatprep.subr.bf16.mxu0 0
      %2020 = vmatpush1.bf16.msra.mxu0 0
      %2021 = vmatprep.subr.bf16.mxu0 0
      %2022 = vmatpush1.bf16.msra.mxu0 0
      %2023 = vmatprep.subr.bf16.mxu0 0
      %2024 = vmatpush1.bf16.msra.mxu0 0
      %2025 = vmatprep.subr.bf16.mxu0 0
      %2026 = vmatpush1.bf16.msra.mxu0 0
      %2027 = vmatprep.subr.bf16.mxu0 0
      %2028 = vmatpush1.bf16.msra.mxu0 0
      %2029 = vmatprep.subr.bf16.mxu0 0
      %2030 = vmatpush1.bf16.msra.mxu0 0
      %2031 = vmatprep.subr.bf16.mxu0 0
      %2032 = vmatpush1.bf16.msra.mxu0 0
      %2033 = vmatprep.subr.bf16.mxu0 0
      %2034 = vmatpush1.bf16.msra.mxu0 0
      %2035 = vmatprep.mubr.bf16.mxu0 0
      %2036 = vmatmul.mubr.bf16.gmra.mrb[0].mxu0 %v1936
      %v2037 = vpop.f32.mrb[0].mxu0
      %v2038 = vadd.f32 0.0, %v2037
      %v2039 = vpop.f32.mrb[0].mxu0
      %v2040 = vpop.f32.mrb[0].mxu0
      %v2041 = vadd.f32 0.0, %v2040
      %v2042 = vpop.f32.mrb[0].mxu0
      %2043 = vmatprep.mubr.bf16.mxu0 0
      %2044 = vmatmul.mubr.bf16.gmra.mrb[0].mxu0 %v1937
      %v2045 = vpop.f32.mrb[0].mxu0
      %v2046 = vadd.f32 0.0, %v2045
      %v2047 = vpop.f32.mrb[0].mxu0
      %v2048 = vpop.f32.mrb[0].mxu0
      %v2049 = vadd.f32 0.0, %v2048
      %v2050 = vpop.f32.mrb[0].mxu0
      %2051 = vmatprep.mubr.bf16.mxu0 0
      %2052 = vmatmul.mubr.bf16.gmra.mrb[0].mxu0 %v1938
      %v2053 = vpop.f32.mrb[0].mxu0
      %v2054 = vadd.f32 0.0, %v2053
      %v2055 = vpop.f32.mrb[0].mxu0
      %v2056 = vpop.f32.mrb[0].mxu0
      %v2057 = vpop.f32.mrb[0].mxu0
      %2058 = vdwg.mxu0
      %v2075 = vunpack.c.l.b16 %v1915
      %v2076 = vunpack.c.l.b16 %v1916
      %v2077 = vunpack.c.l.b16 %v1917
      %v2078 = vunpack.c.l.b16 %v1918
      %v2079 = vunpack.c.l.b16 %v1919
      %v2080 = vunpack.c.l.b16 %v1920
      %v2081 = vunpack.c.l.b16 %v1921
      %v2082 = vunpack.c.l.b16 %v1922
      %v2083 = vunpack.c.l.b16 %v1923
      %v2084 = vunpack.c.l.b16 %v1924
      %v2085 = vunpack.c.l.b16 %v1925
      %v2086 = vunpack.c.l.b16 %v1926
      %v2087 = vunpack.c.l.b16 %v1927
      %v2088 = vunpack.c.l.b16 %v1928
      %v2089 = vunpack.c.l.b16 %v1929
      %v2090 = vunpack.c.l.b16 %v1930
      %v2091 = vpack.c.b16 %v2076, %v2075
      %v2092 = vpack.c.b16 %v2078, %v2077
      %v2093 = vpack.c.b16 %v2080, %v2079
      %v2094 = vpack.c.b16 %v2082, %v2081
      %v2095 = vpack.c.b16 %v2084, %v2083
      %v2096 = vpack.c.b16 %v2086, %v2085
      %v2097 = vpack.c.b16 %v2088, %v2087
      %v2098 = vpack.c.b16 %v2090, %v2089
      %2107 = vmatprep.subr.bf16.mxu0 0
      %2108 = vmatpush1.bf16.msra.mxu0 %v2091
      %2109 = vmatprep.subr.bf16.mxu0 0
      %2110 = vmatpush1.bf16.msra.mxu0 %v2092
      %2111 = vmatprep.subr.bf16.mxu0 0
      %2112 = vmatpush1.bf16.msra.mxu0 %v2093
      %2113 = vmatprep.subr.bf16.mxu0 0
      %2114 = vmatpush1.bf16.msra.mxu0 %v2094
      %2115 = vmatprep.subr.bf16.mxu0 0
      %2116 = vmatpush1.bf16.msra.mxu0 %v2095
      %2117 = vmatprep.subr.bf16.mxu0 0
      %2118 = vmatpush1.bf16.msra.mxu0 %v2096
      %2119 = vmatprep.subr.bf16.mxu0 0
      %2120 = vmatpush1.bf16.msra.mxu0 %v2097
      %2121 = vmatprep.subr.bf16.mxu0 0
      %2122 = vmatpush1.bf16.msra.mxu0 %v2098
      %2123 = vmatprep.subr.bf16.mxu0 0
      %2124 = vmatpush1.bf16.msra.mxu0 0
      %2125 = vmatprep.subr.bf16.mxu0 0
      %2126 = vmatpush1.bf16.msra.mxu0 0
      %2127 = vmatprep.subr.bf16.mxu0 0
      %2128 = vmatpush1.bf16.msra.mxu0 0
      %2129 = vmatprep.subr.bf16.mxu0 0
      %2130 = vmatpush1.bf16.msra.mxu0 0
      %2131 = vmatprep.subr.bf16.mxu0 0
      %2132 = vmatpush1.bf16.msra.mxu0 0
      %2133 = vmatprep.subr.bf16.mxu0 0
      %2134 = vmatpush1.bf16.msra.mxu0 0
      %2135 = vmatprep.subr.bf16.mxu0 0
      %2136 = vmatpush1.bf16.msra.mxu0 0
      %2137 = vmatprep.subr.bf16.mxu0 0
      %2138 = vmatpush1.bf16.msra.mxu0 0
      %2139 = vmatprep.mubr.bf16.mxu0 0
      %2140 = vmatmul.mubr.bf16.gmra.mrb[0].mxu0 %v1912
      %v2141 = vpop.f32.mrb[0].mxu0
      %v2142 = vadd.f32 %v2038, %v2141
      %v2143 = vpop.f32.mrb[0].mxu0
      %v2144 = vpop.f32.mrb[0].mxu0
      %v2145 = vadd.f32 %v2041, %v2144
      %v2146 = vpop.f32.mrb[0].mxu0
      %2147 = vmatprep.mubr.bf16.mxu0 0
      %2148 = vmatmul.mubr.bf16.gmra.mrb[0].mxu0 %v1913
      %v2149 = vpop.f32.mrb[0].mxu0
      %v2150 = vadd.f32 %v2046, %v2149
      %v2151 = vpop.f32.mrb[0].mxu0
      %v2152 = vpop.f32.mrb[0].mxu0
      %v2153 = vadd.f32 %v2049, %v2152
      %v2154 = vpop.f32.mrb[0].mxu0
      %2155 = vmatprep.mubr.bf16.mxu0 0
      %2156 = vmatmul.mubr.bf16.gmra.mrb[0].mxu0 %v1914
      %v2157 = vpop.f32.mrb[0].mxu0
      %v2158 = vadd.f32 %v2054, %v2157
      %v2159 = vpop.f32.mrb[0].mxu0
      %v2160 = vpop.f32.mrb[0].mxu0
      %v2161 = vpop.f32.mrb[0].mxu0
      %2162 = vdwg.mxu0
      %v2163 = vld [vmem:[%s951] ss:$2 sm:$0xff]
      %v2164 = vld [vmem:[%s953] ss:$2 sm:$0xff]
      %v2165 = vld [vmem:[%s955] ss:$2 sm:$0xff]
      %v2166 = vld [vmem:[%s957] ss:$2 sm:$0xff]
      %v2167 = vld [vmem:[%s959] ss:$2 sm:$0x7f]
      %v2168 = vpack.c.bf16 %v2164, %v2163
      %v2169 = vpack.c.bf16 %v2166, %v2165
      %v2170 = vpack.c.bf16 %v2167, %v2167
      %v2171 = vld [vmem:[%s964] sm:$0xf]
      %v2172 = vld [vmem:[%s964 + $0x4] sm:$0xf]
      %v2173 = vld [vmem:[%s964 + $0x8] sm:$0xf]
      %v2174 = vld [vmem:[%s964 + $0xc] sm:$0xf]
      %v2175 = vld [vmem:[%s964 + $0x10] sm:$0xf]
      %v2176 = vld [vmem:[%s964 + $0x14] sm:$0xf]
      %v2177 = vld [vmem:[%s964 + $0x18] sm:$0xf]
      %v2178 = vld [vmem:[%s964 + $0x1c] sm:$0xf]
      %v2179 = vld [vmem:[%s964 + $0x20] sm:$0xf]
      %v2180 = vld [vmem:[%s964 + $0x24] sm:$0xf]
      %v2181 = vld [vmem:[%s964 + $0x28] sm:$0xf]
      %v2182 = vld [vmem:[%s964 + $0x2c] sm:$0xf]
      %v2183 = vld [vmem:[%s964 + $0x30] sm:$0xf]
      %v2184 = vld [vmem:[%s964 + $0x34] sm:$0xf]
      %v2185 = vld [vmem:[%s964 + $0x38] sm:$0xf]
      %v2186 = vld [vmem:[%s964 + $0x3c] sm:$0xf]
      %v2203 = vunpack.c.l.b16 %v2171
      %v2204 = vunpack.c.l.b16 %v2172
      %v2205 = vunpack.c.l.b16 %v2173
      %v2206 = vunpack.c.l.b16 %v2174
      %v2207 = vunpack.c.l.b16 %v2175
      %v2208 = vunpack.c.l.b16 %v2176
      %v2209 = vunpack.c.l.b16 %v2177
      %v2210 = vunpack.c.l.b16 %v2178
      %v2211 = vunpack.c.l.b16 %v2179
      %v2212 = vunpack.c.l.b16 %v2180
      %v2213 = vunpack.c.l.b16 %v2181
      %v2214 = vunpack.c.l.b16 %v2182
      %v2215 = vunpack.c.l.b16 %v2183
      %v2216 = vunpack.c.l.b16 %v2184
      %v2217 = vunpack.c.l.b16 %v2185
      %v2218 = vunpack.c.l.b16 %v2186
      %v2219 = vpack.c.b16 %v2204, %v2203
      %v2220 = vpack.c.b16 %v2206, %v2205
      %v2221 = vpack.c.b16 %v2208, %v2207
      %v2222 = vpack.c.b16 %v2210, %v2209
      %v2223 = vpack.c.b16 %v2212, %v2211
      %v2224 = vpack.c.b16 %v2214, %v2213
      %v2225 = vpack.c.b16 %v2216, %v2215
      %v2226 = vpack.c.b16 %v2218, %v2217
      %2235 = vmatprep.subr.bf16.mxu0 0
      %2236 = vmatpush1.bf16.msra.mxu0 %v2219
      %2237 = vmatprep.subr.bf16.mxu0 0
      %2238 = vmatpush1.bf16.msra.mxu0 %v2220
      %2239 = vmatprep.subr.bf16.mxu0 0
      %2240 = vmatpush1.bf16.msra.mxu0 %v2221
      %2241 = vmatprep.subr.bf16.mxu0 0
      %2242 = vmatpush1.bf16.msra.mxu0 %v2222
      %2243 = vmatprep.subr.bf16.mxu0 0
      %2244 = vmatpush1.bf16.msra.mxu0 %v2223
      %2245 = vmatprep.subr.bf16.mxu0 0
      %2246 = vmatpush1.bf16.msra.mxu0 %v2224
      %2247 = vmatprep.subr.bf16.mxu0 0
      %2248 = vmatpush1.bf16.msra.mxu0 %v2225
      %2249 = vmatprep.subr.bf16.mxu0 0
      %2250 = vmatpush1.bf16.msra.mxu0 %v2226
      %2251 = vmatprep.subr.bf16.mxu0 0
      %2252 = vmatpush1.bf16.msra.mxu0 0
      %2253 = vmatprep.subr.bf16.mxu0 0
      %2254 = vmatpush1.bf16.msra.mxu0 0
      %2255 = vmatprep.subr.bf16.mxu0 0
      %2256 = vmatpush1.bf16.msra.mxu0 0
      %2257 = vmatprep.subr.bf16.mxu0 0
      %2258 = vmatpush1.bf16.msra.mxu0 0
      %2259 = vmatprep.subr.bf16.mxu0 0
      %2260 = vmatpush1.bf16.msra.mxu0 0
      %2261 = vmatprep.subr.bf16.mxu0 0
      %2262 = vmatpush1.bf16.msra.mxu0 0
      %2263 = vmatprep.subr.bf16.mxu0 0
      %2264 = vmatpush1.bf16.msra.mxu0 0
      %2265 = vmatprep.subr.bf16.mxu0 0
      %2266 = vmatpush1.bf16.msra.mxu0 0
      %2267 = vmatprep.mubr.bf16.mxu0 0
      %2268 = vmatmul.mubr.bf16.gmra.mrb[0].mxu0 %v2168
      %v2269 = vpop.f32.mrb[0].mxu0
      %v2270 = vadd.f32 0.0, %v2269
      %v2271 = vpop.f32.mrb[0].mxu0
      %v2272 = vpop.f32.mrb[0].mxu0
      %v2273 = vadd.f32 0.0, %v2272
      %v2274 = vpop.f32.mrb[0].mxu0
      %2275 = vmatprep.mubr.bf16.mxu0 0
      %2276 = vmatmul.mubr.bf16.gmra.mrb[0].mxu0 %v2169
      %v2277 = vpop.f32.mrb[0].mxu0
      %v2278 = vadd.f32 0.0, %v2277
      %v2279 = vpop.f32.mrb[0].mxu0
      %v2280 = vpop.f32.mrb[0].mxu0
      %v2281 = vadd.f32 0.0, %v2280
      %v2282 = vpop.f32.mrb[0].mxu0
      %2283 = vmatprep.mubr.bf16.mxu0 0
      %2284 = vmatmul.mubr.bf16.gmra.mrb[0].mxu0 %v2170
      %v2285 = vpop.f32.mrb[0].mxu0
      %v2286 = vadd.f32 0.0, %v2285
      %v2287 = vpop.f32.mrb[0].mxu0
      %v2288 = vpop.f32.mrb[0].mxu0
      %v2289 = vpop.f32.mrb[0].mxu0
      %2290 = vdwg.mxu0
      %v2291 = vadd.f32 %v2142, %v2270
      %v2292 = vadd.f32 %v2145, %v2273
      %v2293 = vadd.f32 %v2150, %v2278
      %v2294 = vadd.f32 %v2153, %v2281
      %v2295 = vadd.f32 %v2158, %v2286
      %v2296 = vmul.f32 %v2291, %v2291
      %v2297 = vmul.f32 %v2292, %v2292
      %v2298 = vmul.f32 %v2293, %v2293
      %v2299 = vmul.f32 %v2294, %v2294
      %v2300 = vmul.f32 %v2295, %v2295
      %v2301 = vmul.f32 %v2291, %v2296
      %v2302 = vmul.f32 %v2292, %v2297
      %v2303 = vmul.f32 %v2293, %v2298
      %v2304 = vmul.f32 %v2294, %v2299
      %v2305 = vmul.f32 %v2295, %v2300
      %v2306 = vmul.f32 %v2301, 0.044715
      %v2307 = vmul.f32 %v2302, 0.044715
      %v2308 = vmul.f32 %v2303, 0.044715
      %v2309 = vmul.f32 %v2304, 0.044715
      %v2310 = vmul.f32 %v2305, 0.044715
      %v2311 = vadd.f32 %v2291, %v2306
      %v2312 = vadd.f32 %v2292, %v2307
      %v2313 = vadd.f32 %v2293, %v2308
      %v2314 = vadd.f32 %v2294, %v2309
      %v2315 = vadd.f32 %v2295, %v2310
      %v2316 = vmul.f32 %v2311, 0.7978846
      %v2317 = vmul.f32 %v2312, 0.7978846
      %v2318 = vmul.f32 %v2313, 0.7978846
      %v2319 = vmul.f32 %v2314, 0.7978846
      %v2320 = vmul.f32 %v2315, 0.7978846
      %v2321 = vtanh.pop %v2316
      %v2322 = vtanh.pop %v2317
      %v2323 = vtanh.pop %v2318
      %v2324 = vtanh.pop %v2319
      %v2325 = vtanh.pop %v2320
      %v2326 = vadd.f32 %v2321, 1.0
      %v2327 = vadd.f32 %v2322, 1.0
      %v2328 = vadd.f32 %v2323, 1.0
      %v2329 = vadd.f32 %v2324, 1.0
      %v2330 = vadd.f32 %v2325, 1.0
      %v2331 = vmul.f32 %v2326, 0.5
      %v2332 = vmul.f32 %v2327, 0.5
      %v2333 = vmul.f32 %v2328, 0.5
      %v2334 = vmul.f32 %v2329, 0.5
      %v2335 = vmul.f32 %v2330, 0.5
      %v2336 = vmul.f32 %v2291, %v2331
      %v2337 = vmul.f32 %v2292, %v2332
      %v2338 = vmul.f32 %v2293, %v2333
      %v2339 = vmul.f32 %v2294, %v2334
      %v2340 = vmul.f32 %v2295, %v2335
      %2341 = vst [vmem:[#allocation3] sm:$0xff] %v2336
      %2342 = vst [vmem:[#allocation3 + $0x8] sm:$0xff] %v2337
      %2343 = vst [vmem:[#allocation3 + $0x10] sm:$0xff] %v2338
      %2344 = vst [vmem:[#allocation3 + $0x18] sm:$0xff] %v2339
      %2345 = vst [vmem:[#allocation3 + $0x20] sm:$0x7f] %v2340
      %v2346 = vld [vmem:[#allocation3] ss:$2 sm:$0xff]
      %v2347 = vld [vmem:[%s1141] ss:$2 sm:$0xff]
      %v2348 = vld [vmem:[%s1143] ss:$2 sm:$0x7]
      %v2349 = vpack.c.bf16 %v2347, %v2346
      %v2350 = vpack.c.bf16 %v2348, %v2348
      %v2351 = vld [vmem:[%s5] sm:$0xf]
      %v2352 = vld [vmem:[%s5 + $0x4] sm:$0xf]
      %v2353 = vld [vmem:[%s5 + $0x8] sm:$0xf]
      %v2354 = vld [vmem:[%s5 + $0xc] sm:$0xf]
      %v2355 = vld [vmem:[%s5 + $0x10] sm:$0xf]
      %v2356 = vld [vmem:[%s5 + $0x14] sm:$0xf]
      %v2357 = vld [vmem:[%s5 + $0x18] sm:$0xf]
      %v2358 = vld [vmem:[%s5 + $0x1c] sm:$0xf]
      %v2359 = vld [vmem:[%s5 + $0x20] sm:$0xf]
      %v2360 = vld [vmem:[%s5 + $0x24] sm:$0xf]
      %v2361 = vld [vmem:[%s5 + $0x28] sm:$0xf]
      %v2362 = vld [vmem:[%s5 + $0x2c] sm:$0xf]
      %v2363 = vld [vmem:[%s5 + $0x30] sm:$0xf]
      %v2364 = vld [vmem:[%s5 + $0x34] sm:$0xf]
      %v2365 = vld [vmem:[%s5 + $0x38] sm:$0xf]
      %v2366 = vld [vmem:[%s5 + $0x3c] sm:$0xf]
      %v2367 = vld [vmem:[%s1163] ss:$2 sm:$0xff]
      %v2368 = vld [vmem:[%s1165] ss:$2 sm:$0xff]
      %v2369 = vld [vmem:[%s1167] ss:$2 sm:$0x7]
      %v2370 = vpack.c.bf16 %v2368, %v2367
      %v2371 = vpack.c.bf16 %v2369, %v2369
      %v2372 = vld [vmem:[%s1171] sm:$0xf]
      %v2373 = vld [vmem:[%s1171 + $0x4] sm:$0xf]
      %v2374 = vld [vmem:[%s1171 + $0x8] sm:$0xf]
      %v2375 = vld [vmem:[%s1171 + $0xc] sm:$0xf]
      %v2376 = vld [vmem:[%s1171 + $0x10] sm:$0xf]
      %v2377 = vld [vmem:[%s1171 + $0x14] sm:$0xf]
      %v2378 = vld [vmem:[%s1171 + $0x18] sm:$0xf]
      %v2379 = vld [vmem:[%s1171 + $0x1c] sm:$0xf]
      %v2380 = vld [vmem:[%s1171 + $0x20] sm:$0xf]
      %v2381 = vld [vmem:[%s1171 + $0x24] sm:$0xf]
      %v2382 = vld [vmem:[%s1171 + $0x28] sm:$0xf]
      %v2383 = vld [vmem:[%s1171 + $0x2c] sm:$0xf]
      %v2384 = vld [vmem:[%s1171 + $0x30] sm:$0xf]
      %v2385 = vld [vmem:[%s1171 + $0x34] sm:$0xf]
      %v2386 = vld [vmem:[%s1171 + $0x38] sm:$0xf]
      %v2387 = vld [vmem:[%s1171 + $0x3c] sm:$0xf]
      %v2404 = vunpack.c.l.b16 %v2372
      %v2405 = vunpack.c.l.b16 %v2373
      %v2406 = vunpack.c.l.b16 %v2374
      %v2407 = vunpack.c.l.b16 %v2375
      %v2408 = vunpack.c.l.b16 %v2376
      %v2409 = vunpack.c.l.b16 %v2377
      %v2410 = vunpack.c.l.b16 %v2378
      %v2411 = vunpack.c.l.b16 %v2379
      %v2412 = vunpack.c.l.b16 %v2380
      %v2413 = vunpack.c.l.b16 %v2381
      %v2414 = vunpack.c.l.b16 %v2382
      %v2415 = vunpack.c.l.b16 %v2383
      %v2416 = vunpack.c.l.b16 %v2384
      %v2417 = vunpack.c.l.b16 %v2385
      %v2418 = vunpack.c.l.b16 %v2386
      %v2419 = vunpack.c.l.b16 %v2387
      %v2420 = vpack.c.b16 %v2405, %v2404
      %v2421 = vpack.c.b16 %v2407, %v2406
      %v2422 = vpack.c.b16 %v2409, %v2408
      %v2423 = vpack.c.b16 %v2411, %v2410
      %v2424 = vpack.c.b16 %v2413, %v2412
      %v2425 = vpack.c.b16 %v2415, %v2414
      %v2426 = vpack.c.b16 %v2417, %v2416
      %v2427 = vpack.c.b16 %v2419, %v2418
      %2436 = vmatprep.subr.bf16.mxu0 0
      %2437 = vmatpush1.bf16.msra.mxu0 %v2420
      %2438 = vmatprep.subr.bf16.mxu0 0
      %2439 = vmatpush1.bf16.msra.mxu0 %v2421
      %2440 = vmatprep.subr.bf16.mxu0 0
      %2441 = vmatpush1.bf16.msra.mxu0 %v2422
      %2442 = vmatprep.subr.bf16.mxu0 0
      %2443 = vmatpush1.bf16.msra.mxu0 %v2423
      %2444 = vmatprep.subr.bf16.mxu0 0
      %2445 = vmatpush1.bf16.msra.mxu0 %v2424
      %2446 = vmatprep.subr.bf16.mxu0 0
      %2447 = vmatpush1.bf16.msra.mxu0 %v2425
      %2448 = vmatprep.subr.bf16.mxu0 0
      %2449 = vmatpush1.bf16.msra.mxu0 %v2426
      %2450 = vmatprep.subr.bf16.mxu0 0
      %2451 = vmatpush1.bf16.msra.mxu0 %v2427
      %2452 = vmatprep.subr.bf16.mxu0 0
      %2453 = vmatpush1.bf16.msra.mxu0 0
      %2454 = vmatprep.subr.bf16.mxu0 0
      %2455 = vmatpush1.bf16.msra.mxu0 0
      %2456 = vmatprep.subr.bf16.mxu0 0
      %2457 = vmatpush1.bf16.msra.mxu0 0
      %2458 = vmatprep.subr.bf16.mxu0 0
      %2459 = vmatpush1.bf16.msra.mxu0 0
      %2460 = vmatprep.subr.bf16.mxu0 0
      %2461 = vmatpush1.bf16.msra.mxu0 0
      %2462 = vmatprep.subr.bf16.mxu0 0
      %2463 = vmatpush1.bf16.msra.mxu0 0
      %2464 = vmatprep.subr.bf16.mxu0 0
      %2465 = vmatpush1.bf16.msra.mxu0 0
      %2466 = vmatprep.subr.bf16.mxu0 0
      %2467 = vmatpush1.bf16.msra.mxu0 0
      %2468 = vmatprep.mubr.bf16.mxu0 0
      %2469 = vmatmul.mubr.bf16.gmra.mrb[0].mxu0 %v2370
      %v2470 = vpop.f32.mrb[0].mxu0
      %v2471 = vadd.f32 0.0, %v2470
      %v2472 = vpop.f32.mrb[0].mxu0
      %v2473 = vpop.f32.mrb[0].mxu0
      %v2474 = vadd.f32 0.0, %v2473
      %v2475 = vpop.f32.mrb[0].mxu0
      %2476 = vmatprep.mubr.bf16.mxu0 0
      %2477 = vmatmul.mubr.bf16.gmra.mrb[0].mxu0 %v2371
      %v2478 = vpop.f32.mrb[0].mxu0
      %v2479 = vadd.f32 0.0, %v2478
      %v2480 = vpop.f32.mrb[0].mxu0
      %v2481 = vpop.f32.mrb[0].mxu0
      %v2482 = vpop.f32.mrb[0].mxu0
      %2483 = vdwg.mxu0
      %v2500 = vunpack.c.l.b16 %v2351
      %v2501 = vunpack.c.l.b16 %v2352
      %v2502 = vunpack.c.l.b16 %v2353
      %v2503 = vunpack.c.l.b16 %v2354
      %v2504 = vunpack.c.l.b16 %v2355
      %v2505 = vunpack.c.l.b16 %v2356
      %v2506 = vunpack.c.l.b16 %v2357
      %v2507 = vunpack.c.l.b16 %v2358
      %v2508 = vunpack.c.l.b16 %v2359
      %v2509 = vunpack.c.l.b16 %v2360
      %v2510 = vunpack.c.l.b16 %v2361
      %v2511 = vunpack.c.l.b16 %v2362
      %v2512 = vunpack.c.l.b16 %v2363
      %v2513 = vunpack.c.l.b16 %v2364
      %v2514 = vunpack.c.l.b16 %v2365
      %v2515 = vunpack.c.l.b16 %v2366
      %v2516 = vpack.c.b16 %v2501, %v2500
      %v2517 = vpack.c.b16 %v2503, %v2502
      %v2518 = vpack.c.b16 %v2505, %v2504
      %v2519 = vpack.c.b16 %v2507, %v2506
      %v2520 = vpack.c.b16 %v2509, %v2508
      %v2521 = vpack.c.b16 %v2511, %v2510
      %v2522 = vpack.c.b16 %v2513, %v2512
      %v2523 = vpack.c.b16 %v2515, %v2514
      %2532 = vmatprep.subr.bf16.mxu0 0
      %2533 = vmatpush1.bf16.msra.mxu0 %v2516
      %2534 = vmatprep.subr.bf16.mxu0 0
      %2535 = vmatpush1.bf16.msra.mxu0 %v2517
      %2536 = vmatprep.subr.bf16.mxu0 0
      %2537 = vmatpush1.bf16.msra.mxu0 %v2518
      %2538 = vmatprep.subr.bf16.mxu0 0
      %2539 = vmatpush1.bf16.msra.mxu0 %v2519
      %2540 = vmatprep.subr.bf16.mxu0 0
      %2541 = vmatpush1.bf16.msra.mxu0 %v2520
      %2542 = vmatprep.subr.bf16.mxu0 0
      %2543 = vmatpush1.bf16.msra.mxu0 %v2521
      %2544 = vmatprep.subr.bf16.mxu0 0
      %2545 = vmatpush1.bf16.msra.mxu0 %v2522
      %2546 = vmatprep.subr.bf16.mxu0 0
      %2547 = vmatpush1.bf16.msra.mxu0 %v2523
      %2548 = vmatprep.subr.bf16.mxu0 0
      %2549 = vmatpush1.bf16.msra.mxu0 0
      %2550 = vmatprep.subr.bf16.mxu0 0
      %2551 = vmatpush1.bf16.msra.mxu0 0
      %2552 = vmatprep.subr.bf16.mxu0 0
      %2553 = vmatpush1.bf16.msra.mxu0 0
      %2554 = vmatprep.subr.bf16.mxu0 0
      %2555 = vmatpush1.bf16.msra.mxu0 0
      %2556 = vmatprep.subr.bf16.mxu0 0
      %2557 = vmatpush1.bf16.msra.mxu0 0
      %2558 = vmatprep.subr.bf16.mxu0 0
      %2559 = vmatpush1.bf16.msra.mxu0 0
      %2560 = vmatprep.subr.bf16.mxu0 0
      %2561 = vmatpush1.bf16.msra.mxu0 0
      %2562 = vmatprep.subr.bf16.mxu0 0
      %2563 = vmatpush1.bf16.msra.mxu0 0
      %2564 = vmatprep.mubr.bf16.mxu0 0
      %2565 = vmatmul.mubr.bf16.gmra.mrb[0].mxu0 %v2349
      %v2566 = vpop.f32.mrb[0].mxu0
      %v2567 = vadd.f32 %v2471, %v2566
      %v2568 = vpop.f32.mrb[0].mxu0
      %v2569 = vpop.f32.mrb[0].mxu0
      %v2570 = vadd.f32 %v2474, %v2569
      %v2571 = vpop.f32.mrb[0].mxu0
      %2572 = vmatprep.mubr.bf16.mxu0 0
      %2573 = vmatmul.mubr.bf16.gmra.mrb[0].mxu0 %v2350
      %v2574 = vpop.f32.mrb[0].mxu0
      %v2575 = vadd.f32 %v2479, %v2574
      %v2576 = vpop.f32.mrb[0].mxu0
      %v2577 = vpop.f32.mrb[0].mxu0
      %v2578 = vpop.f32.mrb[0].mxu0
      %2579 = vdwg.mxu0
      %v2580 = vmul.f32 %v2567, %v2567
      %v2581 = vmul.f32 %v2570, %v2570
      %v2582 = vmul.f32 %v2575, %v2575
      %v2583 = vmul.f32 %v2567, %v2580
      %v2584 = vmul.f32 %v2570, %v2581
      %v2585 = vmul.f32 %v2575, %v2582
      %v2586 = vmul.f32 %v2583, 0.044715
      %v2587 = vmul.f32 %v2584, 0.044715
      %v2588 = vmul.f32 %v2585, 0.044715
      %v2589 = vadd.f32 %v2567, %v2586
      %v2590 = vadd.f32 %v2570, %v2587
      %v2591 = vadd.f32 %v2575, %v2588
      %v2592 = vmul.f32 %v2589, 0.7978846
      %v2593 = vmul.f32 %v2590, 0.7978846
      %v2594 = vmul.f32 %v2591, 0.7978846
      %v2595 = vtanh.pop %v2592
      %v2596 = vtanh.pop %v2593
      %v2597 = vtanh.pop %v2594
      %v2598 = vadd.f32 %v2595, 1.0
      %v2599 = vadd.f32 %v2596, 1.0
      %v2600 = vadd.f32 %v2597, 1.0
      %v2601 = vmul.f32 %v2598, 0.5
      %v2602 = vmul.f32 %v2599, 0.5
      %v2603 = vmul.f32 %v2600, 0.5
      %v2604 = vmul.f32 %v2567, %v2601
      %v2605 = vmul.f32 %v2570, %v2602
      %v2606 = vmul.f32 %v2575, %v2603
      %2607 = vadd.xlane.f32.xlu0 %v2604
      %v2608 = vpop.xlane.xlu0 %2607
      %2609 = vadd.xlane.f32.xlu0 %v2605
      %v2610 = vpop.xlane.xlu0 %2609
      %v2611 = vsel %vm1411, %v2606, 0.0
      %2612 = vadd.xlane.f32.xlu0 %v2611
      %v2613 = vpop.xlane.xlu0 %2612
      %v2614 = vmul.f32 %v2608, 0.03125
      %v2615 = vmul.f32 %v2610, 0.03125
      %v2616 = vmul.f32 %v2613, 0.03125
      %v2617 = vmul.f32 %v2604, %v2604
      %v2618 = vmul.f32 %v2605, %v2605
      %v2619 = vmul.f32 %v2606, %v2606
      %2620 = vadd.xlane.f32.xlu0 %v2617
      %v2621 = vpop.xlane.xlu0 %2620
      %2622 = vadd.xlane.f32.xlu0 %v2618
      %v2623 = vpop.xlane.xlu0 %2622
      %v2624 = vsel %vm1411, %v2619, 0.0
      %2625 = vadd.xlane.f32.xlu0 %v2624
      %v2626 = vpop.xlane.xlu0 %2625
      %v2627 = vmul.f32 %v2621, 0.03125
      %v2628 = vmul.f32 %v2623, 0.03125
      %v2629 = vmul.f32 %v2626, 0.03125
      %v2630 = vsub.f32 %v2604, %v2614
      %v2631 = vsub.f32 %v2605, %v2615
      %v2632 = vsub.f32 %v2606, %v2616
      %v2633 = vmul.f32 %v2614, %v2614
      %v2634 = vmul.f32 %v2615, %v2615
      %v2635 = vmul.f32 %v2616, %v2616
      %v2636 = vsub.f32 %v2627, %v2633
      %v2637 = vsub.f32 %v2628, %v2634
      %v2638 = vsub.f32 %v2629, %v2635
      %v2639 = vadd.f32 %v2636, 1e-05
      %v2640 = vadd.f32 %v2637, 1e-05
      %v2641 = vadd.f32 %v2638, 1e-05
      %v2642 = vrsqrt.pop %v2639
      %v2643 = vrsqrt.pop %v2640
      %v2644 = vrsqrt.pop %v2641
      %v2645 = vmul.f32 %v2630, %v2642
      %v2646 = vmul.f32 %v2631, %v2643
      %v2647 = vmul.f32 %v2632, %v2644
      %v2648 = vld [vmem:[%s6] sm:$0x1]
      %v2650 = vlaneseq
      %v2651 = vshrl.u32 %v2650, 7
      %v2652 = vsub.s32 0, %v2651
      %v2653 = vrot.slane %v2648, %v2652
      %v2655 = vmul.f32 %v2645, %v2653
      %v2656 = vmul.f32 %v2646, %v2653
      %v2657 = vmul.f32 %v2647, %v2653
      %v2658 = vld [vmem:[%s7] sm:$0x1]
      %v2660 = vlaneseq
      %v2661 = vshrl.u32 %v2660, 7
      %v2662 = vsub.s32 0, %v2661
      %v2663 = vrot.slane %v2658, %v2662
      %v2665 = vadd.f32 %v2655, %v2663
      %v2666 = vadd.f32 %v2656, %v2663
      %v2667 = vadd.f32 %v2657, %v2663
      %v2668 = vpack.c.bf16 %v2666, %v2665
      %v2669 = vpack.c.bf16 %v2667, %v2667
      %v2670 = vld [vmem:[%s8] sm:$0xf]
      %v2671 = vld [vmem:[%s8 + $0x4] sm:$0xf]
      %v2672 = vld [vmem:[%s8 + $0x8] sm:$0xf]
      %v2673 = vld [vmem:[%s8 + $0xc] sm:$0xf]
      %v2674 = vld [vmem:[%s8 + $0x10] sm:$0xf]
      %v2675 = vld [vmem:[%s8 + $0x14] sm:$0xf]
      %v2676 = vld [vmem:[%s8 + $0x18] sm:$0xf]
      %v2677 = vld [vmem:[%s8 + $0x1c] sm:$0xf]
      %v2678 = vld [vmem:[%s8 + $0x20] sm:$0xf]
      %v2679 = vld [vmem:[%s8 + $0x24] sm:$0xf]
      %v2680 = vld [vmem:[%s8 + $0x28] sm:$0xf]
      %v2681 = vld [vmem:[%s8 + $0x2c] sm:$0xf]
      %v2682 = vld [vmem:[%s8 + $0x30] sm:$0xf]
      %v2683 = vld [vmem:[%s8 + $0x34] sm:$0xf]
      %v2684 = vld [vmem:[%s8 + $0x38] sm:$0xf]
      %v2685 = vld [vmem:[%s8 + $0x3c] sm:$0xf]
      %v2686 = vld [vmem:[%s9] sm:$0x1]
      %v2688 = vlaneseq
      %v2689 = vshrl.u32 %v2688, 7
      %v2690 = vsub.s32 0, %v2689
      %v2691 = vrot.slane %v2686, %v2690
      %v2709 = vunpack.c.l.b16 %v2670
      %v2710 = vunpack.c.l.b16 %v2671
      %v2711 = vunpack.c.l.b16 %v2672
      %v2712 = vunpack.c.l.b16 %v2673
      %v2713 = vunpack.c.l.b16 %v2674
      %v2714 = vunpack.c.l.b16 %v2675
      %v2715 = vunpack.c.l.b16 %v2676
      %v2716 = vunpack.c.l.b16 %v2677
      %v2717 = vunpack.c.l.b16 %v2678
      %v2718 = vunpack.c.l.b16 %v2679
      %v2719 = vunpack.c.l.b16 %v2680
      %v2720 = vunpack.c.l.b16 %v2681
      %v2721 = vunpack.c.l.b16 %v2682
      %v2722 = vunpack.c.l.b16 %v2683
      %v2723 = vunpack.c.l.b16 %v2684
      %v2724 = vunpack.c.l.b16 %v2685
      %v2725 = vpack.c.b16 %v2710, %v2709
      %v2726 = vpack.c.b16 %v2712, %v2711
      %v2727 = vpack.c.b16 %v2714, %v2713
      %v2728 = vpack.c.b16 %v2716, %v2715
      %v2729 = vpack.c.b16 %v2718, %v2717
      %v2730 = vpack.c.b16 %v2720, %v2719
      %v2731 = vpack.c.b16 %v2722, %v2721
      %v2732 = vpack.c.b16 %v2724, %v2723
      %2741 = vmatprep.subr.bf16.mxu0 0
      %2742 = vmatpush1.bf16.msra.mxu0 %v2725
      %2743 = vmatprep.subr.bf16.mxu0 0
      %2744 = vmatpush1.bf16.msra.mxu0 %v2726
      %2745 = vmatprep.subr.bf16.mxu0 0
      %2746 = vmatpush1.bf16.msra.mxu0 %v2727
      %2747 = vmatprep.subr.bf16.mxu0 0
      %2748 = vmatpush1.bf16.msra.mxu0 %v2728
      %2749 = vmatprep.subr.bf16.mxu0 0
      %2750 = vmatpush1.bf16.msra.mxu0 %v2729
      %2751 = vmatprep.subr.bf16.mxu0 0
      %2752 = vmatpush1.bf16.msra.mxu0 %v2730
      %2753 = vmatprep.subr.bf16.mxu0 0
      %2754 = vmatpush1.bf16.msra.mxu0 %v2731
      %2755 = vmatprep.subr.bf16.mxu0 0
      %2756 = vmatpush1.bf16.msra.mxu0 %v2732
      %2757 = vmatprep.subr.bf16.mxu0 0
      %2758 = vmatpush1.bf16.msra.mxu0 0
      %2759 = vmatprep.subr.bf16.mxu0 0
      %2760 = vmatpush1.bf16.msra.mxu0 0
      %2761 = vmatprep.subr.bf16.mxu0 0
      %2762 = vmatpush1.bf16.msra.mxu0 0
      %2763 = vmatprep.subr.bf16.mxu0 0
      %2764 = vmatpush1.bf16.msra.mxu0 0
      %2765 = vmatprep.subr.bf16.mxu0 0
      %2766 = vmatpush1.bf16.msra.mxu0 0
      %2767 = vmatprep.subr.bf16.mxu0 0
      %2768 = vmatpush1.bf16.msra.mxu0 0
      %2769 = vmatprep.subr.bf16.mxu0 0
      %2770 = vmatpush1.bf16.msra.mxu0 0
      %2771 = vmatprep.subr.bf16.mxu0 0
      %2772 = vmatpush1.bf16.msra.mxu0 0
      %2773 = vmatprep.mubr.bf16.mxu0 0
      %2774 = vmatmul.mubr.bf16.gmra.mrb[0].mxu0 %v2668
      %v2775 = vpop.f32.mrb[0].mxu0
      %v2776 = vadd.f32 %v2691, %v2775
      %v2777 = vpop.f32.mrb[0].mxu0
      %v2778 = vpop.f32.mrb[0].mxu0
      %v2779 = vadd.f32 %v2691, %v2778
      %v2780 = vpop.f32.mrb[0].mxu0
      %2781 = vmatprep.mubr.bf16.mxu0 0
      %2782 = vmatmul.mubr.bf16.gmra.mrb[0].mxu0 %v2669
      %v2783 = vpop.f32.mrb[0].mxu0
      %v2784 = vadd.f32 %v2691, %v2783
      %v2785 = vpop.f32.mrb[0].mxu0
      %v2786 = vpop.f32.mrb[0].mxu0
      %v2787 = vpop.f32.mrb[0].mxu0
      %2788 = vdwg.mxu0
      %s2789 = scalar_lea.vmem %s366, 24
      %2790 = vst [vmem:[%s2789] sm:$0xff] %v2776
      %2791 = vst [vmem:[%s2789 + $0x8] sm:$0xff] %v2779
      %2792 = vst [vmem:[%s2789 + $0x10] sm:$0x7] %v2784
      %s2793 = smul.u32 2, %s21
      %p2794 = scmp.lt.s32.totalorder %s2793, 3
      %s2795 = scalar_select %p2794, %s2793, 3
      %s2796 = smul.addr %s2795, 3
      %s2797 = smul.addr %s2796, 8
      %s2798 = scalar_lea.vmem %s10, %s2797
      // Predicated region
      $region61: #{wav2vec2_z_forward_padded.1} parent=59 // pred_check
        %p2799 = pneg %p254
      $region62: #{wav2vec2_z_forward_padded.1} parent=59 // pred_check_branch
        %2801 = sbr.rel (%p2799) target = $region64
      $region63: #{wav2vec2_z_forward_padded.1} parent=59 // pred_region
        %s2802 = smul.u32 2, %s21
      $region64: #{wav2vec2_z_forward_padded.1} parent=59 // pred_fallthru
        _
    $region60: #{wav2vec2_z_forward_padded.1} parent=5 // pred_fallthru
      _
    %p2803 = scmp.le.s32.totalorder 2, %s16
    // Predicated region
    $region65: #{wav2vec2_z_forward_padded.1} parent=5 // pred_check
      %p2804 = pneg %p2803
    $region66: #{wav2vec2_z_forward_padded.1} parent=5 // pred_check_branch
      %2806 = sbr.rel (%p2804) target = $region68
    $region67: #{wav2vec2_z_forward_padded.1} parent=5 // pred_region
      %s2807 = ssub.s32 %s16, 2
      // Predicated region
      $region69: #{wav2vec2_z_forward_padded.1} parent=67 // pred_check
        %p2808 = pneg %p260
      $region70: #{wav2vec2_z_forward_padded.1} parent=67 // pred_check_branch
        %2810 = sbr.rel (%p2808) target = $region72
      $region71: #{wav2vec2_z_forward_padded.1} parent=67 // pred_region
        %s2811 = smul.u32 2, %s22
        %p2812 = scmp.lt.s32.totalorder %s2811, 3
        %s2813 = scalar_select %p2812, %s2811, 3
        %s2814 = smul.addr %s2813, 3
        %s2815 = smul.addr %s2814, 8
        %s2816 = scalar_lea.vmem %s10, %s2815
      $region72: #{wav2vec2_z_forward_padded.1} parent=67 // pred_fallthru
        _
    $region68: #{wav2vec2_z_forward_padded.1} parent=5 // pred_fallthru
      _
  $region6: #{wav2vec2_z_forward_padded.1} parent=0 // loop_footer
    %s20 = sadd.s32 1, %s16
  $region7: #{wav2vec2_z_forward_padded.1} parent=0 // loop_footer_branch
    %15 = sbr.rel target = $region3
  $region8: #{wav2vec2_z_forward_padded.1} parent=0 // loop_exit
    _

</llo_original>
